<compile_context>
chip_gen: v5e
topology: v5e:2x2
jax: 0.10.0
libtpu: 0.0.40
codegen_flags: <defaults>
</compile_context>

<pallas_src>
import jax
import jax.numpy as jnp
import numpy as np
from jax import lax
from jax.experimental import pallas as pl
from jax.experimental.pallas import tpu as pltpu


# ------------------------------ fused kernel --------------------------------

def fused_forward_kernel(p1_ref, w1_ref, b1_ref, w2_ref, b2_ref,
                         w1f_ref, b1f_ref, w2f_ref, b2f_ref, out_ref):
    Bt = out_ref.shape[0]

    # ---- conv1 + 2x2 maxpool + bias + relu : ONE matmul (K=168) ----
    # p1 rows are ordered (s=i1%2, m=i1//2, b); lanes are (kr, col) = 6 input
    # rows x 28 input cols.  The Toeplitz weight produces lanes
    # (pool_row_parity, pool_col_parity, c1, j1) so the pool is a max of four
    # aligned 128-lane blocks.
    p1 = p1_ref[...].reshape(12 * Bt, 168)
    o1 = jnp.dot(p1, w1_ref[...], preferred_element_type=jnp.float32)   # (12Bt, 512)
    m1 = jnp.maximum(jnp.maximum(o1[:, 0:128], o1[:, 128:256]),
                     jnp.maximum(o1[:, 256:384], o1[:, 384:512]))
    a1 = jnp.maximum(m1 + b1_ref[...], 0.0).astype(jnp.bfloat16)        # (12Bt, 128)

    # ---- conv2 + 2x2 maxpool + bias + relu : ONE matmul (K=768) ----
    # In-VMEM im2col: six aligned row slices of a1 (a1 row i1 = 2*i2 + kr with
    # kr = 2q+s), concatenated along lanes.  Rows become (i2, b).
    # TODO(synk): nn.Dropout2d on conv2's output uses eval-mode (identity)
    # semantics; training-mode stochastic channel masking is not implemented.
    slabs = []
    for q in range(3):
        for s in range(2):           # kr = 2*q + s  ->  lane block index
            start = (s * 6 + q) * Bt
            slabs.append(a1[start:start + 4 * Bt, :])
    p2 = jnp.concatenate(slabs, axis=-1)                                # (4Bt, 768)
    o2 = jnp.dot(p2, w2_ref[...], preferred_element_type=jnp.float32)   # (4Bt, 512)
    m2 = jnp.maximum(jnp.maximum(o2[:, 0:128], o2[:, 128:256]),
                     jnp.maximum(o2[:, 256:384], o2[:, 384:512]))
    a2 = jnp.maximum(m2 + b2_ref[...], 0.0).astype(jnp.bfloat16)        # (4Bt, 128)

    # ---- fc1 (NCHW flatten folded into the weight layout) : ONE matmul ----
    # a2 rows are (i2, b); pack the four i2 row-blocks into 4*128 lanes.
    # TODO(synk): F.dropout after fc1 uses eval-mode (identity) semantics.
    pf = jnp.concatenate([a2[i * Bt:(i + 1) * Bt, :] for i in range(4)],
                         axis=-1)                                       # (Bt, 512)
    h = jnp.dot(pf, w1f_ref[...], preferred_element_type=jnp.float32)
    h = jnp.maximum(h + b1f_ref[...], 0.0).astype(jnp.bfloat16)         # (Bt, 128)

    # ---- fc2 + masked log_softmax over the 10 valid lanes ----
    logits = jnp.dot(h, w2f_ref[...],
                     preferred_element_type=jnp.float32) + b2f_ref[...]
    col = lax.broadcasted_iota(jnp.int32, logits.shape, 1)
    valid = col < 10
    neg = jnp.full_like(logits, -jnp.inf)
    mx = jnp.max(jnp.where(valid, logits, neg), axis=-1, keepdims=True)
    z = logits - mx
    se = jnp.sum(jnp.where(valid, jnp.exp(z), 0.0), axis=-1, keepdims=True)
    # Lanes >= 10 hold garbage; the wrapper slices [:, :10].
    out_ref[...] = z - jnp.log(se)


# --------------------------- one-time weight prep ----------------------------

def prepare_params(params):
    """Expand / permute / pad the PyTorch-layout weights ONCE (host side)."""
    w1 = np.asarray(params["conv1_w"], np.float32)   # (10, 1, 5, 5)
    b1 = np.asarray(params["conv1_b"], np.float32)
    w2 = np.asarray(params["conv2_w"], np.float32)   # (20, 10, 5, 5)
    b2 = np.asarray(params["conv2_b"], np.float32)
    fw1 = np.asarray(params["fc1_w"], np.float32)    # (50, 320)
    fb1 = np.asarray(params["fc1_b"], np.float32)
    fw2 = np.asarray(params["fc2_w"], np.float32)    # (10, 50)
    fb2 = np.asarray(params["fc2_b"], np.float32)

    # conv1 Toeplitz: rows = kr*28 + c ; cols = (pI*2+pJ)*128 + c1*12 + j1
    W1 = np.zeros((168, 512), np.float32)
    for pI in range(2):
        for pJ in range(2):
            for co in range(10):
                for j1 in range(12):
                    col = (pI * 2 + pJ) * 128 + co * 12 + j1
                    for kh in range(5):
                        for kw in range(5):
                            row = (kh + pI) * 28 + (2 * j1 + pJ + kw)
                            W1[row, col] = w1[co, 0, kh, kw]
    B1 = np.zeros((1, 128), np.float32)
    for co in range(10):
        B1[0, co * 12:co * 12 + 12] = b1[co]

    # conv2 Toeplitz: rows = kr*128 + c1*12 + j1 ; cols = (pI*2+pJ)*128 + c2*4 + j2
    W2 = np.zeros((768, 512), np.float32)
    for pI in range(2):
        for pJ in range(2):
            for c2 in range(20):
                for j2 in range(4):
                    col = (pI * 2 + pJ) * 128 + c2 * 4 + j2
                    for c1 in range(10):
                        for kh in range(5):
                            for kw in range(5):
                                row = (kh + pI) * 128 + c1 * 12 + (2 * j2 + pJ + kw)
                                W2[row, col] = w2[c2, c1, kh, kw]
    B2 = np.zeros((1, 128), np.float32)
    for c2 in range(20):
        B2[0, c2 * 4:c2 * 4 + 4] = b2[c2]

    # fc1: rows = i2*128 + c2*4 + j2 ; NCHW flatten index = c2*16 + i2*4 + j2
    Wf1 = np.zeros((512, 128), np.float32)
    for i2 in range(4):
        for c2 in range(20):
            for j2 in range(4):
                Wf1[i2 * 128 + c2 * 4 + j2, :50] = fw1[:, c2 * 16 + i2 * 4 + j2]
    Bf1 = np.zeros((1, 128), np.float32)
    Bf1[0, :50] = fb1

    # fc2
    Wf2 = np.zeros((128, 128), np.float32)
    Wf2[:50, :10] = fw2.T
    Bf2 = np.zeros((1, 128), np.float32)
    Bf2[0, :10] = fb2

    return dict(
        w1=jnp.asarray(W1, jnp.bfloat16), b1=jnp.asarray(B1),
        w2=jnp.asarray(W2, jnp.bfloat16), b2=jnp.asarray(B2),
        w1f=jnp.asarray(Wf1, jnp.bfloat16), b1f=jnp.asarray(Bf1),
        w2f=jnp.asarray(Wf2, jnp.bfloat16), b2f=jnp.asarray(Bf2),
    )


# --------------------------------- wrapper ----------------------------------

def _build_patches(x_nchw, b_pad):
    """Row-only im2col: p[s, m, b, kr*28 + c] = x[b, 4m + 2s + kr, c]."""
    B = x_nchw.shape[0]
    x = x_nchw[:, 0, :, :]                                    # (B, 28, 28)
    if b_pad > B:
        x = jnp.pad(x, ((0, b_pad - B), (0, 0), (0, 0)))
    row_idx = (4 * np.arange(6)[None, :, None]
               + 2 * np.arange(2)[:, None, None]
               + np.arange(6)[None, None, :])                 # (2, 6, 6), values 0..27
    p = x[:, row_idx, :]                                      # (b_pad, 2, 6, 6, 28)
    p = jnp.transpose(p, (1, 2, 0, 3, 4))                     # (2, 6, b_pad, 6, 28)
    return p.reshape(2, 6, b_pad, 168).astype(jnp.bfloat16)


def mnist_classifier_forward(x_nchw, prepped, *, block_b=128):
    B = x_nchw.shape[0]
    if B <= block_b:
        bt = ((B + 15) // 16) * 16          # single grid step, sublane-aligned
        b_pad = bt
    else:
        bt = block_b
        b_pad = ((B + bt - 1) // bt) * bt
    p1 = _build_patches(x_nchw, b_pad)

    out = pl.pallas_call(
        fused_forward_kernel,
        out_shape=jax.ShapeDtypeStruct((b_pad, 128), jnp.float32),
        grid=(b_pad // bt,),
        in_specs=[
            pl.BlockSpec((2, 6, bt, 168), lambda i: (0, 0, i, 0)),   # patches
            pl.BlockSpec((168, 512), lambda i: (0, 0)),              # conv1 Toeplitz
            pl.BlockSpec((1, 128), lambda i: (0, 0)),
            pl.BlockSpec((768, 512), lambda i: (0, 0)),              # conv2 Toeplitz
            pl.BlockSpec((1, 128), lambda i: (0, 0)),
            pl.BlockSpec((512, 128), lambda i: (0, 0)),              # fc1
            pl.BlockSpec((1, 128), lambda i: (0, 0)),
            pl.BlockSpec((128, 128), lambda i: (0, 0)),              # fc2
            pl.BlockSpec((1, 128), lambda i: (0, 0)),
        ],
        out_specs=pl.BlockSpec((bt, 128), lambda i: (i, 0)),
        compiler_params=pltpu.CompilerParams(
            dimension_semantics=("parallel",),
            vmem_limit_bytes=32 * 1024 * 1024),
    )(p1, prepped["w1"], prepped["b1"], prepped["w2"], prepped["b2"],
      prepped["w1f"], prepped["b1f"], prepped["w2f"], prepped["b2f"])
    return out[:B, :10]


# --------------------------- reference (pure JAX) ----------------------------

def reference_forward(x, p):
    dn = ("NCHW", "OIHW", "NCHW")
    c1 = lax.conv_general_dilated(x, p["conv1_w"], (1, 1), "VALID",
                                  dimension_numbers=dn,
                                  precision=lax.Precision.HIGHEST)
    c1 = c1 + p["conv1_b"][None, :, None, None]
    c1 = jax.nn.relu(lax.reduce_window(c1, -jnp.inf, lax.max,
                                       (1, 1, 2, 2), (1, 1, 2, 2), "VALID"))
    c2 = lax.conv_general_dilated(c1, p["conv2_w"], (1, 1), "VALID",
                                  dimension_numbers=dn,
                                  precision=lax.Precision.HIGHEST)
    c2 = c2 + p["conv2_b"][None, :, None, None]
    c2 = jax.nn.relu(lax.reduce_window(c2, -jnp.inf, lax.max,
                                       (1, 1, 2, 2), (1, 1, 2, 2), "VALID"))
    flat = c2.reshape(c2.shape[0], -1)
    h = jax.nn.relu(flat @ p["fc1_w"].T + p["fc1_b"])
    logits = h @ p["fc2_w"].T + p["fc2_b"]
    return jax.nn.log_softmax(logits, axis=-1)


# ------------------------------ params & main --------------------------------

def init_params(key):
    ks = jax.random.split(key, 8)

    def u(k, shape, fan_in):
        bound = 1.0 / np.sqrt(fan_in)
        return jax.random.uniform(k, shape, jnp.float32, -bound, bound)

    return {
        "conv1_w": u(ks[0], (10, 1, 5, 5), 25),
        "conv1_b": u(ks[1], (10,), 25),
        "conv2_w": u(ks[2], (20, 10, 5, 5), 250),
        "conv2_b": u(ks[3], (20,), 250),
        "fc1_w": u(ks[4], (50, 320), 320),
        "fc1_b": u(ks[5], (50,), 320),
        "fc2_w": u(ks[6], (10, 50), 50),
        "fc2_b": u(ks[7], (10,), 50),
    }


if __name__ == "__main__":
    key = jax.random.PRNGKey(0)
    kx, kp, kx2 = jax.random.split(key, 3)
    # MNIST-shaped input (1x28x28 is required by the 320-dim flatten).
    x = jax.random.normal(kx, (2, 1, 28, 28), jnp.float32)
    params = init_params(kp)
    prepped = prepare_params(params)        # weight prep hoisted: done ONCE

    fwd = jax.jit(mnist_classifier_forward, static_argnames=("block_b",))

    out = jax.block_until_ready(fwd(x, prepped))
    ref = jax.block_until_ready(reference_forward(x, params))
    assert out.shape == (2, 10)
    # All MXU operands are bf16 (f32 accumulation); reference is f32 HIGHEST.
    np.testing.assert_allclose(np.asarray(out), np.asarray(ref),
                               rtol=3e-2, atol=3e-2)

    # Exercise the batch-tiled, multi-step "parallel" grid (3 steps of 16).
    x2 = jax.random.normal(kx2, (40, 1, 28, 28), jnp.float32)
    out2 = jax.block_until_ready(fwd(x2, prepped, block_b=16))
    ref2 = jax.block_until_ready(reference_forward(x2, params))
    np.testing.assert_allclose(np.asarray(out2), np.asarray(ref2),
                               rtol=3e-2, atol=3e-2)

    print("KERNEL_OK")
</pallas_src>

<mosaic_0001>
module attributes {stable_mosaic.version = 11 : i64} {
  func.func @fused_forward_kernel(%arg0: i32, %arg1: memref<2x6x16x168xbf16, #tpu.memory_space<vmem>>, %arg2: memref<168x512xbf16, #tpu.memory_space<vmem>>, %arg3: memref<1x128xf32, #tpu.memory_space<vmem>>, %arg4: memref<768x512xbf16, #tpu.memory_space<vmem>>, %arg5: memref<1x128xf32, #tpu.memory_space<vmem>>, %arg6: memref<512x128xbf16, #tpu.memory_space<vmem>>, %arg7: memref<1x128xf32, #tpu.memory_space<vmem>>, %arg8: memref<128x128xbf16, #tpu.memory_space<vmem>>, %arg9: memref<1x128xf32, #tpu.memory_space<vmem>>, %arg10: memref<16x128xf32, #tpu.memory_space<vmem>>) attributes {dimension_semantics = [#tpu.dimension_semantics<parallel>], iteration_bounds = array<i64: 1>, scalar_prefetch = 0 : i64, scratch_operands = 0 : i64, tpu.core_type = #tpu.core_type<tc>, window_params = [{transform_indices = @transform_0, window_bounds = array<i64: 2, 6, 16, 168>}, {pipeline_mode = #tpu.pipeline_mode<synchronous>, transform_indices = @transform_1, window_bounds = array<i64: 168, 512>}, {pipeline_mode = #tpu.pipeline_mode<synchronous>, transform_indices = @transform_2, window_bounds = array<i64: 1, 128>}, {pipeline_mode = #tpu.pipeline_mode<synchronous>, transform_indices = @transform_3, window_bounds = array<i64: 768, 512>}, {pipeline_mode = #tpu.pipeline_mode<synchronous>, transform_indices = @transform_4, window_bounds = array<i64: 1, 128>}, {pipeline_mode = #tpu.pipeline_mode<synchronous>, transform_indices = @transform_5, window_bounds = array<i64: 512, 128>}, {pipeline_mode = #tpu.pipeline_mode<synchronous>, transform_indices = @transform_6, window_bounds = array<i64: 1, 128>}, {pipeline_mode = #tpu.pipeline_mode<synchronous>, transform_indices = @transform_7, window_bounds = array<i64: 128, 128>}, {pipeline_mode = #tpu.pipeline_mode<synchronous>, transform_indices = @transform_8, window_bounds = array<i64: 1, 128>}, {transform_indices = @transform_9, window_bounds = array<i64: 16, 128>}]} {
    %c0 = arith.constant 0 : index
    %c0_0 = arith.constant 0 : index
    %c0_1 = arith.constant 0 : index
    %c0_2 = arith.constant 0 : index
    %0 = vector.load %arg1[%c0, %c0_0, %c0_1, %c0_2] : memref<2x6x16x168xbf16, #tpu.memory_space<vmem>>, vector<2x6x16x168xbf16>
    %1 = vector.shape_cast %0 : vector<2x6x16x168xbf16> to vector<192x168xbf16>
    %c0_3 = arith.constant 0 : index
    %c0_4 = arith.constant 0 : index
    %2 = vector.load %arg2[%c0_3, %c0_4] : memref<168x512xbf16, #tpu.memory_space<vmem>>, vector<168x512xbf16>
    %cst = arith.constant dense<0.000000e+00> : vector<192x512xf32>
    %3 = tpu.matmul %1, %2, %cst {dimension_numbers = #tpu.dot_dimension_numbers<[1], [0], [0], [1], [0, 0, 1, 1], [], []>} : vector<192x168xbf16>, vector<168x512xbf16>, vector<192x512xf32> -> vector<192x512xf32>
    %4 = vector.extract_strided_slice %3 {offsets = [0, 0], sizes = [192, 128], strides = [1, 1]} : vector<192x512xf32> to vector<192x128xf32>
    %5 = vector.extract_strided_slice %3 {offsets = [0, 128], sizes = [192, 128], strides = [1, 1]} : vector<192x512xf32> to vector<192x128xf32>
    %6 = arith.maximumf %4, %5 : vector<192x128xf32>
    %7 = vector.extract_strided_slice %3 {offsets = [0, 256], sizes = [192, 128], strides = [1, 1]} : vector<192x512xf32> to vector<192x128xf32>
    %8 = vector.extract_strided_slice %3 {offsets = [0, 384], sizes = [192, 128], strides = [1, 1]} : vector<192x512xf32> to vector<192x128xf32>
    %9 = arith.maximumf %7, %8 : vector<192x128xf32>
    %10 = arith.maximumf %6, %9 : vector<192x128xf32>
    %c0_5 = arith.constant 0 : index
    %c0_6 = arith.constant 0 : index
    %11 = vector.load %arg3[%c0_5, %c0_6] : memref<1x128xf32, #tpu.memory_space<vmem>>, vector<1x128xf32>
    %12 = vector.broadcast %11 : vector<1x128xf32> to vector<192x128xf32>
    %13 = arith.addf %10, %12 : vector<192x128xf32>
    %cst_7 = arith.constant 0.000000e+00 : f32
    %14 = vector.broadcast %cst_7 : f32 to vector<192x128xf32>
    %15 = arith.maximumf %13, %14 : vector<192x128xf32>
    %16 = arith.truncf %15 : vector<192x128xf32> to vector<192x128xbf16>
    %17 = vector.extract_strided_slice %16 {offsets = [0, 0], sizes = [64, 128], strides = [1, 1]} : vector<192x128xbf16> to vector<64x128xbf16>
    %18 = vector.extract_strided_slice %16 {offsets = [96, 0], sizes = [64, 128], strides = [1, 1]} : vector<192x128xbf16> to vector<64x128xbf16>
    %19 = vector.extract_strided_slice %16 {offsets = [16, 0], sizes = [64, 128], strides = [1, 1]} : vector<192x128xbf16> to vector<64x128xbf16>
    %20 = vector.extract_strided_slice %16 {offsets = [112, 0], sizes = [64, 128], strides = [1, 1]} : vector<192x128xbf16> to vector<64x128xbf16>
    %21 = vector.extract_strided_slice %16 {offsets = [32, 0], sizes = [64, 128], strides = [1, 1]} : vector<192x128xbf16> to vector<64x128xbf16>
    %22 = vector.extract_strided_slice %16 {offsets = [128, 0], sizes = [64, 128], strides = [1, 1]} : vector<192x128xbf16> to vector<64x128xbf16>
    %23 = tpu.concatenate %17, %18, %19, %20, %21, %22 in 1 : vector<64x128xbf16>, vector<64x128xbf16>, vector<64x128xbf16>, vector<64x128xbf16>, vector<64x128xbf16>, vector<64x128xbf16> -> vector<64x768xbf16>
    %c0_8 = arith.constant 0 : index
    %c0_9 = arith.constant 0 : index
    %24 = vector.load %arg4[%c0_8, %c0_9] : memref<768x512xbf16, #tpu.memory_space<vmem>>, vector<768x512xbf16>
    %cst_10 = arith.constant dense<0.000000e+00> : vector<64x512xf32>
    %25 = tpu.matmul %23, %24, %cst_10 {dimension_numbers = #tpu.dot_dimension_numbers<[1], [0], [0], [1], [0, 0, 1, 1], [], []>} : vector<64x768xbf16>, vector<768x512xbf16>, vector<64x512xf32> -> vector<64x512xf32>
    %26 = vector.extract_strided_slice %25 {offsets = [0, 0], sizes = [64, 128], strides = [1, 1]} : vector<64x512xf32> to vector<64x128xf32>
    %27 = vector.extract_strided_slice %25 {offsets = [0, 128], sizes = [64, 128], strides = [1, 1]} : vector<64x512xf32> to vector<64x128xf32>
    %28 = arith.maximumf %26, %27 : vector<64x128xf32>
    %29 = vector.extract_strided_slice %25 {offsets = [0, 256], sizes = [64, 128], strides = [1, 1]} : vector<64x512xf32> to vector<64x128xf32>
    %30 = vector.extract_strided_slice %25 {offsets = [0, 384], sizes = [64, 128], strides = [1, 1]} : vector<64x512xf32> to vector<64x128xf32>
    %31 = arith.maximumf %29, %30 : vector<64x128xf32>
    %32 = arith.maximumf %28, %31 : vector<64x128xf32>
    %c0_11 = arith.constant 0 : index
    %c0_12 = arith.constant 0 : index
    %33 = vector.load %arg5[%c0_11, %c0_12] : memref<1x128xf32, #tpu.memory_space<vmem>>, vector<1x128xf32>
    %34 = vector.broadcast %33 : vector<1x128xf32> to vector<64x128xf32>
    %35 = arith.addf %32, %34 : vector<64x128xf32>
    %cst_13 = arith.constant 0.000000e+00 : f32
    %36 = vector.broadcast %cst_13 : f32 to vector<64x128xf32>
    %37 = arith.maximumf %35, %36 : vector<64x128xf32>
    %38 = arith.truncf %37 : vector<64x128xf32> to vector<64x128xbf16>
    %39 = vector.extract_strided_slice %38 {offsets = [0, 0], sizes = [16, 128], strides = [1, 1]} : vector<64x128xbf16> to vector<16x128xbf16>
    %40 = vector.extract_strided_slice %38 {offsets = [16, 0], sizes = [16, 128], strides = [1, 1]} : vector<64x128xbf16> to vector<16x128xbf16>
    %41 = vector.extract_strided_slice %38 {offsets = [32, 0], sizes = [16, 128], strides = [1, 1]} : vector<64x128xbf16> to vector<16x128xbf16>
    %42 = vector.extract_strided_slice %38 {offsets = [48, 0], sizes = [16, 128], strides = [1, 1]} : vector<64x128xbf16> to vector<16x128xbf16>
    %43 = tpu.concatenate %39, %40, %41, %42 in 1 : vector<16x128xbf16>, vector<16x128xbf16>, vector<16x128xbf16>, vector<16x128xbf16> -> vector<16x512xbf16>
    %c0_14 = arith.constant 0 : index
    %c0_15 = arith.constant 0 : index
    %44 = vector.load %arg6[%c0_14, %c0_15] : memref<512x128xbf16, #tpu.memory_space<vmem>>, vector<512x128xbf16>
    %cst_16 = arith.constant dense<0.000000e+00> : vector<16x128xf32>
    %45 = tpu.matmul %43, %44, %cst_16 {dimension_numbers = #tpu.dot_dimension_numbers<[1], [0], [0], [1], [0, 0, 1, 1], [], []>} : vector<16x512xbf16>, vector<512x128xbf16>, vector<16x128xf32> -> vector<16x128xf32>
    %c0_17 = arith.constant 0 : index
    %c0_18 = arith.constant 0 : index
    %46 = vector.load %arg7[%c0_17, %c0_18] : memref<1x128xf32, #tpu.memory_space<vmem>>, vector<1x128xf32>
    %47 = vector.broadcast %46 : vector<1x128xf32> to vector<16x128xf32>
    %48 = arith.addf %45, %47 : vector<16x128xf32>
    %cst_19 = arith.constant 0.000000e+00 : f32
    %49 = vector.broadcast %cst_19 : f32 to vector<16x128xf32>
    %50 = arith.maximumf %48, %49 : vector<16x128xf32>
    %51 = arith.truncf %50 : vector<16x128xf32> to vector<16x128xbf16>
    %c0_20 = arith.constant 0 : index
    %c0_21 = arith.constant 0 : index
    %52 = vector.load %arg8[%c0_20, %c0_21] : memref<128x128xbf16, #tpu.memory_space<vmem>>, vector<128x128xbf16>
    %cst_22 = arith.constant dense<0.000000e+00> : vector<16x128xf32>
    %53 = tpu.matmul %51, %52, %cst_22 {dimension_numbers = #tpu.dot_dimension_numbers<[1], [0], [0], [1], [0, 0, 1, 1], [], []>} : vector<16x128xbf16>, vector<128x128xbf16>, vector<16x128xf32> -> vector<16x128xf32>
    %c0_23 = arith.constant 0 : index
    %c0_24 = arith.constant 0 : index
    %54 = vector.load %arg9[%c0_23, %c0_24] : memref<1x128xf32, #tpu.memory_space<vmem>>, vector<1x128xf32>
    %55 = vector.broadcast %54 : vector<1x128xf32> to vector<16x128xf32>
    %56 = arith.addf %53, %55 : vector<16x128xf32>
    %57 = tpu.iota {dimensions = array<i32: 1>} : vector<16x128xi32>
    %c10_i32 = arith.constant 10 : i32
    %58 = vector.broadcast %c10_i32 : i32 to vector<16x128xi32>
    %59 = arith.cmpi slt, %57, %58 : vector<16x128xi32>
    %cst_25 = arith.constant 0xFF800000 : f32
    %60 = vector.broadcast %cst_25 : f32 to vector<16x128xf32>
    %61 = arith.select %59, %56, %60 : vector<16x128xi1>, vector<16x128xf32>
    %cst_26 = arith.constant dense<0xFF800000> : vector<16xf32>
    %62 = vector.multi_reduction <maximumf>, %61, %cst_26 [1] : vector<16x128xf32> to vector<16xf32>
    %63 = vector.shape_cast %62 : vector<16xf32> to vector<16x1xf32>
    %64 = vector.broadcast %63 : vector<16x1xf32> to vector<16x128xf32>
    %65 = arith.subf %56, %64 : vector<16x128xf32>
    %66 = math.exp %65 : vector<16x128xf32>
    %cst_27 = arith.constant 0.000000e+00 : f32
    %67 = vector.broadcast %cst_27 : f32 to vector<16x128xf32>
    %68 = arith.select %59, %66, %67 : vector<16x128xi1>, vector<16x128xf32>
    %cst_28 = arith.constant dense<0.000000e+00> : vector<16xf32>
    %69 = vector.multi_reduction <add>, %68, %cst_28 [1] : vector<16x128xf32> to vector<16xf32>
    %70 = vector.shape_cast %69 : vector<16xf32> to vector<16x1xf32>
    %71 = math.log %70 : vector<16x1xf32>
    %72 = vector.broadcast %71 : vector<16x1xf32> to vector<16x128xf32>
    %73 = arith.subf %65, %72 : vector<16x128xf32>
    %c0_29 = arith.constant 0 : index
    %c0_30 = arith.constant 0 : index
    %74 = vector.load %arg10[%c0_29, %c0_30] : memref<16x128xf32, #tpu.memory_space<vmem>>, vector<16x128xf32>
    tpu.vector_store %arg10[%c0_29, %c0_30], %73 {strides = array<i32>} : memref<16x128xf32, #tpu.memory_space<vmem>>, vector<16x128xf32>,
    return
  }
  func.func @transform_0(%arg0: i32) -> (i32, i32, i32, i32) {
    %c0_i32 = arith.constant 0 : i32
    %c0_i32_0 = arith.constant 0 : i32
    %c0_i32_1 = arith.constant 0 : i32
    %c0_i32_2 = arith.constant 0 : i32
    return %c0_i32, %c0_i32_0, %arg0, %c0_i32_1 : i32, i32, i32, i32
  }
  func.func @transform_1(%arg0: i32) -> (i32, i32) {
    %c0_i32 = arith.constant 0 : i32
    %c0_i32_0 = arith.constant 0 : i32
    %c0_i32_1 = arith.constant 0 : i32
    return %c0_i32, %c0_i32_0 : i32, i32
  }
  func.func @transform_2(%arg0: i32) -> (i32, i32) {
    %c0_i32 = arith.constant 0 : i32
    %c0_i32_0 = arith.constant 0 : i32
    %c0_i32_1 = arith.constant 0 : i32
    return %c0_i32, %c0_i32_0 : i32, i32
  }
  func.func @transform_3(%arg0: i32) -> (i32, i32) {
    %c0_i32 = arith.constant 0 : i32
    %c0_i32_0 = arith.constant 0 : i32
    %c0_i32_1 = arith.constant 0 : i32
    return %c0_i32, %c0_i32_0 : i32, i32
  }
  func.func @transform_4(%arg0: i32) -> (i32, i32) {
    %c0_i32 = arith.constant 0 : i32
    %c0_i32_0 = arith.constant 0 : i32
    %c0_i32_1 = arith.constant 0 : i32
    return %c0_i32, %c0_i32_0 : i32, i32
  }
  func.func @transform_5(%arg0: i32) -> (i32, i32) {
    %c0_i32 = arith.constant 0 : i32
    %c0_i32_0 = arith.constant 0 : i32
    %c0_i32_1 = arith.constant 0 : i32
    return %c0_i32, %c0_i32_0 : i32, i32
  }
  func.func @transform_6(%arg0: i32) -> (i32, i32) {
    %c0_i32 = arith.constant 0 : i32
    %c0_i32_0 = arith.constant 0 : i32
    %c0_i32_1 = arith.constant 0 : i32
    return %c0_i32, %c0_i32_0 : i32, i32
  }
  func.func @transform_7(%arg0: i32) -> (i32, i32) {
    %c0_i32 = arith.constant 0 : i32
    %c0_i32_0 = arith.constant 0 : i32
    %c0_i32_1 = arith.constant 0 : i32
    return %c0_i32, %c0_i32_0 : i32, i32
  }
  func.func @transform_8(%arg0: i32) -> (i32, i32) {
    %c0_i32 = arith.constant 0 : i32
    %c0_i32_0 = arith.constant 0 : i32
    %c0_i32_1 = arith.constant 0 : i32
    return %c0_i32, %c0_i32_0 : i32, i32
  }
  func.func @transform_9(%arg0: i32) -> (i32, i32) {
    %c0_i32 = arith.constant 0 : i32
    %c0_i32_0 = arith.constant 0 : i32
    return %arg0, %c0_i32 : i32, i32
  }
}

</mosaic_0001>

<llo_original>
// kernel: mnist_classifier_forward.1
$region0: #{mnist_classifier_forward.1}
  #allocation0 [shape = 'u32[]', space=smem, size = 0x4, offset = 0x4, fixed_abs, tag = 'smem constant byte address 0x4 - core index']
  #allocation1 [shape = 'u32[72,128]{1,0:T(1,128)}', space=vmem, size = 0x9000, scoped, tag = 'internal scratch']
  %s0 = inlined_call_operand.vmem [shape: bf16[2,6,16,168], index: 0, kind: input, shape index: {}]
  %s1 = inlined_call_operand.vmem [shape: bf16[168,512], index: 1, kind: input, shape index: {}]
  %s2 = inlined_call_operand.vmem [shape: f32[1,128], index: 2, kind: input, shape index: {}]
  %s3 = inlined_call_operand.vmem [shape: bf16[768,512], index: 3, kind: input, shape index: {}]
  %s4 = inlined_call_operand.vmem [shape: f32[1,128], index: 4, kind: input, shape index: {}]
  %s5 = inlined_call_operand.vmem [shape: bf16[512,128], index: 5, kind: input, shape index: {}]
  %s6 = inlined_call_operand.vmem [shape: f32[1,128], index: 6, kind: input, shape index: {}]
  %s7 = inlined_call_operand.vmem [shape: bf16[128,128], index: 7, kind: input, shape index: {}]
  %s8 = inlined_call_operand.vmem [shape: f32[1,128], index: 8, kind: input, shape index: {}]
  %s9 = inlined_call_operand.vmem [shape: f32[16,128], index: 9, kind: output, shape index: {}]
  %s10 = sld [smem:[#allocation0]]
  $region46: #{mnist_classifier_forward.1} parent=0
    _
  %s12 = ssub.s32 1, %s10
  %s13 = scalar_select 0, %s12, %s10
  // Predicated region
  $region2: #{mnist_classifier_forward.1} parent=0 // pred_check
    _
  $region3: #{mnist_classifier_forward.1} parent=0 // pred_check_branch
    %15 = sbr.rel (0) target = $region5
  $region4: #{mnist_classifier_forward.1} parent=0 // pred_region
    _
  $region5: #{mnist_classifier_forward.1} parent=0 // pred_fallthru
    _
  // Predicated region
  $region6: #{mnist_classifier_forward.1} parent=0 // pred_check
    _
  $region7: #{mnist_classifier_forward.1} parent=0 // pred_check_branch
    %17 = sbr.rel (0) target = $region9
  $region8: #{mnist_classifier_forward.1} parent=0 // pred_region
    _
  $region9: #{mnist_classifier_forward.1} parent=0 // pred_fallthru
    _
  // Predicated region
  $region10: #{mnist_classifier_forward.1} parent=0 // pred_check
    _
  $region11: #{mnist_classifier_forward.1} parent=0 // pred_check_branch
    %19 = sbr.rel (0) target = $region13
  $region12: #{mnist_classifier_forward.1} parent=0 // pred_region
    _
  $region13: #{mnist_classifier_forward.1} parent=0 // pred_fallthru
    _
  // Predicated region
  $region14: #{mnist_classifier_forward.1} parent=0 // pred_check
    _
  $region15: #{mnist_classifier_forward.1} parent=0 // pred_check_branch
    %21 = sbr.rel (0) target = $region17
  $region16: #{mnist_classifier_forward.1} parent=0 // pred_region
    _
  $region17: #{mnist_classifier_forward.1} parent=0 // pred_fallthru
    _
  // Predicated region
  $region18: #{mnist_classifier_forward.1} parent=0 // pred_check
    _
  $region19: #{mnist_classifier_forward.1} parent=0 // pred_check_branch
    %23 = sbr.rel (0) target = $region21
  $region20: #{mnist_classifier_forward.1} parent=0 // pred_region
    _
  $region21: #{mnist_classifier_forward.1} parent=0 // pred_fallthru
    _
  // Predicated region
  $region22: #{mnist_classifier_forward.1} parent=0 // pred_check
    _
  $region23: #{mnist_classifier_forward.1} parent=0 // pred_check_branch
    %25 = sbr.rel (0) target = $region25
  $region24: #{mnist_classifier_forward.1} parent=0 // pred_region
    _
  $region25: #{mnist_classifier_forward.1} parent=0 // pred_fallthru
    _
  // Predicated region
  $region26: #{mnist_classifier_forward.1} parent=0 // pred_check
    _
  $region27: #{mnist_classifier_forward.1} parent=0 // pred_check_branch
    %27 = sbr.rel (0) target = $region29
  $region28: #{mnist_classifier_forward.1} parent=0 // pred_region
    _
  $region29: #{mnist_classifier_forward.1} parent=0 // pred_fallthru
    _
  // Predicated region
  $region30: #{mnist_classifier_forward.1} parent=0 // pred_check
    _
  $region31: #{mnist_classifier_forward.1} parent=0 // pred_check_branch
    %29 = sbr.rel (0) target = $region33
  $region32: #{mnist_classifier_forward.1} parent=0 // pred_region
    _
  $region33: #{mnist_classifier_forward.1} parent=0 // pred_fallthru
    _
  // Predicated region
  $region34: #{mnist_classifier_forward.1} parent=0 // pred_check
    _
  $region35: #{mnist_classifier_forward.1} parent=0 // pred_check_branch
    %31 = sbr.rel (0) target = $region37
  $region36: #{mnist_classifier_forward.1} parent=0 // pred_region
    _
  $region37: #{mnist_classifier_forward.1} parent=0 // pred_fallthru
    _
  %v33 = vld [vmem:[%s0] sm:$0xff]
  %v34 = vld [vmem:[%s0 + $0x8] sm:$0xff]
  %v35 = vld [vmem:[%s0 + $0x10] sm:$0xff]
  %v36 = vld [vmem:[%s0 + $0x18] sm:$0xff]
  %v37 = vld [vmem:[%s0 + $0x20] sm:$0xff]
  %v38 = vld [vmem:[%s0 + $0x28] sm:$0xff]
  %v39 = vld [vmem:[%s0 + $0x30] sm:$0xff]
  %v40 = vld [vmem:[%s0 + $0x38] sm:$0xff]
  %v41 = vld [vmem:[%s0 + $0x40] sm:$0xff]
  %v42 = vld [vmem:[%s0 + $0x48] sm:$0xff]
  %v43 = vld [vmem:[%s0 + $0x50] sm:$0xff]
  %v44 = vld [vmem:[%s0 + $0x58] sm:$0xff]
  %v45 = vld [vmem:[%s0 + $0x60] sm:$0xff]
  %v46 = vld [vmem:[%s0 + $0x68] sm:$0xff]
  %v47 = vld [vmem:[%s0 + $0x70] sm:$0xff]
  %v48 = vld [vmem:[%s0 + $0x78] sm:$0xff]
  %v49 = vld [vmem:[%s0 + $0x80] sm:$0xff]
  %v50 = vld [vmem:[%s0 + $0x88] sm:$0xff]
  %v51 = vld [vmem:[%s0 + $0x90] sm:$0xff]
  %v52 = vld [vmem:[%s0 + $0x98] sm:$0xff]
  %v53 = vld [vmem:[%s0 + $0xa0] sm:$0xff]
  %v54 = vld [vmem:[%s0 + $0xa8] sm:$0xff]
  %v55 = vld [vmem:[%s0 + $0xb0] sm:$0xff]
  %v56 = vld [vmem:[%s0 + $0xb8] sm:$0xff]
  %v57 = vld [vmem:[%s1] sm:$0xff]
  %v58 = vld [vmem:[%s1 + $0x8] sm:$0xff]
  %v59 = vld [vmem:[%s1 + $0x10] sm:$0xff]
  %v60 = vld [vmem:[%s1 + $0x18] sm:$0xff]
  %v61 = vld [vmem:[%s1 + $0x20] sm:$0xff]
  %v62 = vld [vmem:[%s1 + $0x28] sm:$0xff]
  %v63 = vld [vmem:[%s1 + $0x30] sm:$0xff]
  %v64 = vld [vmem:[%s1 + $0x38] sm:$0xff]
  %v65 = vld [vmem:[%s1 + $0x40] sm:$0xff]
  %v66 = vld [vmem:[%s1 + $0x48] sm:$0xff]
  %v67 = vld [vmem:[%s1 + $0x50] sm:$0xff]
  %v68 = vld [vmem:[%s1 + $0x58] sm:$0xff]
  %v69 = vld [vmem:[%s1 + $0x60] sm:$0xff]
  %v70 = vld [vmem:[%s1 + $0x68] sm:$0xff]
  %v71 = vld [vmem:[%s1 + $0x70] sm:$0xff]
  %v72 = vld [vmem:[%s1 + $0x78] sm:$0xff]
  %v73 = vld [vmem:[%s1 + $0x80] sm:$0xff]
  %v74 = vld [vmem:[%s1 + $0x88] sm:$0xff]
  %v75 = vld [vmem:[%s1 + $0x90] sm:$0xff]
  %v76 = vld [vmem:[%s1 + $0x98] sm:$0xff]
  %v77 = vld [vmem:[%s1 + $0xa0] sm:$0xff]
  %v78 = vld [vmem:[%s1 + $0xa8] sm:$0xff]
  %v79 = vld [vmem:[%s1 + $0xb0] sm:$0xff]
  %v80 = vld [vmem:[%s1 + $0xb8] sm:$0xff]
  %v81 = vld [vmem:[%s1 + $0xc0] sm:$0xff]
  %v82 = vld [vmem:[%s1 + $0xc8] sm:$0xff]
  %v83 = vld [vmem:[%s1 + $0xd0] sm:$0xff]
  %v84 = vld [vmem:[%s1 + $0xd8] sm:$0xff]
  %v85 = vld [vmem:[%s1 + $0xe0] sm:$0xff]
  %v86 = vld [vmem:[%s1 + $0xe8] sm:$0xff]
  %v87 = vld [vmem:[%s1 + $0xf0] sm:$0xff]
  %v88 = vld [vmem:[%s1 + $0xf8] sm:$0xff]
  %v89 = vld [vmem:[%s1 + $0x100] sm:$0xff]
  %v90 = vld [vmem:[%s1 + $0x108] sm:$0xff]
  %v91 = vld [vmem:[%s1 + $0x110] sm:$0xff]
  %v92 = vld [vmem:[%s1 + $0x118] sm:$0xff]
  %v93 = vld [vmem:[%s1 + $0x120] sm:$0xff]
  %v94 = vld [vmem:[%s1 + $0x128] sm:$0xff]
  %v95 = vld [vmem:[%s1 + $0x130] sm:$0xff]
  %v96 = vld [vmem:[%s1 + $0x138] sm:$0xff]
  %v97 = vld [vmem:[%s1 + $0x140] sm:$0xff]
  %v98 = vld [vmem:[%s1 + $0x148] sm:$0xff]
  %v123 = vunpack.c.l.b16 %v33
  %v124 = vunpack.c.h.b16 %v33
  %v125 = vunpack.c.l.b16 %v34
  %v126 = vunpack.c.h.b16 %v34
  %v127 = vunpack.c.l.b16 %v35
  %v128 = vunpack.c.h.b16 %v35
  %v129 = vunpack.c.l.b16 %v36
  %v130 = vunpack.c.h.b16 %v36
  %v131 = vunpack.c.l.b16 %v37
  %v132 = vunpack.c.h.b16 %v37
  %v133 = vunpack.c.l.b16 %v38
  %v134 = vunpack.c.h.b16 %v38
  %v135 = vunpack.c.l.b16 %v39
  %v136 = vunpack.c.h.b16 %v39
  %v137 = vunpack.c.l.b16 %v40
  %v138 = vunpack.c.h.b16 %v40
  %v139 = vunpack.c.l.b16 %v41
  %v140 = vunpack.c.h.b16 %v41
  %v141 = vunpack.c.l.b16 %v42
  %v142 = vunpack.c.h.b16 %v42
  %v143 = vunpack.c.l.b16 %v43
  %v144 = vunpack.c.h.b16 %v43
  %v145 = vunpack.c.l.b16 %v44
  %v146 = vunpack.c.h.b16 %v44
  %v147 = vunpack.c.l.b16 %v45
  %v148 = vunpack.c.h.b16 %v45
  %v149 = vunpack.c.l.b16 %v46
  %v150 = vunpack.c.h.b16 %v46
  %v151 = vunpack.c.l.b16 %v47
  %v152 = vunpack.c.h.b16 %v47
  %v153 = vunpack.c.l.b16 %v48
  %v154 = vunpack.c.h.b16 %v48
  %v155 = vunpack.c.l.b16 %v49
  %v156 = vunpack.c.h.b16 %v49
  %v157 = vunpack.c.l.b16 %v50
  %v158 = vunpack.c.h.b16 %v50
  %v159 = vunpack.c.l.b16 %v51
  %v160 = vunpack.c.h.b16 %v51
  %v161 = vunpack.c.l.b16 %v52
  %v162 = vunpack.c.h.b16 %v52
  %v163 = vunpack.c.l.b16 %v53
  %v164 = vunpack.c.h.b16 %v53
  %v165 = vunpack.c.l.b16 %v54
  %v166 = vunpack.c.h.b16 %v54
  %v167 = vunpack.c.l.b16 %v55
  %v168 = vunpack.c.h.b16 %v55
  %v169 = vunpack.c.l.b16 %v56
  %v170 = vunpack.c.h.b16 %v56
  %v171 = vpack.c.b16 %v125, %v123
  %v172 = vpack.c.b16 %v126, %v124
  %v173 = vpack.c.b16 %v129, %v127
  %v174 = vpack.c.b16 %v130, %v128
  %v175 = vpack.c.b16 %v133, %v131
  %v176 = vpack.c.b16 %v134, %v132
  %v177 = vpack.c.b16 %v137, %v135
  %v178 = vpack.c.b16 %v138, %v136
  %v179 = vpack.c.b16 %v141, %v139
  %v180 = vpack.c.b16 %v142, %v140
  %v181 = vpack.c.b16 %v145, %v143
  %v182 = vpack.c.b16 %v146, %v144
  %v183 = vpack.c.b16 %v149, %v147
  %v184 = vpack.c.b16 %v150, %v148
  %v185 = vpack.c.b16 %v153, %v151
  %v186 = vpack.c.b16 %v154, %v152
  %v187 = vpack.c.b16 %v157, %v155
  %v188 = vpack.c.b16 %v158, %v156
  %v189 = vpack.c.b16 %v161, %v159
  %v190 = vpack.c.b16 %v162, %v160
  %v191 = vpack.c.b16 %v165, %v163
  %v192 = vpack.c.b16 %v166, %v164
  %v193 = vpack.c.b16 %v169, %v167
  %v194 = vpack.c.b16 %v170, %v168
  %v249 = vunpack.c.l.b16 %v57
  %v250 = vunpack.c.h.b16 %v57
  %v251 = vunpack.c.l.b16 %v58
  %v252 = vunpack.c.h.b16 %v58
  %v253 = vunpack.c.l.b16 %v59
  %v254 = vunpack.c.h.b16 %v59
  %v255 = vunpack.c.l.b16 %v60
  %v256 = vunpack.c.h.b16 %v60
  %v257 = vunpack.c.l.b16 %v61
  %v258 = vunpack.c.h.b16 %v61
  %v259 = vunpack.c.l.b16 %v62
  %v260 = vunpack.c.h.b16 %v62
  %v261 = vunpack.c.l.b16 %v63
  %v262 = vunpack.c.h.b16 %v63
  %v263 = vunpack.c.l.b16 %v64
  %v264 = vunpack.c.h.b16 %v64
  %v265 = vunpack.c.l.b16 %v65
  %v266 = vunpack.c.h.b16 %v65
  %v267 = vunpack.c.l.b16 %v66
  %v268 = vunpack.c.h.b16 %v66
  %v269 = vunpack.c.l.b16 %v67
  %v270 = vunpack.c.h.b16 %v67
  %v271 = vunpack.c.l.b16 %v68
  %v272 = vunpack.c.h.b16 %v68
  %v273 = vunpack.c.l.b16 %v69
  %v274 = vunpack.c.h.b16 %v69
  %v275 = vunpack.c.l.b16 %v70
  %v276 = vunpack.c.h.b16 %v70
  %v277 = vunpack.c.l.b16 %v71
  %v278 = vunpack.c.h.b16 %v71
  %v279 = vunpack.c.l.b16 %v72
  %v280 = vunpack.c.h.b16 %v72
  %v281 = vunpack.c.l.b16 %v73
  %v282 = vunpack.c.h.b16 %v73
  %v283 = vunpack.c.l.b16 %v74
  %v284 = vunpack.c.h.b16 %v74
  %v285 = vunpack.c.l.b16 %v75
  %v286 = vunpack.c.h.b16 %v75
  %v287 = vunpack.c.l.b16 %v76
  %v288 = vunpack.c.h.b16 %v76
  %v289 = vunpack.c.l.b16 %v77
  %v290 = vunpack.c.h.b16 %v77
  %v291 = vunpack.c.l.b16 %v78
  %v292 = vunpack.c.h.b16 %v78
  %v293 = vunpack.c.l.b16 %v79
  %v294 = vunpack.c.h.b16 %v79
  %v295 = vunpack.c.l.b16 %v80
  %v296 = vunpack.c.h.b16 %v80
  %v297 = vunpack.c.l.b16 %v81
  %v298 = vunpack.c.h.b16 %v81
  %v299 = vunpack.c.l.b16 %v82
  %v300 = vunpack.c.h.b16 %v82
  %v301 = vunpack.c.l.b16 %v83
  %v302 = vunpack.c.h.b16 %v83
  %v303 = vunpack.c.l.b16 %v84
  %v304 = vunpack.c.h.b16 %v84
  %v305 = vunpack.c.l.b16 %v85
  %v306 = vunpack.c.h.b16 %v85
  %v307 = vunpack.c.l.b16 %v86
  %v308 = vunpack.c.h.b16 %v86
  %v309 = vunpack.c.l.b16 %v87
  %v310 = vunpack.c.h.b16 %v87
  %v311 = vunpack.c.l.b16 %v88
  %v312 = vunpack.c.h.b16 %v88
  %v313 = vunpack.c.l.b16 %v89
  %v314 = vunpack.c.h.b16 %v89
  %v315 = vunpack.c.l.b16 %v90
  %v316 = vunpack.c.h.b16 %v90
  %v317 = vunpack.c.l.b16 %v91
  %v318 = vunpack.c.h.b16 %v91
  %v319 = vunpack.c.l.b16 %v92
  %v320 = vunpack.c.h.b16 %v92
  %v321 = vunpack.c.l.b16 %v93
  %v322 = vunpack.c.h.b16 %v93
  %v323 = vunpack.c.l.b16 %v94
  %v324 = vunpack.c.h.b16 %v94
  %v325 = vunpack.c.l.b16 %v95
  %v326 = vunpack.c.h.b16 %v95
  %v327 = vunpack.c.l.b16 %v96
  %v328 = vunpack.c.h.b16 %v96
  %v329 = vunpack.c.l.b16 %v97
  %v330 = vunpack.c.h.b16 %v97
  %v331 = vunpack.c.l.b16 %v98
  %v332 = vunpack.c.h.b16 %v98
  %v333 = vpack.c.b16 %v253, %v249
  %v334 = vpack.c.b16 %v254, %v250
  %v335 = vpack.c.b16 %v255, %v251
  %v336 = vpack.c.b16 %v256, %v252
  %v337 = vpack.c.b16 %v261, %v257
  %v338 = vpack.c.b16 %v262, %v258
  %v339 = vpack.c.b16 %v263, %v259
  %v340 = vpack.c.b16 %v264, %v260
  %v341 = vpack.c.b16 %v269, %v265
  %v342 = vpack.c.b16 %v270, %v266
  %v343 = vpack.c.b16 %v271, %v267
  %v344 = vpack.c.b16 %v272, %v268
  %v345 = vpack.c.b16 %v277, %v273
  %v346 = vpack.c.b16 %v278, %v274
  %v347 = vpack.c.b16 %v279, %v275
  %v348 = vpack.c.b16 %v280, %v276
  %v349 = vpack.c.b16 %v285, %v281
  %v350 = vpack.c.b16 %v286, %v282
  %v351 = vpack.c.b16 %v287, %v283
  %v352 = vpack.c.b16 %v288, %v284
  %v353 = vpack.c.b16 %v293, %v289
  %v354 = vpack.c.b16 %v294, %v290
  %v355 = vpack.c.b16 %v295, %v291
  %v356 = vpack.c.b16 %v296, %v292
  %v357 = vpack.c.b16 %v301, %v297
  %v358 = vpack.c.b16 %v302, %v298
  %v359 = vpack.c.b16 %v303, %v299
  %v360 = vpack.c.b16 %v304, %v300
  %v361 = vpack.c.b16 %v309, %v305
  %v362 = vpack.c.b16 %v310, %v306
  %v363 = vpack.c.b16 %v311, %v307
  %v364 = vpack.c.b16 %v312, %v308
  %v365 = vpack.c.b16 %v317, %v313
  %v366 = vpack.c.b16 %v318, %v314
  %v367 = vpack.c.b16 %v319, %v315
  %v368 = vpack.c.b16 %v320, %v316
  %v369 = vpack.c.b16 %v325, %v321
  %v370 = vpack.c.b16 %v326, %v322
  %v371 = vpack.c.b16 %v327, %v323
  %v372 = vpack.c.b16 %v328, %v324
  %v373 = vpack.c.b16 %v329, %v329
  %v374 = vpack.c.b16 %v330, %v330
  %v375 = vpack.c.b16 %v331, %v331
  %v376 = vpack.c.b16 %v332, %v332
  %vm417 = vcmask 326656
  %v419 = vsel %vm417, %v172, 0
  %v422 = vsel %vm417, %v174, 0
  %v425 = vsel %vm417, %v176, 0
  %v428 = vsel %vm417, %v178, 0
  %v431 = vsel %vm417, %v180, 0
  %v434 = vsel %vm417, %v182, 0
  %v437 = vsel %vm417, %v184, 0
  %v440 = vsel %vm417, %v186, 0
  %v443 = vsel %vm417, %v188, 0
  %v446 = vsel %vm417, %v190, 0
  %v449 = vsel %vm417, %v192, 0
  %v452 = vsel %vm417, %v194, 0
  %vm454 = vcmask 1043456
  %v456 = vsel %vm454, %v373, 0
  %v459 = vsel %vm454, %v374, 0
  %v462 = vsel %vm454, %v375, 0
  %v465 = vsel %vm454, %v376, 0
  %467 = vmatpush.bf16.msra.mxu0 %v361
  %468 = vmatpush.bf16.msra.mxu0 %v357
  %469 = vmatpush.bf16.msra.mxu0 %v353
  %470 = vmatpush.bf16.msra.mxu0 %v349
  %471 = vmatpush.bf16.msra.mxu0 %v345
  %472 = vmatpush.bf16.msra.mxu0 %v341
  %473 = vmatpush.bf16.msra.mxu0 %v337
  %474 = vmatpush.bf16.msra.mxu0 %v333
  %475 = vmatmul.bf16.gmra.mxu0 %v171
  %v476 = vpop.f32.mrf.mxu0
  %v477 = vadd.f32 0.0, %v476
  %v478 = vpop.f32.mrf.mxu0
  %v479 = vadd.f32 0.0, %v478
  %480 = vmatmul.bf16.gmra.mxu0 %v173
  %v481 = vpop.f32.mrf.mxu0
  %v482 = vadd.f32 0.0, %v481
  %v483 = vpop.f32.mrf.mxu0
  %v484 = vadd.f32 0.0, %v483
  %485 = vmatmul.bf16.gmra.mxu0 %v175
  %v486 = vpop.f32.mrf.mxu0
  %v487 = vadd.f32 0.0, %v486
  %v488 = vpop.f32.mrf.mxu0
  %v489 = vadd.f32 0.0, %v488
  %490 = vmatmul.bf16.gmra.mxu0 %v177
  %v491 = vpop.f32.mrf.mxu0
  %v492 = vadd.f32 0.0, %v491
  %v493 = vpop.f32.mrf.mxu0
  %v494 = vadd.f32 0.0, %v493
  %495 = vmatmul.bf16.gmra.mxu0 %v179
  %v496 = vpop.f32.mrf.mxu0
  %v497 = vadd.f32 0.0, %v496
  %v498 = vpop.f32.mrf.mxu0
  %v499 = vadd.f32 0.0, %v498
  %500 = vmatmul.bf16.gmra.mxu0 %v181
  %v501 = vpop.f32.mrf.mxu0
  %v502 = vadd.f32 0.0, %v501
  %v503 = vpop.f32.mrf.mxu0
  %v504 = vadd.f32 0.0, %v503
  %505 = vmatmul.bf16.gmra.mxu0 %v183
  %v506 = vpop.f32.mrf.mxu0
  %v507 = vadd.f32 0.0, %v506
  %v508 = vpop.f32.mrf.mxu0
  %v509 = vadd.f32 0.0, %v508
  %510 = vmatmul.bf16.gmra.mxu0 %v185
  %v511 = vpop.f32.mrf.mxu0
  %v512 = vadd.f32 0.0, %v511
  %v513 = vpop.f32.mrf.mxu0
  %v514 = vadd.f32 0.0, %v513
  %515 = vmatmul.bf16.gmra.mxu0 %v187
  %v516 = vpop.f32.mrf.mxu0
  %v517 = vadd.f32 0.0, %v516
  %v518 = vpop.f32.mrf.mxu0
  %v519 = vadd.f32 0.0, %v518
  %520 = vmatmul.bf16.gmra.mxu0 %v189
  %v521 = vpop.f32.mrf.mxu0
  %v522 = vadd.f32 0.0, %v521
  %v523 = vpop.f32.mrf.mxu0
  %v524 = vadd.f32 0.0, %v523
  %525 = vmatmul.bf16.gmra.mxu0 %v191
  %v526 = vpop.f32.mrf.mxu0
  %v527 = vadd.f32 0.0, %v526
  %v528 = vpop.f32.mrf.mxu0
  %v529 = vadd.f32 0.0, %v528
  %530 = vmatmul.bf16.gmra.mxu0 %v193
  %v531 = vpop.f32.mrf.mxu0
  %v532 = vadd.f32 0.0, %v531
  %v533 = vpop.f32.mrf.mxu0
  %v534 = vadd.f32 0.0, %v533
  %535 = vdwg.mxu0
  %536 = vmatpush.bf16.msra.mxu0 0
  %537 = vmatpush.bf16.msra.mxu0 0
  %538 = vmatpush.bf16.msra.mxu0 0
  %539 = vmatpush.bf16.msra.mxu0 0
  %540 = vmatpush.bf16.msra.mxu0 0
  %541 = vmatpush.bf16.msra.mxu0 %v456
  %542 = vmatpush.bf16.msra.mxu0 %v369
  %543 = vmatpush.bf16.msra.mxu0 %v365
  %544 = vmatmul.bf16.gmra.mxu0 %v419
  %v545 = vpop.f32.mrf.mxu0
  %v546 = vadd.f32 %v477, %v545
  %v547 = vpop.f32.mrf.mxu0
  %v548 = vadd.f32 %v479, %v547
  %549 = vmatmul.bf16.gmra.mxu0 %v422
  %v550 = vpop.f32.mrf.mxu0
  %v551 = vadd.f32 %v482, %v550
  %v552 = vpop.f32.mrf.mxu0
  %v553 = vadd.f32 %v484, %v552
  %554 = vmatmul.bf16.gmra.mxu0 %v425
  %v555 = vpop.f32.mrf.mxu0
  %v556 = vadd.f32 %v487, %v555
  %v557 = vpop.f32.mrf.mxu0
  %v558 = vadd.f32 %v489, %v557
  %559 = vmatmul.bf16.gmra.mxu0 %v428
  %v560 = vpop.f32.mrf.mxu0
  %v561 = vadd.f32 %v492, %v560
  %v562 = vpop.f32.mrf.mxu0
  %v563 = vadd.f32 %v494, %v562
  %564 = vmatmul.bf16.gmra.mxu0 %v431
  %v565 = vpop.f32.mrf.mxu0
  %v566 = vadd.f32 %v497, %v565
  %v567 = vpop.f32.mrf.mxu0
  %v568 = vadd.f32 %v499, %v567
  %569 = vmatmul.bf16.gmra.mxu0 %v434
  %v570 = vpop.f32.mrf.mxu0
  %v571 = vadd.f32 %v502, %v570
  %v572 = vpop.f32.mrf.mxu0
  %v573 = vadd.f32 %v504, %v572
  %574 = vmatmul.bf16.gmra.mxu0 %v437
  %v575 = vpop.f32.mrf.mxu0
  %v576 = vadd.f32 %v507, %v575
  %v577 = vpop.f32.mrf.mxu0
  %v578 = vadd.f32 %v509, %v577
  %579 = vmatmul.bf16.gmra.mxu0 %v440
  %v580 = vpop.f32.mrf.mxu0
  %v581 = vadd.f32 %v512, %v580
  %v582 = vpop.f32.mrf.mxu0
  %v583 = vadd.f32 %v514, %v582
  %584 = vmatmul.bf16.gmra.mxu0 %v443
  %v585 = vpop.f32.mrf.mxu0
  %v586 = vadd.f32 %v517, %v585
  %v587 = vpop.f32.mrf.mxu0
  %v588 = vadd.f32 %v519, %v587
  %589 = vmatmul.bf16.gmra.mxu0 %v446
  %v590 = vpop.f32.mrf.mxu0
  %v591 = vadd.f32 %v522, %v590
  %v592 = vpop.f32.mrf.mxu0
  %v593 = vadd.f32 %v524, %v592
  %594 = vmatmul.bf16.gmra.mxu0 %v449
  %v595 = vpop.f32.mrf.mxu0
  %v596 = vadd.f32 %v527, %v595
  %v597 = vpop.f32.mrf.mxu0
  %v598 = vadd.f32 %v529, %v597
  %599 = vmatmul.bf16.gmra.mxu0 %v452
  %v600 = vpop.f32.mrf.mxu0
  %v601 = vadd.f32 %v532, %v600
  %v602 = vpop.f32.mrf.mxu0
  %v603 = vadd.f32 %v534, %v602
  %604 = vdwg.mxu0
  %605 = vmatpush.bf16.msra.mxu0 %v362
  %606 = vmatpush.bf16.msra.mxu0 %v358
  %607 = vmatpush.bf16.msra.mxu0 %v354
  %608 = vmatpush.bf16.msra.mxu0 %v350
  %609 = vmatpush.bf16.msra.mxu0 %v346
  %610 = vmatpush.bf16.msra.mxu0 %v342
  %611 = vmatpush.bf16.msra.mxu0 %v338
  %612 = vmatpush.bf16.msra.mxu0 %v334
  %613 = vmatmul.bf16.gmra.mxu0 %v171
  %v614 = vpop.f32.mrf.mxu0
  %v615 = vadd.f32 0.0, %v614
  %v616 = vpop.f32.mrf.mxu0
  %v617 = vadd.f32 0.0, %v616
  %618 = vmatmul.bf16.gmra.mxu0 %v173
  %v619 = vpop.f32.mrf.mxu0
  %v620 = vadd.f32 0.0, %v619
  %v621 = vpop.f32.mrf.mxu0
  %v622 = vadd.f32 0.0, %v621
  %623 = vmatmul.bf16.gmra.mxu0 %v175
  %v624 = vpop.f32.mrf.mxu0
  %v625 = vadd.f32 0.0, %v624
  %v626 = vpop.f32.mrf.mxu0
  %v627 = vadd.f32 0.0, %v626
  %628 = vmatmul.bf16.gmra.mxu0 %v177
  %v629 = vpop.f32.mrf.mxu0
  %v630 = vadd.f32 0.0, %v629
  %v631 = vpop.f32.mrf.mxu0
  %v632 = vadd.f32 0.0, %v631
  %633 = vmatmul.bf16.gmra.mxu0 %v179
  %v634 = vpop.f32.mrf.mxu0
  %v635 = vadd.f32 0.0, %v634
  %v636 = vpop.f32.mrf.mxu0
  %v637 = vadd.f32 0.0, %v636
  %638 = vmatmul.bf16.gmra.mxu0 %v181
  %v639 = vpop.f32.mrf.mxu0
  %v640 = vadd.f32 0.0, %v639
  %v641 = vpop.f32.mrf.mxu0
  %v642 = vadd.f32 0.0, %v641
  %643 = vmatmul.bf16.gmra.mxu0 %v183
  %v644 = vpop.f32.mrf.mxu0
  %v645 = vadd.f32 0.0, %v644
  %v646 = vpop.f32.mrf.mxu0
  %v647 = vadd.f32 0.0, %v646
  %648 = vmatmul.bf16.gmra.mxu0 %v185
  %v649 = vpop.f32.mrf.mxu0
  %v650 = vadd.f32 0.0, %v649
  %v651 = vpop.f32.mrf.mxu0
  %v652 = vadd.f32 0.0, %v651
  %653 = vmatmul.bf16.gmra.mxu0 %v187
  %v654 = vpop.f32.mrf.mxu0
  %v655 = vadd.f32 0.0, %v654
  %v656 = vpop.f32.mrf.mxu0
  %v657 = vadd.f32 0.0, %v656
  %658 = vmatmul.bf16.gmra.mxu0 %v189
  %v659 = vpop.f32.mrf.mxu0
  %v660 = vadd.f32 0.0, %v659
  %v661 = vpop.f32.mrf.mxu0
  %v662 = vadd.f32 0.0, %v661
  %663 = vmatmul.bf16.gmra.mxu0 %v191
  %v664 = vpop.f32.mrf.mxu0
  %v665 = vadd.f32 0.0, %v664
  %v666 = vpop.f32.mrf.mxu0
  %v667 = vadd.f32 0.0, %v666
  %668 = vmatmul.bf16.gmra.mxu0 %v193
  %v669 = vpop.f32.mrf.mxu0
  %v670 = vadd.f32 0.0, %v669
  %v671 = vpop.f32.mrf.mxu0
  %v672 = vadd.f32 0.0, %v671
  %673 = vdwg.mxu0
  %674 = vmatpush.bf16.msra.mxu0 0
  %675 = vmatpush.bf16.msra.mxu0 0
  %676 = vmatpush.bf16.msra.mxu0 0
  %677 = vmatpush.bf16.msra.mxu0 0
  %678 = vmatpush.bf16.msra.mxu0 0
  %679 = vmatpush.bf16.msra.mxu0 %v459
  %680 = vmatpush.bf16.msra.mxu0 %v370
  %681 = vmatpush.bf16.msra.mxu0 %v366
  %682 = vmatmul.bf16.gmra.mxu0 %v419
  %v683 = vpop.f32.mrf.mxu0
  %v684 = vadd.f32 %v615, %v683
  %v685 = vpop.f32.mrf.mxu0
  %v686 = vadd.f32 %v617, %v685
  %687 = vmatmul.bf16.gmra.mxu0 %v422
  %v688 = vpop.f32.mrf.mxu0
  %v689 = vadd.f32 %v620, %v688
  %v690 = vpop.f32.mrf.mxu0
  %v691 = vadd.f32 %v622, %v690
  %692 = vmatmul.bf16.gmra.mxu0 %v425
  %v693 = vpop.f32.mrf.mxu0
  %v694 = vadd.f32 %v625, %v693
  %v695 = vpop.f32.mrf.mxu0
  %v696 = vadd.f32 %v627, %v695
  %697 = vmatmul.bf16.gmra.mxu0 %v428
  %v698 = vpop.f32.mrf.mxu0
  %v699 = vadd.f32 %v630, %v698
  %v700 = vpop.f32.mrf.mxu0
  %v701 = vadd.f32 %v632, %v700
  %702 = vmatmul.bf16.gmra.mxu0 %v431
  %v703 = vpop.f32.mrf.mxu0
  %v704 = vadd.f32 %v635, %v703
  %v705 = vpop.f32.mrf.mxu0
  %v706 = vadd.f32 %v637, %v705
  %707 = vmatmul.bf16.gmra.mxu0 %v434
  %v708 = vpop.f32.mrf.mxu0
  %v709 = vadd.f32 %v640, %v708
  %v710 = vpop.f32.mrf.mxu0
  %v711 = vadd.f32 %v642, %v710
  %712 = vmatmul.bf16.gmra.mxu0 %v437
  %v713 = vpop.f32.mrf.mxu0
  %v714 = vadd.f32 %v645, %v713
  %v715 = vpop.f32.mrf.mxu0
  %v716 = vadd.f32 %v647, %v715
  %717 = vmatmul.bf16.gmra.mxu0 %v440
  %v718 = vpop.f32.mrf.mxu0
  %v719 = vadd.f32 %v650, %v718
  %v720 = vpop.f32.mrf.mxu0
  %v721 = vadd.f32 %v652, %v720
  %722 = vmatmul.bf16.gmra.mxu0 %v443
  %v723 = vpop.f32.mrf.mxu0
  %v724 = vadd.f32 %v655, %v723
  %v725 = vpop.f32.mrf.mxu0
  %v726 = vadd.f32 %v657, %v725
  %727 = vmatmul.bf16.gmra.mxu0 %v446
  %v728 = vpop.f32.mrf.mxu0
  %v729 = vadd.f32 %v660, %v728
  %v730 = vpop.f32.mrf.mxu0
  %v731 = vadd.f32 %v662, %v730
  %732 = vmatmul.bf16.gmra.mxu0 %v449
  %v733 = vpop.f32.mrf.mxu0
  %v734 = vadd.f32 %v665, %v733
  %v735 = vpop.f32.mrf.mxu0
  %v736 = vadd.f32 %v667, %v735
  %737 = vmatmul.bf16.gmra.mxu0 %v452
  %v738 = vpop.f32.mrf.mxu0
  %v739 = vadd.f32 %v670, %v738
  %v740 = vpop.f32.mrf.mxu0
  %v741 = vadd.f32 %v672, %v740
  %742 = vdwg.mxu0
  %743 = vmatpush.bf16.msra.mxu0 %v363
  %744 = vmatpush.bf16.msra.mxu0 %v359
  %745 = vmatpush.bf16.msra.mxu0 %v355
  %746 = vmatpush.bf16.msra.mxu0 %v351
  %747 = vmatpush.bf16.msra.mxu0 %v347
  %748 = vmatpush.bf16.msra.mxu0 %v343
  %749 = vmatpush.bf16.msra.mxu0 %v339
  %750 = vmatpush.bf16.msra.mxu0 %v335
  %751 = vmatmul.bf16.gmra.mxu0 %v171
  %v752 = vpop.f32.mrf.mxu0
  %v753 = vadd.f32 0.0, %v752
  %v754 = vpop.f32.mrf.mxu0
  %v755 = vadd.f32 0.0, %v754
  %756 = vmatmul.bf16.gmra.mxu0 %v173
  %v757 = vpop.f32.mrf.mxu0
  %v758 = vadd.f32 0.0, %v757
  %v759 = vpop.f32.mrf.mxu0
  %v760 = vadd.f32 0.0, %v759
  %761 = vmatmul.bf16.gmra.mxu0 %v175
  %v762 = vpop.f32.mrf.mxu0
  %v763 = vadd.f32 0.0, %v762
  %v764 = vpop.f32.mrf.mxu0
  %v765 = vadd.f32 0.0, %v764
  %766 = vmatmul.bf16.gmra.mxu0 %v177
  %v767 = vpop.f32.mrf.mxu0
  %v768 = vadd.f32 0.0, %v767
  %v769 = vpop.f32.mrf.mxu0
  %v770 = vadd.f32 0.0, %v769
  %771 = vmatmul.bf16.gmra.mxu0 %v179
  %v772 = vpop.f32.mrf.mxu0
  %v773 = vadd.f32 0.0, %v772
  %v774 = vpop.f32.mrf.mxu0
  %v775 = vadd.f32 0.0, %v774
  %776 = vmatmul.bf16.gmra.mxu0 %v181
  %v777 = vpop.f32.mrf.mxu0
  %v778 = vadd.f32 0.0, %v777
  %v779 = vpop.f32.mrf.mxu0
  %v780 = vadd.f32 0.0, %v779
  %781 = vmatmul.bf16.gmra.mxu0 %v183
  %v782 = vpop.f32.mrf.mxu0
  %v783 = vadd.f32 0.0, %v782
  %v784 = vpop.f32.mrf.mxu0
  %v785 = vadd.f32 0.0, %v784
  %786 = vmatmul.bf16.gmra.mxu0 %v185
  %v787 = vpop.f32.mrf.mxu0
  %v788 = vadd.f32 0.0, %v787
  %v789 = vpop.f32.mrf.mxu0
  %v790 = vadd.f32 0.0, %v789
  %791 = vmatmul.bf16.gmra.mxu0 %v187
  %v792 = vpop.f32.mrf.mxu0
  %v793 = vadd.f32 0.0, %v792
  %v794 = vpop.f32.mrf.mxu0
  %v795 = vadd.f32 0.0, %v794
  %796 = vmatmul.bf16.gmra.mxu0 %v189
  %v797 = vpop.f32.mrf.mxu0
  %v798 = vadd.f32 0.0, %v797
  %v799 = vpop.f32.mrf.mxu0
  %v800 = vadd.f32 0.0, %v799
  %801 = vmatmul.bf16.gmra.mxu0 %v191
  %v802 = vpop.f32.mrf.mxu0
  %v803 = vadd.f32 0.0, %v802
  %v804 = vpop.f32.mrf.mxu0
  %v805 = vadd.f32 0.0, %v804
  %806 = vmatmul.bf16.gmra.mxu0 %v193
  %v807 = vpop.f32.mrf.mxu0
  %v808 = vadd.f32 0.0, %v807
  %v809 = vpop.f32.mrf.mxu0
  %v810 = vadd.f32 0.0, %v809
  %811 = vdwg.mxu0
  %812 = vmatpush.bf16.msra.mxu0 0
  %813 = vmatpush.bf16.msra.mxu0 0
  %814 = vmatpush.bf16.msra.mxu0 0
  %815 = vmatpush.bf16.msra.mxu0 0
  %816 = vmatpush.bf16.msra.mxu0 0
  %817 = vmatpush.bf16.msra.mxu0 %v462
  %818 = vmatpush.bf16.msra.mxu0 %v371
  %819 = vmatpush.bf16.msra.mxu0 %v367
  %820 = vmatmul.bf16.gmra.mxu0 %v419
  %v821 = vpop.f32.mrf.mxu0
  %v822 = vadd.f32 %v753, %v821
  %v823 = vpop.f32.mrf.mxu0
  %v824 = vadd.f32 %v755, %v823
  %825 = vmatmul.bf16.gmra.mxu0 %v422
  %v826 = vpop.f32.mrf.mxu0
  %v827 = vadd.f32 %v758, %v826
  %v828 = vpop.f32.mrf.mxu0
  %v829 = vadd.f32 %v760, %v828
  %830 = vmatmul.bf16.gmra.mxu0 %v425
  %v831 = vpop.f32.mrf.mxu0
  %v832 = vadd.f32 %v763, %v831
  %v833 = vpop.f32.mrf.mxu0
  %v834 = vadd.f32 %v765, %v833
  %835 = vmatmul.bf16.gmra.mxu0 %v428
  %v836 = vpop.f32.mrf.mxu0
  %v837 = vadd.f32 %v768, %v836
  %v838 = vpop.f32.mrf.mxu0
  %v839 = vadd.f32 %v770, %v838
  %840 = vmatmul.bf16.gmra.mxu0 %v431
  %v841 = vpop.f32.mrf.mxu0
  %v842 = vadd.f32 %v773, %v841
  %v843 = vpop.f32.mrf.mxu0
  %v844 = vadd.f32 %v775, %v843
  %845 = vmatmul.bf16.gmra.mxu0 %v434
  %v846 = vpop.f32.mrf.mxu0
  %v847 = vadd.f32 %v778, %v846
  %v848 = vpop.f32.mrf.mxu0
  %v849 = vadd.f32 %v780, %v848
  %850 = vmatmul.bf16.gmra.mxu0 %v437
  %v851 = vpop.f32.mrf.mxu0
  %v852 = vadd.f32 %v783, %v851
  %v853 = vpop.f32.mrf.mxu0
  %v854 = vadd.f32 %v785, %v853
  %855 = vmatmul.bf16.gmra.mxu0 %v440
  %v856 = vpop.f32.mrf.mxu0
  %v857 = vadd.f32 %v788, %v856
  %v858 = vpop.f32.mrf.mxu0
  %v859 = vadd.f32 %v790, %v858
  %860 = vmatmul.bf16.gmra.mxu0 %v443
  %v861 = vpop.f32.mrf.mxu0
  %v862 = vadd.f32 %v793, %v861
  %v863 = vpop.f32.mrf.mxu0
  %v864 = vadd.f32 %v795, %v863
  %865 = vmatmul.bf16.gmra.mxu0 %v446
  %v866 = vpop.f32.mrf.mxu0
  %v867 = vadd.f32 %v798, %v866
  %v868 = vpop.f32.mrf.mxu0
  %v869 = vadd.f32 %v800, %v868
  %870 = vmatmul.bf16.gmra.mxu0 %v449
  %v871 = vpop.f32.mrf.mxu0
  %v872 = vadd.f32 %v803, %v871
  %v873 = vpop.f32.mrf.mxu0
  %v874 = vadd.f32 %v805, %v873
  %875 = vmatmul.bf16.gmra.mxu0 %v452
  %v876 = vpop.f32.mrf.mxu0
  %v877 = vadd.f32 %v808, %v876
  %v878 = vpop.f32.mrf.mxu0
  %v879 = vadd.f32 %v810, %v878
  %880 = vdwg.mxu0
  %881 = vmatpush.bf16.msra.mxu0 %v364
  %882 = vmatpush.bf16.msra.mxu0 %v360
  %883 = vmatpush.bf16.msra.mxu0 %v356
  %884 = vmatpush.bf16.msra.mxu0 %v352
  %885 = vmatpush.bf16.msra.mxu0 %v348
  %886 = vmatpush.bf16.msra.mxu0 %v344
  %887 = vmatpush.bf16.msra.mxu0 %v340
  %888 = vmatpush.bf16.msra.mxu0 %v336
  %889 = vmatmul.bf16.gmra.mxu0 %v171
  %v890 = vpop.f32.mrf.mxu0
  %v891 = vadd.f32 0.0, %v890
  %v892 = vpop.f32.mrf.mxu0
  %v893 = vadd.f32 0.0, %v892
  %894 = vmatmul.bf16.gmra.mxu0 %v173
  %v895 = vpop.f32.mrf.mxu0
  %v896 = vadd.f32 0.0, %v895
  %v897 = vpop.f32.mrf.mxu0
  %v898 = vadd.f32 0.0, %v897
  %899 = vmatmul.bf16.gmra.mxu0 %v175
  %v900 = vpop.f32.mrf.mxu0
  %v901 = vadd.f32 0.0, %v900
  %v902 = vpop.f32.mrf.mxu0
  %v903 = vadd.f32 0.0, %v902
  %904 = vmatmul.bf16.gmra.mxu0 %v177
  %v905 = vpop.f32.mrf.mxu0
  %v906 = vadd.f32 0.0, %v905
  %v907 = vpop.f32.mrf.mxu0
  %v908 = vadd.f32 0.0, %v907
  %909 = vmatmul.bf16.gmra.mxu0 %v179
  %v910 = vpop.f32.mrf.mxu0
  %v911 = vadd.f32 0.0, %v910
  %v912 = vpop.f32.mrf.mxu0
  %v913 = vadd.f32 0.0, %v912
  %914 = vmatmul.bf16.gmra.mxu0 %v181
  %v915 = vpop.f32.mrf.mxu0
  %v916 = vadd.f32 0.0, %v915
  %v917 = vpop.f32.mrf.mxu0
  %v918 = vadd.f32 0.0, %v917
  %919 = vmatmul.bf16.gmra.mxu0 %v183
  %v920 = vpop.f32.mrf.mxu0
  %v921 = vadd.f32 0.0, %v920
  %v922 = vpop.f32.mrf.mxu0
  %v923 = vadd.f32 0.0, %v922
  %924 = vmatmul.bf16.gmra.mxu0 %v185
  %v925 = vpop.f32.mrf.mxu0
  %v926 = vadd.f32 0.0, %v925
  %v927 = vpop.f32.mrf.mxu0
  %v928 = vadd.f32 0.0, %v927
  %929 = vmatmul.bf16.gmra.mxu0 %v187
  %v930 = vpop.f32.mrf.mxu0
  %v931 = vadd.f32 0.0, %v930
  %v932 = vpop.f32.mrf.mxu0
  %v933 = vadd.f32 0.0, %v932
  %934 = vmatmul.bf16.gmra.mxu0 %v189
  %v935 = vpop.f32.mrf.mxu0
  %v936 = vadd.f32 0.0, %v935
  %v937 = vpop.f32.mrf.mxu0
  %v938 = vadd.f32 0.0, %v937
  %939 = vmatmul.bf16.gmra.mxu0 %v191
  %v940 = vpop.f32.mrf.mxu0
  %v941 = vadd.f32 0.0, %v940
  %v942 = vpop.f32.mrf.mxu0
  %v943 = vadd.f32 0.0, %v942
  %944 = vmatmul.bf16.gmra.mxu0 %v193
  %v945 = vpop.f32.mrf.mxu0
  %v946 = vadd.f32 0.0, %v945
  %v947 = vpop.f32.mrf.mxu0
  %v948 = vadd.f32 0.0, %v947
  %949 = vdwg.mxu0
  %950 = vmatpush.bf16.msra.mxu0 0
  %951 = vmatpush.bf16.msra.mxu0 0
  %952 = vmatpush.bf16.msra.mxu0 0
  %953 = vmatpush.bf16.msra.mxu0 0
  %954 = vmatpush.bf16.msra.mxu0 0
  %955 = vmatpush.bf16.msra.mxu0 %v465
  %956 = vmatpush.bf16.msra.mxu0 %v372
  %957 = vmatpush.bf16.msra.mxu0 %v368
  %958 = vmatmul.bf16.gmra.mxu0 %v419
  %v959 = vpop.f32.mrf.mxu0
  %v960 = vadd.f32 %v891, %v959
  %v961 = vpop.f32.mrf.mxu0
  %v962 = vadd.f32 %v893, %v961
  %963 = vmatmul.bf16.gmra.mxu0 %v422
  %v964 = vpop.f32.mrf.mxu0
  %v965 = vadd.f32 %v896, %v964
  %v966 = vpop.f32.mrf.mxu0
  %v967 = vadd.f32 %v898, %v966
  %968 = vmatmul.bf16.gmra.mxu0 %v425
  %v969 = vpop.f32.mrf.mxu0
  %v970 = vadd.f32 %v901, %v969
  %v971 = vpop.f32.mrf.mxu0
  %v972 = vadd.f32 %v903, %v971
  %973 = vmatmul.bf16.gmra.mxu0 %v428
  %v974 = vpop.f32.mrf.mxu0
  %v975 = vadd.f32 %v906, %v974
  %v976 = vpop.f32.mrf.mxu0
  %v977 = vadd.f32 %v908, %v976
  %978 = vmatmul.bf16.gmra.mxu0 %v431
  %v979 = vpop.f32.mrf.mxu0
  %v980 = vadd.f32 %v911, %v979
  %v981 = vpop.f32.mrf.mxu0
  %v982 = vadd.f32 %v913, %v981
  %983 = vmatmul.bf16.gmra.mxu0 %v434
  %v984 = vpop.f32.mrf.mxu0
  %v985 = vadd.f32 %v916, %v984
  %v986 = vpop.f32.mrf.mxu0
  %v987 = vadd.f32 %v918, %v986
  %988 = vmatmul.bf16.gmra.mxu0 %v437
  %v989 = vpop.f32.mrf.mxu0
  %v990 = vadd.f32 %v921, %v989
  %v991 = vpop.f32.mrf.mxu0
  %v992 = vadd.f32 %v923, %v991
  %993 = vmatmul.bf16.gmra.mxu0 %v440
  %v994 = vpop.f32.mrf.mxu0
  %v995 = vadd.f32 %v926, %v994
  %v996 = vpop.f32.mrf.mxu0
  %v997 = vadd.f32 %v928, %v996
  %998 = vmatmul.bf16.gmra.mxu0 %v443
  %v999 = vpop.f32.mrf.mxu0
  %v1000 = vadd.f32 %v931, %v999
  %v1001 = vpop.f32.mrf.mxu0
  %v1002 = vadd.f32 %v933, %v1001
  %1003 = vmatmul.bf16.gmra.mxu0 %v446
  %v1004 = vpop.f32.mrf.mxu0
  %v1005 = vadd.f32 %v936, %v1004
  %v1006 = vpop.f32.mrf.mxu0
  %v1007 = vadd.f32 %v938, %v1006
  %1008 = vmatmul.bf16.gmra.mxu0 %v449
  %v1009 = vpop.f32.mrf.mxu0
  %v1010 = vadd.f32 %v941, %v1009
  %v1011 = vpop.f32.mrf.mxu0
  %v1012 = vadd.f32 %v943, %v1011
  %1013 = vmatmul.bf16.gmra.mxu0 %v452
  %v1014 = vpop.f32.mrf.mxu0
  %v1015 = vadd.f32 %v946, %v1014
  %v1016 = vpop.f32.mrf.mxu0
  %v1017 = vadd.f32 %v948, %v1016
  %1018 = vdwg.mxu0
  %v1019 = vmax.f32 %v546, %v684
  %v1020 = vmax.f32 %v548, %v686
  %v1021 = vmax.f32 %v551, %v689
  %v1022 = vmax.f32 %v553, %v691
  %v1023 = vmax.f32 %v556, %v694
  %v1024 = vmax.f32 %v558, %v696
  %v1025 = vmax.f32 %v561, %v699
  %v1026 = vmax.f32 %v563, %v701
  %v1027 = vmax.f32 %v566, %v704
  %v1028 = vmax.f32 %v568, %v706
  %v1029 = vmax.f32 %v571, %v709
  %v1030 = vmax.f32 %v573, %v711
  %v1031 = vmax.f32 %v576, %v714
  %v1032 = vmax.f32 %v578, %v716
  %v1033 = vmax.f32 %v581, %v719
  %v1034 = vmax.f32 %v583, %v721
  %v1035 = vmax.f32 %v586, %v724
  %v1036 = vmax.f32 %v588, %v726
  %v1037 = vmax.f32 %v591, %v729
  %v1038 = vmax.f32 %v593, %v731
  %v1039 = vmax.f32 %v596, %v734
  %v1040 = vmax.f32 %v598, %v736
  %v1041 = vmax.f32 %v601, %v739
  %v1042 = vmax.f32 %v603, %v741
  %v1043 = vmax.f32 %v822, %v960
  %v1044 = vmax.f32 %v824, %v962
  %v1045 = vmax.f32 %v827, %v965
  %v1046 = vmax.f32 %v829, %v967
  %v1047 = vmax.f32 %v832, %v970
  %v1048 = vmax.f32 %v834, %v972
  %v1049 = vmax.f32 %v837, %v975
  %v1050 = vmax.f32 %v839, %v977
  %v1051 = vmax.f32 %v842, %v980
  %v1052 = vmax.f32 %v844, %v982
  %v1053 = vmax.f32 %v847, %v985
  %v1054 = vmax.f32 %v849, %v987
  %v1055 = vmax.f32 %v852, %v990
  %v1056 = vmax.f32 %v854, %v992
  %v1057 = vmax.f32 %v857, %v995
  %v1058 = vmax.f32 %v859, %v997
  %v1059 = vmax.f32 %v862, %v1000
  %v1060 = vmax.f32 %v864, %v1002
  %v1061 = vmax.f32 %v867, %v1005
  %v1062 = vmax.f32 %v869, %v1007
  %v1063 = vmax.f32 %v872, %v1010
  %v1064 = vmax.f32 %v874, %v1012
  %v1065 = vmax.f32 %v877, %v1015
  %v1066 = vmax.f32 %v879, %v1017
  %v1067 = vmax.f32 %v1019, %v1043
  %v1068 = vmax.f32 %v1020, %v1044
  %v1069 = vmax.f32 %v1021, %v1045
  %v1070 = vmax.f32 %v1022, %v1046
  %v1071 = vmax.f32 %v1023, %v1047
  %v1072 = vmax.f32 %v1024, %v1048
  %v1073 = vmax.f32 %v1025, %v1049
  %v1074 = vmax.f32 %v1026, %v1050
  %v1075 = vmax.f32 %v1027, %v1051
  %v1076 = vmax.f32 %v1028, %v1052
  %v1077 = vmax.f32 %v1029, %v1053
  %v1078 = vmax.f32 %v1030, %v1054
  %v1079 = vmax.f32 %v1031, %v1055
  %v1080 = vmax.f32 %v1032, %v1056
  %v1081 = vmax.f32 %v1033, %v1057
  %v1082 = vmax.f32 %v1034, %v1058
  %v1083 = vmax.f32 %v1035, %v1059
  %v1084 = vmax.f32 %v1036, %v1060
  %v1085 = vmax.f32 %v1037, %v1061
  %v1086 = vmax.f32 %v1038, %v1062
  %v1087 = vmax.f32 %v1039, %v1063
  %v1088 = vmax.f32 %v1040, %v1064
  %v1089 = vmax.f32 %v1041, %v1065
  %v1090 = vmax.f32 %v1042, %v1066
  %v1091 = vld [vmem:[%s2] sm:$0x1]
  %v1093 = vperm.slane %v1091, 0
  %v1095 = vadd.f32 %v1067, %v1093
  %v1096 = vadd.f32 %v1068, %v1093
  %v1097 = vadd.f32 %v1069, %v1093
  %v1098 = vadd.f32 %v1070, %v1093
  %v1099 = vadd.f32 %v1071, %v1093
  %v1100 = vadd.f32 %v1072, %v1093
  %v1101 = vadd.f32 %v1073, %v1093
  %v1102 = vadd.f32 %v1074, %v1093
  %v1103 = vadd.f32 %v1075, %v1093
  %v1104 = vadd.f32 %v1076, %v1093
  %v1105 = vadd.f32 %v1077, %v1093
  %v1106 = vadd.f32 %v1078, %v1093
  %v1107 = vadd.f32 %v1079, %v1093
  %v1108 = vadd.f32 %v1080, %v1093
  %v1109 = vadd.f32 %v1081, %v1093
  %v1110 = vadd.f32 %v1082, %v1093
  %v1111 = vadd.f32 %v1083, %v1093
  %v1112 = vadd.f32 %v1084, %v1093
  %v1113 = vadd.f32 %v1085, %v1093
  %v1114 = vadd.f32 %v1086, %v1093
  %v1115 = vadd.f32 %v1087, %v1093
  %v1116 = vadd.f32 %v1088, %v1093
  %v1117 = vadd.f32 %v1089, %v1093
  %v1118 = vadd.f32 %v1090, %v1093
  %v1119 = vmax.f32 %v1095, 0.0
  %v1120 = vmax.f32 %v1096, 0.0
  %v1121 = vmax.f32 %v1097, 0.0
  %v1122 = vmax.f32 %v1098, 0.0
  %v1123 = vmax.f32 %v1099, 0.0
  %v1124 = vmax.f32 %v1100, 0.0
  %v1125 = vmax.f32 %v1101, 0.0
  %v1126 = vmax.f32 %v1102, 0.0
  %v1127 = vmax.f32 %v1103, 0.0
  %v1128 = vmax.f32 %v1104, 0.0
  %v1129 = vmax.f32 %v1105, 0.0
  %v1130 = vmax.f32 %v1106, 0.0
  %v1131 = vmax.f32 %v1107, 0.0
  %v1132 = vmax.f32 %v1108, 0.0
  %v1133 = vmax.f32 %v1109, 0.0
  %v1134 = vmax.f32 %v1110, 0.0
  %v1135 = vmax.f32 %v1111, 0.0
  %v1136 = vmax.f32 %v1112, 0.0
  %v1137 = vmax.f32 %v1113, 0.0
  %v1138 = vmax.f32 %v1114, 0.0
  %v1139 = vmax.f32 %v1115, 0.0
  %v1140 = vmax.f32 %v1116, 0.0
  %v1141 = vmax.f32 %v1117, 0.0
  %v1142 = vmax.f32 %v1118, 0.0
  %v1143 = vpack.c.bf16 %v1119, %v1119
  %v1144 = vpack.c.bf16 %v1120, %v1120
  %v1145 = vpack.c.bf16 %v1121, %v1121
  %v1146 = vpack.c.bf16 %v1122, %v1122
  %v1147 = vpack.c.bf16 %v1123, %v1123
  %v1148 = vpack.c.bf16 %v1124, %v1124
  %v1149 = vpack.c.bf16 %v1125, %v1125
  %v1150 = vpack.c.bf16 %v1126, %v1126
  %v1151 = vpack.c.bf16 %v1127, %v1127
  %v1152 = vpack.c.bf16 %v1128, %v1128
  %v1153 = vpack.c.bf16 %v1129, %v1129
  %v1154 = vpack.c.bf16 %v1130, %v1130
  %v1155 = vpack.c.bf16 %v1131, %v1131
  %v1156 = vpack.c.bf16 %v1132, %v1132
  %v1157 = vpack.c.bf16 %v1133, %v1133
  %v1158 = vpack.c.bf16 %v1134, %v1134
  %v1159 = vpack.c.bf16 %v1135, %v1135
  %v1160 = vpack.c.bf16 %v1136, %v1136
  %v1161 = vpack.c.bf16 %v1137, %v1137
  %v1162 = vpack.c.bf16 %v1138, %v1138
  %v1163 = vpack.c.bf16 %v1139, %v1139
  %v1164 = vpack.c.bf16 %v1140, %v1140
  %v1165 = vpack.c.bf16 %v1141, %v1141
  %v1166 = vpack.c.bf16 %v1142, %v1142
  %v1175 = vunpack.c.l.b16 %v1143
  %v1176 = vunpack.c.l.b16 %v1144
  %v1177 = vunpack.c.l.b16 %v1145
  %v1178 = vunpack.c.l.b16 %v1146
  %v1179 = vunpack.c.l.b16 %v1147
  %v1180 = vunpack.c.l.b16 %v1148
  %v1181 = vunpack.c.l.b16 %v1149
  %v1182 = vunpack.c.l.b16 %v1150
  %v1183 = vpack.c.b16 %v1176, %v1175
  %v1184 = vpack.c.b16 %v1178, %v1177
  %v1185 = vpack.c.b16 %v1180, %v1179
  %v1186 = vpack.c.b16 %v1182, %v1181
  %v1199 = vunpack.c.l.b16 %v1155
  %v1200 = vunpack.c.l.b16 %v1156
  %v1201 = vunpack.c.l.b16 %v1157
  %v1202 = vunpack.c.l.b16 %v1158
  %v1203 = vunpack.c.l.b16 %v1159
  %v1204 = vunpack.c.l.b16 %v1160
  %v1205 = vunpack.c.l.b16 %v1161
  %v1206 = vunpack.c.l.b16 %v1162
  %v1207 = vpack.c.b16 %v1200, %v1199
  %v1208 = vpack.c.b16 %v1202, %v1201
  %v1209 = vpack.c.b16 %v1204, %v1203
  %v1210 = vpack.c.b16 %v1206, %v1205
  %v1217 = vunpack.c.l.b16 %v1151
  %v1218 = vunpack.c.l.b16 %v1152
  %v1219 = vpack.c.b16 %v1218, %v1217
  %v1223 = vunpack.c.l.b16 %v1163
  %v1224 = vunpack.c.l.b16 %v1164
  %v1225 = vpack.c.b16 %v1224, %v1223
  %v1229 = vunpack.c.l.b16 %v1153
  %v1230 = vunpack.c.l.b16 %v1154
  %v1231 = vpack.c.b16 %v1230, %v1229
  %v1235 = vunpack.c.l.b16 %v1165
  %v1236 = vunpack.c.l.b16 %v1166
  %v1237 = vpack.c.b16 %v1236, %v1235
  %v1239 = vld [vmem:[%s3] sm:$0xff]
  %v1240 = vld [vmem:[%s3 + $0x8] sm:$0xff]
  %v1241 = vld [vmem:[%s3 + $0x10] sm:$0xff]
  %v1242 = vld [vmem:[%s3 + $0x18] sm:$0xff]
  %v1243 = vld [vmem:[%s3 + $0x20] sm:$0xff]
  %v1244 = vld [vmem:[%s3 + $0x28] sm:$0xff]
  %v1245 = vld [vmem:[%s3 + $0x30] sm:$0xff]
  %v1246 = vld [vmem:[%s3 + $0x38] sm:$0xff]
  %v1247 = vld [vmem:[%s3 + $0x40] sm:$0xff]
  %v1248 = vld [vmem:[%s3 + $0x48] sm:$0xff]
  %v1249 = vld [vmem:[%s3 + $0x50] sm:$0xff]
  %v1250 = vld [vmem:[%s3 + $0x58] sm:$0xff]
  %v1251 = vld [vmem:[%s3 + $0x60] sm:$0xff]
  %v1252 = vld [vmem:[%s3 + $0x68] sm:$0xff]
  %v1253 = vld [vmem:[%s3 + $0x70] sm:$0xff]
  %v1254 = vld [vmem:[%s3 + $0x78] sm:$0xff]
  %v1255 = vld [vmem:[%s3 + $0x80] sm:$0xff]
  %v1256 = vld [vmem:[%s3 + $0x88] sm:$0xff]
  %v1257 = vld [vmem:[%s3 + $0x90] sm:$0xff]
  %v1258 = vld [vmem:[%s3 + $0x98] sm:$0xff]
  %v1259 = vld [vmem:[%s3 + $0xa0] sm:$0xff]
  %v1260 = vld [vmem:[%s3 + $0xa8] sm:$0xff]
  %v1261 = vld [vmem:[%s3 + $0xb0] sm:$0xff]
  %v1262 = vld [vmem:[%s3 + $0xb8] sm:$0xff]
  %v1263 = vld [vmem:[%s3 + $0xc0] sm:$0xff]
  %v1264 = vld [vmem:[%s3 + $0xc8] sm:$0xff]
  %v1265 = vld [vmem:[%s3 + $0xd0] sm:$0xff]
  %v1266 = vld [vmem:[%s3 + $0xd8] sm:$0xff]
  %v1267 = vld [vmem:[%s3 + $0xe0] sm:$0xff]
  %v1268 = vld [vmem:[%s3 + $0xe8] sm:$0xff]
  %v1269 = vld [vmem:[%s3 + $0xf0] sm:$0xff]
  %v1270 = vld [vmem:[%s3 + $0xf8] sm:$0xff]
  %v1271 = vld [vmem:[%s3 + $0x100] sm:$0xff]
  %v1272 = vld [vmem:[%s3 + $0x108] sm:$0xff]
  %v1273 = vld [vmem:[%s3 + $0x110] sm:$0xff]
  %v1274 = vld [vmem:[%s3 + $0x118] sm:$0xff]
  %v1275 = vld [vmem:[%s3 + $0x120] sm:$0xff]
  %v1276 = vld [vmem:[%s3 + $0x128] sm:$0xff]
  %v1277 = vld [vmem:[%s3 + $0x130] sm:$0xff]
  %v1278 = vld [vmem:[%s3 + $0x138] sm:$0xff]
  %v1279 = vld [vmem:[%s3 + $0x140] sm:$0xff]
  %v1280 = vld [vmem:[%s3 + $0x148] sm:$0xff]
  %v1281 = vld [vmem:[%s3 + $0x150] sm:$0xff]
  %v1282 = vld [vmem:[%s3 + $0x158] sm:$0xff]
  %v1283 = vld [vmem:[%s3 + $0x160] sm:$0xff]
  %v1284 = vld [vmem:[%s3 + $0x168] sm:$0xff]
  %v1285 = vld [vmem:[%s3 + $0x170] sm:$0xff]
  %v1286 = vld [vmem:[%s3 + $0x178] sm:$0xff]
  %v1287 = vld [vmem:[%s3 + $0x180] sm:$0xff]
  %v1288 = vld [vmem:[%s3 + $0x188] sm:$0xff]
  %v1289 = vld [vmem:[%s3 + $0x190] sm:$0xff]
  %v1290 = vld [vmem:[%s3 + $0x198] sm:$0xff]
  %v1291 = vld [vmem:[%s3 + $0x1a0] sm:$0xff]
  %v1292 = vld [vmem:[%s3 + $0x1a8] sm:$0xff]
  %v1293 = vld [vmem:[%s3 + $0x1b0] sm:$0xff]
  %v1294 = vld [vmem:[%s3 + $0x1b8] sm:$0xff]
  %v1295 = vld [vmem:[%s3 + $0x1c0] sm:$0xff]
  %v1296 = vld [vmem:[%s3 + $0x1c8] sm:$0xff]
  %v1297 = vld [vmem:[%s3 + $0x1d0] sm:$0xff]
  %v1298 = vld [vmem:[%s3 + $0x1d8] sm:$0xff]
  %v1299 = vld [vmem:[%s3 + $0x1e0] sm:$0xff]
  %v1300 = vld [vmem:[%s3 + $0x1e8] sm:$0xff]
  %v1301 = vld [vmem:[%s3 + $0x1f0] sm:$0xff]
  %v1302 = vld [vmem:[%s3 + $0x1f8] sm:$0xff]
  %v1303 = vld [vmem:[%s3 + $0x200] sm:$0xff]
  %v1304 = vld [vmem:[%s3 + $0x208] sm:$0xff]
  %v1305 = vld [vmem:[%s3 + $0x210] sm:$0xff]
  %v1306 = vld [vmem:[%s3 + $0x218] sm:$0xff]
  %v1307 = vld [vmem:[%s3 + $0x220] sm:$0xff]
  %v1308 = vld [vmem:[%s3 + $0x228] sm:$0xff]
  %v1309 = vld [vmem:[%s3 + $0x230] sm:$0xff]
  %v1310 = vld [vmem:[%s3 + $0x238] sm:$0xff]
  %v1311 = vld [vmem:[%s3 + $0x240] sm:$0xff]
  %v1312 = vld [vmem:[%s3 + $0x248] sm:$0xff]
  %v1313 = vld [vmem:[%s3 + $0x250] sm:$0xff]
  %v1314 = vld [vmem:[%s3 + $0x258] sm:$0xff]
  %v1315 = vld [vmem:[%s3 + $0x260] sm:$0xff]
  %v1316 = vld [vmem:[%s3 + $0x268] sm:$0xff]
  %v1317 = vld [vmem:[%s3 + $0x270] sm:$0xff]
  %v1318 = vld [vmem:[%s3 + $0x278] sm:$0xff]
  %v1319 = vld [vmem:[%s3 + $0x280] sm:$0xff]
  %v1320 = vld [vmem:[%s3 + $0x288] sm:$0xff]
  %v1321 = vld [vmem:[%s3 + $0x290] sm:$0xff]
  %v1322 = vld [vmem:[%s3 + $0x298] sm:$0xff]
  %v1323 = vld [vmem:[%s3 + $0x2a0] sm:$0xff]
  %v1324 = vld [vmem:[%s3 + $0x2a8] sm:$0xff]
  %v1325 = vld [vmem:[%s3 + $0x2b0] sm:$0xff]
  %v1326 = vld [vmem:[%s3 + $0x2b8] sm:$0xff]
  %v1327 = vld [vmem:[%s3 + $0x2c0] sm:$0xff]
  %v1328 = vld [vmem:[%s3 + $0x2c8] sm:$0xff]
  %v1329 = vld [vmem:[%s3 + $0x2d0] sm:$0xff]
  %v1330 = vld [vmem:[%s3 + $0x2d8] sm:$0xff]
  %v1331 = vld [vmem:[%s3 + $0x2e0] sm:$0xff]
  %v1332 = vld [vmem:[%s3 + $0x2e8] sm:$0xff]
  %v1333 = vld [vmem:[%s3 + $0x2f0] sm:$0xff]
  %v1334 = vld [vmem:[%s3 + $0x2f8] sm:$0xff]
  %v1335 = vld [vmem:[%s3 + $0x300] sm:$0xff]
  %v1336 = vld [vmem:[%s3 + $0x308] sm:$0xff]
  %v1337 = vld [vmem:[%s3 + $0x310] sm:$0xff]
  %v1338 = vld [vmem:[%s3 + $0x318] sm:$0xff]
  %v1339 = vld [vmem:[%s3 + $0x320] sm:$0xff]
  %v1340 = vld [vmem:[%s3 + $0x328] sm:$0xff]
  %v1341 = vld [vmem:[%s3 + $0x330] sm:$0xff]
  %v1342 = vld [vmem:[%s3 + $0x338] sm:$0xff]
  %v1343 = vld [vmem:[%s3 + $0x340] sm:$0xff]
  %v1344 = vld [vmem:[%s3 + $0x348] sm:$0xff]
  %v1345 = vld [vmem:[%s3 + $0x350] sm:$0xff]
  %v1346 = vld [vmem:[%s3 + $0x358] sm:$0xff]
  %v1347 = vld [vmem:[%s3 + $0x360] sm:$0xff]
  %v1348 = vld [vmem:[%s3 + $0x368] sm:$0xff]
  %v1349 = vld [vmem:[%s3 + $0x370] sm:$0xff]
  %v1350 = vld [vmem:[%s3 + $0x378] sm:$0xff]
  %v1351 = vld [vmem:[%s3 + $0x380] sm:$0xff]
  %v1352 = vld [vmem:[%s3 + $0x388] sm:$0xff]
  %v1353 = vld [vmem:[%s3 + $0x390] sm:$0xff]
  %v1354 = vld [vmem:[%s3 + $0x398] sm:$0xff]
  %v1355 = vld [vmem:[%s3 + $0x3a0] sm:$0xff]
  %v1356 = vld [vmem:[%s3 + $0x3a8] sm:$0xff]
  %v1357 = vld [vmem:[%s3 + $0x3b0] sm:$0xff]
  %v1358 = vld [vmem:[%s3 + $0x3b8] sm:$0xff]
  %v1359 = vld [vmem:[%s3 + $0x3c0] sm:$0xff]
  %v1360 = vld [vmem:[%s3 + $0x3c8] sm:$0xff]
  %v1361 = vld [vmem:[%s3 + $0x3d0] sm:$0xff]
  %v1362 = vld [vmem:[%s3 + $0x3d8] sm:$0xff]
  %v1363 = vld [vmem:[%s3 + $0x3e0] sm:$0xff]
  %v1364 = vld [vmem:[%s3 + $0x3e8] sm:$0xff]
  %v1365 = vld [vmem:[%s3 + $0x3f0] sm:$0xff]
  %v1366 = vld [vmem:[%s3 + $0x3f8] sm:$0xff]
  %v1367 = vld [vmem:[%s3 + $0x400] sm:$0xff]
  %v1368 = vld [vmem:[%s3 + $0x408] sm:$0xff]
  %v1369 = vld [vmem:[%s3 + $0x410] sm:$0xff]
  %v1370 = vld [vmem:[%s3 + $0x418] sm:$0xff]
  %v1371 = vld [vmem:[%s3 + $0x420] sm:$0xff]
  %v1372 = vld [vmem:[%s3 + $0x428] sm:$0xff]
  %v1373 = vld [vmem:[%s3 + $0x430] sm:$0xff]
  %v1374 = vld [vmem:[%s3 + $0x438] sm:$0xff]
  %v1375 = vld [vmem:[%s3 + $0x440] sm:$0xff]
  %v1376 = vld [vmem:[%s3 + $0x448] sm:$0xff]
  %v1377 = vld [vmem:[%s3 + $0x450] sm:$0xff]
  %v1378 = vld [vmem:[%s3 + $0x458] sm:$0xff]
  %v1379 = vld [vmem:[%s3 + $0x460] sm:$0xff]
  %v1380 = vld [vmem:[%s3 + $0x468] sm:$0xff]
  %v1381 = vld [vmem:[%s3 + $0x470] sm:$0xff]
  %v1382 = vld [vmem:[%s3 + $0x478] sm:$0xff]
  %v1383 = vld [vmem:[%s3 + $0x480] sm:$0xff]
  %v1384 = vld [vmem:[%s3 + $0x488] sm:$0xff]
  %v1385 = vld [vmem:[%s3 + $0x490] sm:$0xff]
  %v1386 = vld [vmem:[%s3 + $0x498] sm:$0xff]
  %v1387 = vld [vmem:[%s3 + $0x4a0] sm:$0xff]
  %v1388 = vld [vmem:[%s3 + $0x4a8] sm:$0xff]
  %v1389 = vld [vmem:[%s3 + $0x4b0] sm:$0xff]
  %v1390 = vld [vmem:[%s3 + $0x4b8] sm:$0xff]
  %v1391 = vld [vmem:[%s3 + $0x4c0] sm:$0xff]
  %v1392 = vld [vmem:[%s3 + $0x4c8] sm:$0xff]
  %v1393 = vld [vmem:[%s3 + $0x4d0] sm:$0xff]
  %v1394 = vld [vmem:[%s3 + $0x4d8] sm:$0xff]
  %v1395 = vld [vmem:[%s3 + $0x4e0] sm:$0xff]
  %v1396 = vld [vmem:[%s3 + $0x4e8] sm:$0xff]
  %v1397 = vld [vmem:[%s3 + $0x4f0] sm:$0xff]
  %v1398 = vld [vmem:[%s3 + $0x4f8] sm:$0xff]
  %v1399 = vld [vmem:[%s3 + $0x500] sm:$0xff]
  %v1400 = vld [vmem:[%s3 + $0x508] sm:$0xff]
  %v1401 = vld [vmem:[%s3 + $0x510] sm:$0xff]
  %v1402 = vld [vmem:[%s3 + $0x518] sm:$0xff]
  %v1403 = vld [vmem:[%s3 + $0x520] sm:$0xff]
  %v1404 = vld [vmem:[%s3 + $0x528] sm:$0xff]
  %v1405 = vld [vmem:[%s3 + $0x530] sm:$0xff]
  %v1406 = vld [vmem:[%s3 + $0x538] sm:$0xff]
  %v1407 = vld [vmem:[%s3 + $0x540] sm:$0xff]
  %v1408 = vld [vmem:[%s3 + $0x548] sm:$0xff]
  %v1409 = vld [vmem:[%s3 + $0x550] sm:$0xff]
  %v1410 = vld [vmem:[%s3 + $0x558] sm:$0xff]
  %v1411 = vld [vmem:[%s3 + $0x560] sm:$0xff]
  %v1412 = vld [vmem:[%s3 + $0x568] sm:$0xff]
  %v1413 = vld [vmem:[%s3 + $0x570] sm:$0xff]
  %v1414 = vld [vmem:[%s3 + $0x578] sm:$0xff]
  %v1415 = vld [vmem:[%s3 + $0x580] sm:$0xff]
  %v1416 = vld [vmem:[%s3 + $0x588] sm:$0xff]
  %v1417 = vld [vmem:[%s3 + $0x590] sm:$0xff]
  %v1418 = vld [vmem:[%s3 + $0x598] sm:$0xff]
  %v1419 = vld [vmem:[%s3 + $0x5a0] sm:$0xff]
  %v1420 = vld [vmem:[%s3 + $0x5a8] sm:$0xff]
  %v1421 = vld [vmem:[%s3 + $0x5b0] sm:$0xff]
  %v1422 = vld [vmem:[%s3 + $0x5b8] sm:$0xff]
  %v1423 = vld [vmem:[%s3 + $0x5c0] sm:$0xff]
  %v1424 = vld [vmem:[%s3 + $0x5c8] sm:$0xff]
  %v1425 = vld [vmem:[%s3 + $0x5d0] sm:$0xff]
  %v1426 = vld [vmem:[%s3 + $0x5d8] sm:$0xff]
  %v1427 = vld [vmem:[%s3 + $0x5e0] sm:$0xff]
  %v1428 = vld [vmem:[%s3 + $0x5e8] sm:$0xff]
  %v1429 = vld [vmem:[%s3 + $0x5f0] sm:$0xff]
  %v1430 = vld [vmem:[%s3 + $0x5f8] sm:$0xff]
  %v1623 = vunpack.c.l.b16 %v1239
  %v1624 = vunpack.c.h.b16 %v1239
  %v1625 = vunpack.c.l.b16 %v1240
  %v1626 = vunpack.c.h.b16 %v1240
  %v1627 = vunpack.c.l.b16 %v1241
  %v1628 = vunpack.c.h.b16 %v1241
  %v1629 = vunpack.c.l.b16 %v1242
  %v1630 = vunpack.c.h.b16 %v1242
  %v1631 = vunpack.c.l.b16 %v1243
  %v1632 = vunpack.c.h.b16 %v1243
  %v1633 = vunpack.c.l.b16 %v1244
  %v1634 = vunpack.c.h.b16 %v1244
  %v1635 = vunpack.c.l.b16 %v1245
  %v1636 = vunpack.c.h.b16 %v1245
  %v1637 = vunpack.c.l.b16 %v1246
  %v1638 = vunpack.c.h.b16 %v1246
  %v1639 = vunpack.c.l.b16 %v1247
  %v1640 = vunpack.c.h.b16 %v1247
  %v1641 = vunpack.c.l.b16 %v1248
  %v1642 = vunpack.c.h.b16 %v1248
  %v1643 = vunpack.c.l.b16 %v1249
  %v1644 = vunpack.c.h.b16 %v1249
  %v1645 = vunpack.c.l.b16 %v1250
  %v1646 = vunpack.c.h.b16 %v1250
  %v1647 = vunpack.c.l.b16 %v1251
  %v1648 = vunpack.c.h.b16 %v1251
  %v1649 = vunpack.c.l.b16 %v1252
  %v1650 = vunpack.c.h.b16 %v1252
  %v1651 = vunpack.c.l.b16 %v1253
  %v1652 = vunpack.c.h.b16 %v1253
  %v1653 = vunpack.c.l.b16 %v1254
  %v1654 = vunpack.c.h.b16 %v1254
  %v1655 = vunpack.c.l.b16 %v1255
  %v1656 = vunpack.c.h.b16 %v1255
  %v1657 = vunpack.c.l.b16 %v1256
  %v1658 = vunpack.c.h.b16 %v1256
  %v1659 = vunpack.c.l.b16 %v1257
  %v1660 = vunpack.c.h.b16 %v1257
  %v1661 = vunpack.c.l.b16 %v1258
  %v1662 = vunpack.c.h.b16 %v1258
  %v1663 = vunpack.c.l.b16 %v1259
  %v1664 = vunpack.c.h.b16 %v1259
  %v1665 = vunpack.c.l.b16 %v1260
  %v1666 = vunpack.c.h.b16 %v1260
  %v1667 = vunpack.c.l.b16 %v1261
  %v1668 = vunpack.c.h.b16 %v1261
  %v1669 = vunpack.c.l.b16 %v1262
  %v1670 = vunpack.c.h.b16 %v1262
  %v1671 = vunpack.c.l.b16 %v1263
  %v1672 = vunpack.c.h.b16 %v1263
  %v1673 = vunpack.c.l.b16 %v1264
  %v1674 = vunpack.c.h.b16 %v1264
  %v1675 = vunpack.c.l.b16 %v1265
  %v1676 = vunpack.c.h.b16 %v1265
  %v1677 = vunpack.c.l.b16 %v1266
  %v1678 = vunpack.c.h.b16 %v1266
  %v1679 = vunpack.c.l.b16 %v1267
  %v1680 = vunpack.c.h.b16 %v1267
  %v1681 = vunpack.c.l.b16 %v1268
  %v1682 = vunpack.c.h.b16 %v1268
  %v1683 = vunpack.c.l.b16 %v1269
  %v1684 = vunpack.c.h.b16 %v1269
  %v1685 = vunpack.c.l.b16 %v1270
  %v1686 = vunpack.c.h.b16 %v1270
  %v1687 = vunpack.c.l.b16 %v1271
  %v1688 = vunpack.c.h.b16 %v1271
  %v1689 = vunpack.c.l.b16 %v1272
  %v1690 = vunpack.c.h.b16 %v1272
  %v1691 = vunpack.c.l.b16 %v1273
  %v1692 = vunpack.c.h.b16 %v1273
  %v1693 = vunpack.c.l.b16 %v1274
  %v1694 = vunpack.c.h.b16 %v1274
  %v1695 = vunpack.c.l.b16 %v1275
  %v1696 = vunpack.c.h.b16 %v1275
  %v1697 = vunpack.c.l.b16 %v1276
  %v1698 = vunpack.c.h.b16 %v1276
  %v1699 = vunpack.c.l.b16 %v1277
  %v1700 = vunpack.c.h.b16 %v1277
  %v1701 = vunpack.c.l.b16 %v1278
  %v1702 = vunpack.c.h.b16 %v1278
  %v1703 = vunpack.c.l.b16 %v1279
  %v1704 = vunpack.c.h.b16 %v1279
  %v1705 = vunpack.c.l.b16 %v1280
  %v1706 = vunpack.c.h.b16 %v1280
  %v1707 = vunpack.c.l.b16 %v1281
  %v1708 = vunpack.c.h.b16 %v1281
  %v1709 = vunpack.c.l.b16 %v1282
  %v1710 = vunpack.c.h.b16 %v1282
  %v1711 = vunpack.c.l.b16 %v1283
  %v1712 = vunpack.c.h.b16 %v1283
  %v1713 = vunpack.c.l.b16 %v1284
  %v1714 = vunpack.c.h.b16 %v1284
  %v1715 = vunpack.c.l.b16 %v1285
  %v1716 = vunpack.c.h.b16 %v1285
  %v1717 = vunpack.c.l.b16 %v1286
  %v1718 = vunpack.c.h.b16 %v1286
  %v1719 = vunpack.c.l.b16 %v1287
  %v1720 = vunpack.c.h.b16 %v1287
  %v1721 = vunpack.c.l.b16 %v1288
  %v1722 = vunpack.c.h.b16 %v1288
  %v1723 = vunpack.c.l.b16 %v1289
  %v1724 = vunpack.c.h.b16 %v1289
  %v1725 = vunpack.c.l.b16 %v1290
  %v1726 = vunpack.c.h.b16 %v1290
  %v1727 = vunpack.c.l.b16 %v1291
  %v1728 = vunpack.c.h.b16 %v1291
  %v1729 = vunpack.c.l.b16 %v1292
  %v1730 = vunpack.c.h.b16 %v1292
  %v1731 = vunpack.c.l.b16 %v1293
  %v1732 = vunpack.c.h.b16 %v1293
  %v1733 = vunpack.c.l.b16 %v1294
  %v1734 = vunpack.c.h.b16 %v1294
  %v1735 = vunpack.c.l.b16 %v1295
  %v1736 = vunpack.c.h.b16 %v1295
  %v1737 = vunpack.c.l.b16 %v1296
  %v1738 = vunpack.c.h.b16 %v1296
  %v1739 = vunpack.c.l.b16 %v1297
  %v1740 = vunpack.c.h.b16 %v1297
  %v1741 = vunpack.c.l.b16 %v1298
  %v1742 = vunpack.c.h.b16 %v1298
  %v1743 = vunpack.c.l.b16 %v1299
  %v1744 = vunpack.c.h.b16 %v1299
  %v1745 = vunpack.c.l.b16 %v1300
  %v1746 = vunpack.c.h.b16 %v1300
  %v1747 = vunpack.c.l.b16 %v1301
  %v1748 = vunpack.c.h.b16 %v1301
  %v1749 = vunpack.c.l.b16 %v1302
  %v1750 = vunpack.c.h.b16 %v1302
  %v1751 = vunpack.c.l.b16 %v1303
  %v1752 = vunpack.c.h.b16 %v1303
  %v1753 = vunpack.c.l.b16 %v1304
  %v1754 = vunpack.c.h.b16 %v1304
  %v1755 = vunpack.c.l.b16 %v1305
  %v1756 = vunpack.c.h.b16 %v1305
  %v1757 = vunpack.c.l.b16 %v1306
  %v1758 = vunpack.c.h.b16 %v1306
  %v1759 = vunpack.c.l.b16 %v1307
  %v1760 = vunpack.c.h.b16 %v1307
  %v1761 = vunpack.c.l.b16 %v1308
  %v1762 = vunpack.c.h.b16 %v1308
  %v1763 = vunpack.c.l.b16 %v1309
  %v1764 = vunpack.c.h.b16 %v1309
  %v1765 = vunpack.c.l.b16 %v1310
  %v1766 = vunpack.c.h.b16 %v1310
  %v1767 = vunpack.c.l.b16 %v1311
  %v1768 = vunpack.c.h.b16 %v1311
  %v1769 = vunpack.c.l.b16 %v1312
  %v1770 = vunpack.c.h.b16 %v1312
  %v1771 = vunpack.c.l.b16 %v1313
  %v1772 = vunpack.c.h.b16 %v1313
  %v1773 = vunpack.c.l.b16 %v1314
  %v1774 = vunpack.c.h.b16 %v1314
  %v1775 = vunpack.c.l.b16 %v1315
  %v1776 = vunpack.c.h.b16 %v1315
  %v1777 = vunpack.c.l.b16 %v1316
  %v1778 = vunpack.c.h.b16 %v1316
  %v1779 = vunpack.c.l.b16 %v1317
  %v1780 = vunpack.c.h.b16 %v1317
  %v1781 = vunpack.c.l.b16 %v1318
  %v1782 = vunpack.c.h.b16 %v1318
  %v1783 = vunpack.c.l.b16 %v1319
  %v1784 = vunpack.c.h.b16 %v1319
  %v1785 = vunpack.c.l.b16 %v1320
  %v1786 = vunpack.c.h.b16 %v1320
  %v1787 = vunpack.c.l.b16 %v1321
  %v1788 = vunpack.c.h.b16 %v1321
  %v1789 = vunpack.c.l.b16 %v1322
  %v1790 = vunpack.c.h.b16 %v1322
  %v1791 = vunpack.c.l.b16 %v1323
  %v1792 = vunpack.c.h.b16 %v1323
  %v1793 = vunpack.c.l.b16 %v1324
  %v1794 = vunpack.c.h.b16 %v1324
  %v1795 = vunpack.c.l.b16 %v1325
  %v1796 = vunpack.c.h.b16 %v1325
  %v1797 = vunpack.c.l.b16 %v1326
  %v1798 = vunpack.c.h.b16 %v1326
  %v1799 = vunpack.c.l.b16 %v1327
  %v1800 = vunpack.c.h.b16 %v1327
  %v1801 = vunpack.c.l.b16 %v1328
  %v1802 = vunpack.c.h.b16 %v1328
  %v1803 = vunpack.c.l.b16 %v1329
  %v1804 = vunpack.c.h.b16 %v1329
  %v1805 = vunpack.c.l.b16 %v1330
  %v1806 = vunpack.c.h.b16 %v1330
  %v1807 = vunpack.c.l.b16 %v1331
  %v1808 = vunpack.c.h.b16 %v1331
  %v1809 = vunpack.c.l.b16 %v1332
  %v1810 = vunpack.c.h.b16 %v1332
  %v1811 = vunpack.c.l.b16 %v1333
  %v1812 = vunpack.c.h.b16 %v1333
  %v1813 = vunpack.c.l.b16 %v1334
  %v1814 = vunpack.c.h.b16 %v1334
  %v1815 = vunpack.c.l.b16 %v1335
  %v1816 = vunpack.c.h.b16 %v1335
  %v1817 = vunpack.c.l.b16 %v1336
  %v1818 = vunpack.c.h.b16 %v1336
  %v1819 = vunpack.c.l.b16 %v1337
  %v1820 = vunpack.c.h.b16 %v1337
  %v1821 = vunpack.c.l.b16 %v1338
  %v1822 = vunpack.c.h.b16 %v1338
  %v1823 = vunpack.c.l.b16 %v1339
  %v1824 = vunpack.c.h.b16 %v1339
  %v1825 = vunpack.c.l.b16 %v1340
  %v1826 = vunpack.c.h.b16 %v1340
  %v1827 = vunpack.c.l.b16 %v1341
  %v1828 = vunpack.c.h.b16 %v1341
  %v1829 = vunpack.c.l.b16 %v1342
  %v1830 = vunpack.c.h.b16 %v1342
  %v1831 = vunpack.c.l.b16 %v1343
  %v1832 = vunpack.c.h.b16 %v1343
  %v1833 = vunpack.c.l.b16 %v1344
  %v1834 = vunpack.c.h.b16 %v1344
  %v1835 = vunpack.c.l.b16 %v1345
  %v1836 = vunpack.c.h.b16 %v1345
  %v1837 = vunpack.c.l.b16 %v1346
  %v1838 = vunpack.c.h.b16 %v1346
  %v1839 = vunpack.c.l.b16 %v1347
  %v1840 = vunpack.c.h.b16 %v1347
  %v1841 = vunpack.c.l.b16 %v1348
  %v1842 = vunpack.c.h.b16 %v1348
  %v1843 = vunpack.c.l.b16 %v1349
  %v1844 = vunpack.c.h.b16 %v1349
  %v1845 = vunpack.c.l.b16 %v1350
  %v1846 = vunpack.c.h.b16 %v1350
  %v1847 = vunpack.c.l.b16 %v1351
  %v1848 = vunpack.c.h.b16 %v1351
  %v1849 = vunpack.c.l.b16 %v1352
  %v1850 = vunpack.c.h.b16 %v1352
  %v1851 = vunpack.c.l.b16 %v1353
  %v1852 = vunpack.c.h.b16 %v1353
  %v1853 = vunpack.c.l.b16 %v1354
  %v1854 = vunpack.c.h.b16 %v1354
  %v1855 = vunpack.c.l.b16 %v1355
  %v1856 = vunpack.c.h.b16 %v1355
  %v1857 = vunpack.c.l.b16 %v1356
  %v1858 = vunpack.c.h.b16 %v1356
  %v1859 = vunpack.c.l.b16 %v1357
  %v1860 = vunpack.c.h.b16 %v1357
  %v1861 = vunpack.c.l.b16 %v1358
  %v1862 = vunpack.c.h.b16 %v1358
  %v1863 = vunpack.c.l.b16 %v1359
  %v1864 = vunpack.c.h.b16 %v1359
  %v1865 = vunpack.c.l.b16 %v1360
  %v1866 = vunpack.c.h.b16 %v1360
  %v1867 = vunpack.c.l.b16 %v1361
  %v1868 = vunpack.c.h.b16 %v1361
  %v1869 = vunpack.c.l.b16 %v1362
  %v1870 = vunpack.c.h.b16 %v1362
  %v1871 = vunpack.c.l.b16 %v1363
  %v1872 = vunpack.c.h.b16 %v1363
  %v1873 = vunpack.c.l.b16 %v1364
  %v1874 = vunpack.c.h.b16 %v1364
  %v1875 = vunpack.c.l.b16 %v1365
  %v1876 = vunpack.c.h.b16 %v1365
  %v1877 = vunpack.c.l.b16 %v1366
  %v1878 = vunpack.c.h.b16 %v1366
  %v1879 = vunpack.c.l.b16 %v1367
  %v1880 = vunpack.c.h.b16 %v1367
  %v1881 = vunpack.c.l.b16 %v1368
  %v1882 = vunpack.c.h.b16 %v1368
  %v1883 = vunpack.c.l.b16 %v1369
  %v1884 = vunpack.c.h.b16 %v1369
  %v1885 = vunpack.c.l.b16 %v1370
  %v1886 = vunpack.c.h.b16 %v1370
  %v1887 = vunpack.c.l.b16 %v1371
  %v1888 = vunpack.c.h.b16 %v1371
  %v1889 = vunpack.c.l.b16 %v1372
  %v1890 = vunpack.c.h.b16 %v1372
  %v1891 = vunpack.c.l.b16 %v1373
  %v1892 = vunpack.c.h.b16 %v1373
  %v1893 = vunpack.c.l.b16 %v1374
  %v1894 = vunpack.c.h.b16 %v1374
  %v1895 = vunpack.c.l.b16 %v1375
  %v1896 = vunpack.c.h.b16 %v1375
  %v1897 = vunpack.c.l.b16 %v1376
  %v1898 = vunpack.c.h.b16 %v1376
  %v1899 = vunpack.c.l.b16 %v1377
  %v1900 = vunpack.c.h.b16 %v1377
  %v1901 = vunpack.c.l.b16 %v1378
  %v1902 = vunpack.c.h.b16 %v1378
  %v1903 = vunpack.c.l.b16 %v1379
  %v1904 = vunpack.c.h.b16 %v1379
  %v1905 = vunpack.c.l.b16 %v1380
  %v1906 = vunpack.c.h.b16 %v1380
  %v1907 = vunpack.c.l.b16 %v1381
  %v1908 = vunpack.c.h.b16 %v1381
  %v1909 = vunpack.c.l.b16 %v1382
  %v1910 = vunpack.c.h.b16 %v1382
  %v1911 = vunpack.c.l.b16 %v1383
  %v1912 = vunpack.c.h.b16 %v1383
  %v1913 = vunpack.c.l.b16 %v1384
  %v1914 = vunpack.c.h.b16 %v1384
  %v1915 = vunpack.c.l.b16 %v1385
  %v1916 = vunpack.c.h.b16 %v1385
  %v1917 = vunpack.c.l.b16 %v1386
  %v1918 = vunpack.c.h.b16 %v1386
  %v1919 = vunpack.c.l.b16 %v1387
  %v1920 = vunpack.c.h.b16 %v1387
  %v1921 = vunpack.c.l.b16 %v1388
  %v1922 = vunpack.c.h.b16 %v1388
  %v1923 = vunpack.c.l.b16 %v1389
  %v1924 = vunpack.c.h.b16 %v1389
  %v1925 = vunpack.c.l.b16 %v1390
  %v1926 = vunpack.c.h.b16 %v1390
  %v1927 = vunpack.c.l.b16 %v1391
  %v1928 = vunpack.c.h.b16 %v1391
  %v1929 = vunpack.c.l.b16 %v1392
  %v1930 = vunpack.c.h.b16 %v1392
  %v1931 = vunpack.c.l.b16 %v1393
  %v1932 = vunpack.c.h.b16 %v1393
  %v1933 = vunpack.c.l.b16 %v1394
  %v1934 = vunpack.c.h.b16 %v1394
  %v1935 = vunpack.c.l.b16 %v1395
  %v1936 = vunpack.c.h.b16 %v1395
  %v1937 = vunpack.c.l.b16 %v1396
  %v1938 = vunpack.c.h.b16 %v1396
  %v1939 = vunpack.c.l.b16 %v1397
  %v1940 = vunpack.c.h.b16 %v1397
  %v1941 = vunpack.c.l.b16 %v1398
  %v1942 = vunpack.c.h.b16 %v1398
  %v1943 = vunpack.c.l.b16 %v1399
  %v1944 = vunpack.c.h.b16 %v1399
  %v1945 = vunpack.c.l.b16 %v1400
  %v1946 = vunpack.c.h.b16 %v1400
  %v1947 = vunpack.c.l.b16 %v1401
  %v1948 = vunpack.c.h.b16 %v1401
  %v1949 = vunpack.c.l.b16 %v1402
  %v1950 = vunpack.c.h.b16 %v1402
  %v1951 = vunpack.c.l.b16 %v1403
  %v1952 = vunpack.c.h.b16 %v1403
  %v1953 = vunpack.c.l.b16 %v1404
  %v1954 = vunpack.c.h.b16 %v1404
  %v1955 = vunpack.c.l.b16 %v1405
  %v1956 = vunpack.c.h.b16 %v1405
  %v1957 = vunpack.c.l.b16 %v1406
  %v1958 = vunpack.c.h.b16 %v1406
  %v1959 = vunpack.c.l.b16 %v1407
  %v1960 = vunpack.c.h.b16 %v1407
  %v1961 = vunpack.c.l.b16 %v1408
  %v1962 = vunpack.c.h.b16 %v1408
  %v1963 = vunpack.c.l.b16 %v1409
  %v1964 = vunpack.c.h.b16 %v1409
  %v1965 = vunpack.c.l.b16 %v1410
  %v1966 = vunpack.c.h.b16 %v1410
  %v1967 = vunpack.c.l.b16 %v1411
  %v1968 = vunpack.c.h.b16 %v1411
  %v1969 = vunpack.c.l.b16 %v1412
  %v1970 = vunpack.c.h.b16 %v1412
  %v1971 = vunpack.c.l.b16 %v1413
  %v1972 = vunpack.c.h.b16 %v1413
  %v1973 = vunpack.c.l.b16 %v1414
  %v1974 = vunpack.c.h.b16 %v1414
  %v1975 = vunpack.c.l.b16 %v1415
  %v1976 = vunpack.c.h.b16 %v1415
  %v1977 = vunpack.c.l.b16 %v1416
  %v1978 = vunpack.c.h.b16 %v1416
  %v1979 = vunpack.c.l.b16 %v1417
  %v1980 = vunpack.c.h.b16 %v1417
  %v1981 = vunpack.c.l.b16 %v1418
  %v1982 = vunpack.c.h.b16 %v1418
  %v1983 = vunpack.c.l.b16 %v1419
  %v1984 = vunpack.c.h.b16 %v1419
  %v1985 = vunpack.c.l.b16 %v1420
  %v1986 = vunpack.c.h.b16 %v1420
  %v1987 = vunpack.c.l.b16 %v1421
  %v1988 = vunpack.c.h.b16 %v1421
  %v1989 = vunpack.c.l.b16 %v1422
  %v1990 = vunpack.c.h.b16 %v1422
  %v1991 = vunpack.c.l.b16 %v1423
  %v1992 = vunpack.c.h.b16 %v1423
  %v1993 = vunpack.c.l.b16 %v1424
  %v1994 = vunpack.c.h.b16 %v1424
  %v1995 = vunpack.c.l.b16 %v1425
  %v1996 = vunpack.c.h.b16 %v1425
  %v1997 = vunpack.c.l.b16 %v1426
  %v1998 = vunpack.c.h.b16 %v1426
  %v1999 = vunpack.c.l.b16 %v1427
  %v2000 = vunpack.c.h.b16 %v1427
  %v2001 = vunpack.c.l.b16 %v1428
  %v2002 = vunpack.c.h.b16 %v1428
  %v2003 = vunpack.c.l.b16 %v1429
  %v2004 = vunpack.c.h.b16 %v1429
  %v2005 = vunpack.c.l.b16 %v1430
  %v2006 = vunpack.c.h.b16 %v1430
  %v2007 = vpack.c.b16 %v1627, %v1623
  %v2008 = vpack.c.b16 %v1628, %v1624
  %v2009 = vpack.c.b16 %v1629, %v1625
  %v2010 = vpack.c.b16 %v1630, %v1626
  %v2011 = vpack.c.b16 %v1635, %v1631
  %v2012 = vpack.c.b16 %v1636, %v1632
  %v2013 = vpack.c.b16 %v1637, %v1633
  %v2014 = vpack.c.b16 %v1638, %v1634
  %v2015 = vpack.c.b16 %v1643, %v1639
  %v2016 = vpack.c.b16 %v1644, %v1640
  %v2017 = vpack.c.b16 %v1645, %v1641
  %v2018 = vpack.c.b16 %v1646, %v1642
  %v2019 = vpack.c.b16 %v1651, %v1647
  %v2020 = vpack.c.b16 %v1652, %v1648
  %v2021 = vpack.c.b16 %v1653, %v1649
  %v2022 = vpack.c.b16 %v1654, %v1650
  %v2023 = vpack.c.b16 %v1659, %v1655
  %v2024 = vpack.c.b16 %v1660, %v1656
  %v2025 = vpack.c.b16 %v1661, %v1657
  %v2026 = vpack.c.b16 %v1662, %v1658
  %v2027 = vpack.c.b16 %v1667, %v1663
  %v2028 = vpack.c.b16 %v1668, %v1664
  %v2029 = vpack.c.b16 %v1669, %v1665
  %v2030 = vpack.c.b16 %v1670, %v1666
  %v2031 = vpack.c.b16 %v1675, %v1671
  %v2032 = vpack.c.b16 %v1676, %v1672
  %v2033 = vpack.c.b16 %v1677, %v1673
  %v2034 = vpack.c.b16 %v1678, %v1674
  %v2035 = vpack.c.b16 %v1683, %v1679
  %v2036 = vpack.c.b16 %v1684, %v1680
  %v2037 = vpack.c.b16 %v1685, %v1681
  %v2038 = vpack.c.b16 %v1686, %v1682
  %v2039 = vpack.c.b16 %v1691, %v1687
  %v2040 = vpack.c.b16 %v1692, %v1688
  %v2041 = vpack.c.b16 %v1693, %v1689
  %v2042 = vpack.c.b16 %v1694, %v1690
  %v2043 = vpack.c.b16 %v1699, %v1695
  %v2044 = vpack.c.b16 %v1700, %v1696
  %v2045 = vpack.c.b16 %v1701, %v1697
  %v2046 = vpack.c.b16 %v1702, %v1698
  %v2047 = vpack.c.b16 %v1707, %v1703
  %v2048 = vpack.c.b16 %v1708, %v1704
  %v2049 = vpack.c.b16 %v1709, %v1705
  %v2050 = vpack.c.b16 %v1710, %v1706
  %v2051 = vpack.c.b16 %v1715, %v1711
  %v2052 = vpack.c.b16 %v1716, %v1712
  %v2053 = vpack.c.b16 %v1717, %v1713
  %v2054 = vpack.c.b16 %v1718, %v1714
  %v2055 = vpack.c.b16 %v1723, %v1719
  %v2056 = vpack.c.b16 %v1724, %v1720
  %v2057 = vpack.c.b16 %v1725, %v1721
  %v2058 = vpack.c.b16 %v1726, %v1722
  %v2059 = vpack.c.b16 %v1731, %v1727
  %v2060 = vpack.c.b16 %v1732, %v1728
  %v2061 = vpack.c.b16 %v1733, %v1729
  %v2062 = vpack.c.b16 %v1734, %v1730
  %v2063 = vpack.c.b16 %v1739, %v1735
  %v2064 = vpack.c.b16 %v1740, %v1736
  %v2065 = vpack.c.b16 %v1741, %v1737
  %v2066 = vpack.c.b16 %v1742, %v1738
  %v2067 = vpack.c.b16 %v1747, %v1743
  %v2068 = vpack.c.b16 %v1748, %v1744
  %v2069 = vpack.c.b16 %v1749, %v1745
  %v2070 = vpack.c.b16 %v1750, %v1746
  %v2071 = vpack.c.b16 %v1755, %v1751
  %v2072 = vpack.c.b16 %v1756, %v1752
  %v2073 = vpack.c.b16 %v1757, %v1753
  %v2074 = vpack.c.b16 %v1758, %v1754
  %v2075 = vpack.c.b16 %v1763, %v1759
  %v2076 = vpack.c.b16 %v1764, %v1760
  %v2077 = vpack.c.b16 %v1765, %v1761
  %v2078 = vpack.c.b16 %v1766, %v1762
  %v2079 = vpack.c.b16 %v1771, %v1767
  %v2080 = vpack.c.b16 %v1772, %v1768
  %v2081 = vpack.c.b16 %v1773, %v1769
  %v2082 = vpack.c.b16 %v1774, %v1770
  %v2083 = vpack.c.b16 %v1779, %v1775
  %v2084 = vpack.c.b16 %v1780, %v1776
  %v2085 = vpack.c.b16 %v1781, %v1777
  %v2086 = vpack.c.b16 %v1782, %v1778
  %v2087 = vpack.c.b16 %v1787, %v1783
  %v2088 = vpack.c.b16 %v1788, %v1784
  %v2089 = vpack.c.b16 %v1789, %v1785
  %v2090 = vpack.c.b16 %v1790, %v1786
  %v2091 = vpack.c.b16 %v1795, %v1791
  %v2092 = vpack.c.b16 %v1796, %v1792
  %v2093 = vpack.c.b16 %v1797, %v1793
  %v2094 = vpack.c.b16 %v1798, %v1794
  %v2095 = vpack.c.b16 %v1803, %v1799
  %v2096 = vpack.c.b16 %v1804, %v1800
  %v2097 = vpack.c.b16 %v1805, %v1801
  %v2098 = vpack.c.b16 %v1806, %v1802
  %v2099 = vpack.c.b16 %v1811, %v1807
  %v2100 = vpack.c.b16 %v1812, %v1808
  %v2101 = vpack.c.b16 %v1813, %v1809
  %v2102 = vpack.c.b16 %v1814, %v1810
  %v2103 = vpack.c.b16 %v1819, %v1815
  %v2104 = vpack.c.b16 %v1820, %v1816
  %v2105 = vpack.c.b16 %v1821, %v1817
  %v2106 = vpack.c.b16 %v1822, %v1818
  %v2107 = vpack.c.b16 %v1827, %v1823
  %v2108 = vpack.c.b16 %v1828, %v1824
  %v2109 = vpack.c.b16 %v1829, %v1825
  %v2110 = vpack.c.b16 %v1830, %v1826
  %v2111 = vpack.c.b16 %v1835, %v1831
  %v2112 = vpack.c.b16 %v1836, %v1832
  %v2113 = vpack.c.b16 %v1837, %v1833
  %v2114 = vpack.c.b16 %v1838, %v1834
  %v2115 = vpack.c.b16 %v1843, %v1839
  %v2116 = vpack.c.b16 %v1844, %v1840
  %v2117 = vpack.c.b16 %v1845, %v1841
  %v2118 = vpack.c.b16 %v1846, %v1842
  %v2119 = vpack.c.b16 %v1851, %v1847
  %v2120 = vpack.c.b16 %v1852, %v1848
  %v2121 = vpack.c.b16 %v1853, %v1849
  %v2122 = vpack.c.b16 %v1854, %v1850
  %v2123 = vpack.c.b16 %v1859, %v1855
  %v2124 = vpack.c.b16 %v1860, %v1856
  %v2125 = vpack.c.b16 %v1861, %v1857
  %v2126 = vpack.c.b16 %v1862, %v1858
  %v2127 = vpack.c.b16 %v1867, %v1863
  %v2128 = vpack.c.b16 %v1868, %v1864
  %v2129 = vpack.c.b16 %v1869, %v1865
  %v2130 = vpack.c.b16 %v1870, %v1866
  %v2131 = vpack.c.b16 %v1875, %v1871
  %v2132 = vpack.c.b16 %v1876, %v1872
  %v2133 = vpack.c.b16 %v1877, %v1873
  %v2134 = vpack.c.b16 %v1878, %v1874
  %v2135 = vpack.c.b16 %v1883, %v1879
  %v2136 = vpack.c.b16 %v1884, %v1880
  %v2137 = vpack.c.b16 %v1885, %v1881
  %v2138 = vpack.c.b16 %v1886, %v1882
  %v2139 = vpack.c.b16 %v1891, %v1887
  %v2140 = vpack.c.b16 %v1892, %v1888
  %v2141 = vpack.c.b16 %v1893, %v1889
  %v2142 = vpack.c.b16 %v1894, %v1890
  %v2143 = vpack.c.b16 %v1899, %v1895
  %v2144 = vpack.c.b16 %v1900, %v1896
  %v2145 = vpack.c.b16 %v1901, %v1897
  %v2146 = vpack.c.b16 %v1902, %v1898
  %v2147 = vpack.c.b16 %v1907, %v1903
  %v2148 = vpack.c.b16 %v1908, %v1904
  %v2149 = vpack.c.b16 %v1909, %v1905
  %v2150 = vpack.c.b16 %v1910, %v1906
  %v2151 = vpack.c.b16 %v1915, %v1911
  %v2152 = vpack.c.b16 %v1916, %v1912
  %v2153 = vpack.c.b16 %v1917, %v1913
  %v2154 = vpack.c.b16 %v1918, %v1914
  %v2155 = vpack.c.b16 %v1923, %v1919
  %v2156 = vpack.c.b16 %v1924, %v1920
  %v2157 = vpack.c.b16 %v1925, %v1921
  %v2158 = vpack.c.b16 %v1926, %v1922
  %v2159 = vpack.c.b16 %v1931, %v1927
  %v2160 = vpack.c.b16 %v1932, %v1928
  %v2161 = vpack.c.b16 %v1933, %v1929
  %v2162 = vpack.c.b16 %v1934, %v1930
  %v2163 = vpack.c.b16 %v1939, %v1935
  %v2164 = vpack.c.b16 %v1940, %v1936
  %v2165 = vpack.c.b16 %v1941, %v1937
  %v2166 = vpack.c.b16 %v1942, %v1938
  %v2167 = vpack.c.b16 %v1947, %v1943
  %v2168 = vpack.c.b16 %v1948, %v1944
  %v2169 = vpack.c.b16 %v1949, %v1945
  %v2170 = vpack.c.b16 %v1950, %v1946
  %v2171 = vpack.c.b16 %v1955, %v1951
  %v2172 = vpack.c.b16 %v1956, %v1952
  %v2173 = vpack.c.b16 %v1957, %v1953
  %v2174 = vpack.c.b16 %v1958, %v1954
  %v2175 = vpack.c.b16 %v1963, %v1959
  %v2176 = vpack.c.b16 %v1964, %v1960
  %v2177 = vpack.c.b16 %v1965, %v1961
  %v2178 = vpack.c.b16 %v1966, %v1962
  %v2179 = vpack.c.b16 %v1971, %v1967
  %v2180 = vpack.c.b16 %v1972, %v1968
  %v2181 = vpack.c.b16 %v1973, %v1969
  %v2182 = vpack.c.b16 %v1974, %v1970
  %v2183 = vpack.c.b16 %v1979, %v1975
  %v2184 = vpack.c.b16 %v1980, %v1976
  %v2185 = vpack.c.b16 %v1981, %v1977
  %v2186 = vpack.c.b16 %v1982, %v1978
  %v2187 = vpack.c.b16 %v1987, %v1983
  %v2188 = vpack.c.b16 %v1988, %v1984
  %v2189 = vpack.c.b16 %v1989, %v1985
  %v2190 = vpack.c.b16 %v1990, %v1986
  %v2191 = vpack.c.b16 %v1995, %v1991
  %v2192 = vpack.c.b16 %v1996, %v1992
  %v2193 = vpack.c.b16 %v1997, %v1993
  %v2194 = vpack.c.b16 %v1998, %v1994
  %v2195 = vpack.c.b16 %v2003, %v1999
  %v2196 = vpack.c.b16 %v2004, %v2000
  %v2197 = vpack.c.b16 %v2005, %v2001
  %v2198 = vpack.c.b16 %v2006, %v2002
  %2391 = vmatpush.bf16.msra.mxu0 %v2035
  %2392 = vmatpush.bf16.msra.mxu0 %v2031
  %2393 = vmatpush.bf16.msra.mxu0 %v2027
  %2394 = vmatpush.bf16.msra.mxu0 %v2023
  %2395 = vmatpush.bf16.msra.mxu0 %v2019
  %2396 = vmatpush.bf16.msra.mxu0 %v2015
  %2397 = vmatpush.bf16.msra.mxu0 %v2011
  %2398 = vmatpush.bf16.msra.mxu0 %v2007
  %2399 = vmatmul.bf16.gmra.mxu0 %v1183
  %v2400 = vpop.f32.mrf.mxu0
  %v2401 = vadd.f32 0.0, %v2400
  %v2402 = vpop.f32.mrf.mxu0
  %v2403 = vadd.f32 0.0, %v2402
  %2404 = vmatmul.bf16.gmra.mxu0 %v1184
  %v2405 = vpop.f32.mrf.mxu0
  %v2406 = vadd.f32 0.0, %v2405
  %v2407 = vpop.f32.mrf.mxu0
  %v2408 = vadd.f32 0.0, %v2407
  %2409 = vmatmul.bf16.gmra.mxu0 %v1185
  %v2410 = vpop.f32.mrf.mxu0
  %v2411 = vadd.f32 0.0, %v2410
  %v2412 = vpop.f32.mrf.mxu0
  %v2413 = vadd.f32 0.0, %v2412
  %2414 = vmatmul.bf16.gmra.mxu0 %v1186
  %v2415 = vpop.f32.mrf.mxu0
  %v2416 = vadd.f32 0.0, %v2415
  %v2417 = vpop.f32.mrf.mxu0
  %v2418 = vadd.f32 0.0, %v2417
  %2419 = vdwg.mxu0
  %2420 = vmatpush.bf16.msra.mxu0 %v2067
  %2421 = vmatpush.bf16.msra.mxu0 %v2063
  %2422 = vmatpush.bf16.msra.mxu0 %v2059
  %2423 = vmatpush.bf16.msra.mxu0 %v2055
  %2424 = vmatpush.bf16.msra.mxu0 %v2051
  %2425 = vmatpush.bf16.msra.mxu0 %v2047
  %2426 = vmatpush.bf16.msra.mxu0 %v2043
  %2427 = vmatpush.bf16.msra.mxu0 %v2039
  %2428 = vmatmul.bf16.gmra.mxu0 %v1207
  %v2429 = vpop.f32.mrf.mxu0
  %v2430 = vadd.f32 %v2401, %v2429
  %v2431 = vpop.f32.mrf.mxu0
  %v2432 = vadd.f32 %v2403, %v2431
  %2433 = vmatmul.bf16.gmra.mxu0 %v1208
  %v2434 = vpop.f32.mrf.mxu0
  %v2435 = vadd.f32 %v2406, %v2434
  %v2436 = vpop.f32.mrf.mxu0
  %v2437 = vadd.f32 %v2408, %v2436
  %2438 = vmatmul.bf16.gmra.mxu0 %v1209
  %v2439 = vpop.f32.mrf.mxu0
  %v2440 = vadd.f32 %v2411, %v2439
  %v2441 = vpop.f32.mrf.mxu0
  %v2442 = vadd.f32 %v2413, %v2441
  %2443 = vmatmul.bf16.gmra.mxu0 %v1210
  %v2444 = vpop.f32.mrf.mxu0
  %v2445 = vadd.f32 %v2416, %v2444
  %v2446 = vpop.f32.mrf.mxu0
  %v2447 = vadd.f32 %v2418, %v2446
  %2448 = vdwg.mxu0
  %2449 = vmatpush.bf16.msra.mxu0 %v2099
  %2450 = vmatpush.bf16.msra.mxu0 %v2095
  %2451 = vmatpush.bf16.msra.mxu0 %v2091
  %2452 = vmatpush.bf16.msra.mxu0 %v2087
  %2453 = vmatpush.bf16.msra.mxu0 %v2083
  %2454 = vmatpush.bf16.msra.mxu0 %v2079
  %2455 = vmatpush.bf16.msra.mxu0 %v2075
  %2456 = vmatpush.bf16.msra.mxu0 %v2071
  %2457 = vmatmul.bf16.gmra.mxu0 %v1184
  %v2458 = vpop.f32.mrf.mxu0
  %v2459 = vadd.f32 %v2430, %v2458
  %v2460 = vpop.f32.mrf.mxu0
  %v2461 = vadd.f32 %v2432, %v2460
  %2462 = vmatmul.bf16.gmra.mxu0 %v1185
  %v2463 = vpop.f32.mrf.mxu0
  %v2464 = vadd.f32 %v2435, %v2463
  %v2465 = vpop.f32.mrf.mxu0
  %v2466 = vadd.f32 %v2437, %v2465
  %2467 = vmatmul.bf16.gmra.mxu0 %v1186
  %v2468 = vpop.f32.mrf.mxu0
  %v2469 = vadd.f32 %v2440, %v2468
  %v2470 = vpop.f32.mrf.mxu0
  %v2471 = vadd.f32 %v2442, %v2470
  %2472 = vmatmul.bf16.gmra.mxu0 %v1219
  %v2473 = vpop.f32.mrf.mxu0
  %v2474 = vadd.f32 %v2445, %v2473
  %v2475 = vpop.f32.mrf.mxu0
  %v2476 = vadd.f32 %v2447, %v2475
  %2477 = vdwg.mxu0
  %2478 = vmatpush.bf16.msra.mxu0 %v2131
  %2479 = vmatpush.bf16.msra.mxu0 %v2127
  %2480 = vmatpush.bf16.msra.mxu0 %v2123
  %2481 = vmatpush.bf16.msra.mxu0 %v2119
  %2482 = vmatpush.bf16.msra.mxu0 %v2115
  %2483 = vmatpush.bf16.msra.mxu0 %v2111
  %2484 = vmatpush.bf16.msra.mxu0 %v2107
  %2485 = vmatpush.bf16.msra.mxu0 %v2103
  %2486 = vmatmul.bf16.gmra.mxu0 %v1208
  %v2487 = vpop.f32.mrf.mxu0
  %v2488 = vadd.f32 %v2459, %v2487
  %v2489 = vpop.f32.mrf.mxu0
  %v2490 = vadd.f32 %v2461, %v2489
  %2491 = vmatmul.bf16.gmra.mxu0 %v1209
  %v2492 = vpop.f32.mrf.mxu0
  %v2493 = vadd.f32 %v2464, %v2492
  %v2494 = vpop.f32.mrf.mxu0
  %v2495 = vadd.f32 %v2466, %v2494
  %2496 = vmatmul.bf16.gmra.mxu0 %v1210
  %v2497 = vpop.f32.mrf.mxu0
  %v2498 = vadd.f32 %v2469, %v2497
  %v2499 = vpop.f32.mrf.mxu0
  %v2500 = vadd.f32 %v2471, %v2499
  %2501 = vmatmul.bf16.gmra.mxu0 %v1225
  %v2502 = vpop.f32.mrf.mxu0
  %v2503 = vadd.f32 %v2474, %v2502
  %v2504 = vpop.f32.mrf.mxu0
  %v2505 = vadd.f32 %v2476, %v2504
  %2506 = vdwg.mxu0
  %2507 = vmatpush.bf16.msra.mxu0 %v2163
  %2508 = vmatpush.bf16.msra.mxu0 %v2159
  %2509 = vmatpush.bf16.msra.mxu0 %v2155
  %2510 = vmatpush.bf16.msra.mxu0 %v2151
  %2511 = vmatpush.bf16.msra.mxu0 %v2147
  %2512 = vmatpush.bf16.msra.mxu0 %v2143
  %2513 = vmatpush.bf16.msra.mxu0 %v2139
  %2514 = vmatpush.bf16.msra.mxu0 %v2135
  %2515 = vmatmul.bf16.gmra.mxu0 %v1185
  %v2516 = vpop.f32.mrf.mxu0
  %v2517 = vadd.f32 %v2488, %v2516
  %v2518 = vpop.f32.mrf.mxu0
  %v2519 = vadd.f32 %v2490, %v2518
  %2520 = vmatmul.bf16.gmra.mxu0 %v1186
  %v2521 = vpop.f32.mrf.mxu0
  %v2522 = vadd.f32 %v2493, %v2521
  %v2523 = vpop.f32.mrf.mxu0
  %v2524 = vadd.f32 %v2495, %v2523
  %2525 = vmatmul.bf16.gmra.mxu0 %v1219
  %v2526 = vpop.f32.mrf.mxu0
  %v2527 = vadd.f32 %v2498, %v2526
  %v2528 = vpop.f32.mrf.mxu0
  %v2529 = vadd.f32 %v2500, %v2528
  %2530 = vmatmul.bf16.gmra.mxu0 %v1231
  %v2531 = vpop.f32.mrf.mxu0
  %v2532 = vadd.f32 %v2503, %v2531
  %v2533 = vpop.f32.mrf.mxu0
  %v2534 = vadd.f32 %v2505, %v2533
  %2535 = vdwg.mxu0
  %2536 = vmatpush.bf16.msra.mxu0 %v2195
  %2537 = vmatpush.bf16.msra.mxu0 %v2191
  %2538 = vmatpush.bf16.msra.mxu0 %v2187
  %2539 = vmatpush.bf16.msra.mxu0 %v2183
  %2540 = vmatpush.bf16.msra.mxu0 %v2179
  %2541 = vmatpush.bf16.msra.mxu0 %v2175
  %2542 = vmatpush.bf16.msra.mxu0 %v2171
  %2543 = vmatpush.bf16.msra.mxu0 %v2167
  %2544 = vmatmul.bf16.gmra.mxu0 %v1209
  %v2545 = vpop.f32.mrf.mxu0
  %v2546 = vadd.f32 %v2517, %v2545
  %v2547 = vpop.f32.mrf.mxu0
  %v2548 = vadd.f32 %v2519, %v2547
  %2549 = vmatmul.bf16.gmra.mxu0 %v1210
  %v2550 = vpop.f32.mrf.mxu0
  %v2551 = vadd.f32 %v2522, %v2550
  %v2552 = vpop.f32.mrf.mxu0
  %v2553 = vadd.f32 %v2524, %v2552
  %2554 = vmatmul.bf16.gmra.mxu0 %v1225
  %v2555 = vpop.f32.mrf.mxu0
  %v2556 = vadd.f32 %v2527, %v2555
  %v2557 = vpop.f32.mrf.mxu0
  %v2558 = vadd.f32 %v2529, %v2557
  %2559 = vmatmul.bf16.gmra.mxu0 %v1237
  %v2560 = vpop.f32.mrf.mxu0
  %v2561 = vadd.f32 %v2532, %v2560
  %v2562 = vpop.f32.mrf.mxu0
  %v2563 = vadd.f32 %v2534, %v2562
  %2564 = vdwg.mxu0
  %2565 = vmatpush.bf16.msra.mxu0 %v2036
  %2566 = vmatpush.bf16.msra.mxu0 %v2032
  %2567 = vmatpush.bf16.msra.mxu0 %v2028
  %2568 = vmatpush.bf16.msra.mxu0 %v2024
  %2569 = vmatpush.bf16.msra.mxu0 %v2020
  %2570 = vmatpush.bf16.msra.mxu0 %v2016
  %2571 = vmatpush.bf16.msra.mxu0 %v2012
  %2572 = vmatpush.bf16.msra.mxu0 %v2008
  %2573 = vmatmul.bf16.gmra.mxu0 %v1183
  %v2574 = vpop.f32.mrf.mxu0
  %v2575 = vadd.f32 0.0, %v2574
  %v2576 = vpop.f32.mrf.mxu0
  %v2577 = vadd.f32 0.0, %v2576
  %2578 = vmatmul.bf16.gmra.mxu0 %v1184
  %v2579 = vpop.f32.mrf.mxu0
  %v2580 = vadd.f32 0.0, %v2579
  %v2581 = vpop.f32.mrf.mxu0
  %v2582 = vadd.f32 0.0, %v2581
  %2583 = vmatmul.bf16.gmra.mxu0 %v1185
  %v2584 = vpop.f32.mrf.mxu0
  %v2585 = vadd.f32 0.0, %v2584
  %v2586 = vpop.f32.mrf.mxu0
  %v2587 = vadd.f32 0.0, %v2586
  %2588 = vmatmul.bf16.gmra.mxu0 %v1186
  %v2589 = vpop.f32.mrf.mxu0
  %v2590 = vadd.f32 0.0, %v2589
  %v2591 = vpop.f32.mrf.mxu0
  %v2592 = vadd.f32 0.0, %v2591
  %2593 = vdwg.mxu0
  %2594 = vmatpush.bf16.msra.mxu0 %v2068
  %2595 = vmatpush.bf16.msra.mxu0 %v2064
  %2596 = vmatpush.bf16.msra.mxu0 %v2060
  %2597 = vmatpush.bf16.msra.mxu0 %v2056
  %2598 = vmatpush.bf16.msra.mxu0 %v2052
  %2599 = vmatpush.bf16.msra.mxu0 %v2048
  %2600 = vmatpush.bf16.msra.mxu0 %v2044
  %2601 = vmatpush.bf16.msra.mxu0 %v2040
  %2602 = vmatmul.bf16.gmra.mxu0 %v1207
  %v2603 = vpop.f32.mrf.mxu0
  %v2604 = vadd.f32 %v2575, %v2603
  %v2605 = vpop.f32.mrf.mxu0
  %v2606 = vadd.f32 %v2577, %v2605
  %2607 = vmatmul.bf16.gmra.mxu0 %v1208
  %v2608 = vpop.f32.mrf.mxu0
  %v2609 = vadd.f32 %v2580, %v2608
  %v2610 = vpop.f32.mrf.mxu0
  %v2611 = vadd.f32 %v2582, %v2610
  %2612 = vmatmul.bf16.gmra.mxu0 %v1209
  %v2613 = vpop.f32.mrf.mxu0
  %v2614 = vadd.f32 %v2585, %v2613
  %v2615 = vpop.f32.mrf.mxu0
  %v2616 = vadd.f32 %v2587, %v2615
  %2617 = vmatmul.bf16.gmra.mxu0 %v1210
  %v2618 = vpop.f32.mrf.mxu0
  %v2619 = vadd.f32 %v2590, %v2618
  %v2620 = vpop.f32.mrf.mxu0
  %v2621 = vadd.f32 %v2592, %v2620
  %2622 = vdwg.mxu0
  %2623 = vmatpush.bf16.msra.mxu0 %v2100
  %2624 = vmatpush.bf16.msra.mxu0 %v2096
  %2625 = vmatpush.bf16.msra.mxu0 %v2092
  %2626 = vmatpush.bf16.msra.mxu0 %v2088
  %2627 = vmatpush.bf16.msra.mxu0 %v2084
  %2628 = vmatpush.bf16.msra.mxu0 %v2080
  %2629 = vmatpush.bf16.msra.mxu0 %v2076
  %2630 = vmatpush.bf16.msra.mxu0 %v2072
  %2631 = vmatmul.bf16.gmra.mxu0 %v1184
  %v2632 = vpop.f32.mrf.mxu0
  %v2633 = vadd.f32 %v2604, %v2632
  %v2634 = vpop.f32.mrf.mxu0
  %v2635 = vadd.f32 %v2606, %v2634
  %2636 = vmatmul.bf16.gmra.mxu0 %v1185
  %v2637 = vpop.f32.mrf.mxu0
  %v2638 = vadd.f32 %v2609, %v2637
  %v2639 = vpop.f32.mrf.mxu0
  %v2640 = vadd.f32 %v2611, %v2639
  %2641 = vmatmul.bf16.gmra.mxu0 %v1186
  %v2642 = vpop.f32.mrf.mxu0
  %v2643 = vadd.f32 %v2614, %v2642
  %v2644 = vpop.f32.mrf.mxu0
  %v2645 = vadd.f32 %v2616, %v2644
  %2646 = vmatmul.bf16.gmra.mxu0 %v1219
  %v2647 = vpop.f32.mrf.mxu0
  %v2648 = vadd.f32 %v2619, %v2647
  %v2649 = vpop.f32.mrf.mxu0
  %v2650 = vadd.f32 %v2621, %v2649
  %2651 = vdwg.mxu0
  %2652 = vmatpush.bf16.msra.mxu0 %v2132
  %2653 = vmatpush.bf16.msra.mxu0 %v2128
  %2654 = vmatpush.bf16.msra.mxu0 %v2124
  %2655 = vmatpush.bf16.msra.mxu0 %v2120
  %2656 = vmatpush.bf16.msra.mxu0 %v2116
  %2657 = vmatpush.bf16.msra.mxu0 %v2112
  %2658 = vmatpush.bf16.msra.mxu0 %v2108
  %2659 = vmatpush.bf16.msra.mxu0 %v2104
  %2660 = vmatmul.bf16.gmra.mxu0 %v1208
  %v2661 = vpop.f32.mrf.mxu0
  %v2662 = vadd.f32 %v2633, %v2661
  %v2663 = vpop.f32.mrf.mxu0
  %v2664 = vadd.f32 %v2635, %v2663
  %2665 = vmatmul.bf16.gmra.mxu0 %v1209
  %v2666 = vpop.f32.mrf.mxu0
  %v2667 = vadd.f32 %v2638, %v2666
  %v2668 = vpop.f32.mrf.mxu0
  %v2669 = vadd.f32 %v2640, %v2668
  %2670 = vmatmul.bf16.gmra.mxu0 %v1210
  %v2671 = vpop.f32.mrf.mxu0
  %v2672 = vadd.f32 %v2643, %v2671
  %v2673 = vpop.f32.mrf.mxu0
  %v2674 = vadd.f32 %v2645, %v2673
  %2675 = vmatmul.bf16.gmra.mxu0 %v1225
  %v2676 = vpop.f32.mrf.mxu0
  %v2677 = vadd.f32 %v2648, %v2676
  %v2678 = vpop.f32.mrf.mxu0
  %v2679 = vadd.f32 %v2650, %v2678
  %2680 = vdwg.mxu0
  %2681 = vmatpush.bf16.msra.mxu0 %v2164
  %2682 = vmatpush.bf16.msra.mxu0 %v2160
  %2683 = vmatpush.bf16.msra.mxu0 %v2156
  %2684 = vmatpush.bf16.msra.mxu0 %v2152
  %2685 = vmatpush.bf16.msra.mxu0 %v2148
  %2686 = vmatpush.bf16.msra.mxu0 %v2144
  %2687 = vmatpush.bf16.msra.mxu0 %v2140
  %2688 = vmatpush.bf16.msra.mxu0 %v2136
  %2689 = vmatmul.bf16.gmra.mxu0 %v1185
  %v2690 = vpop.f32.mrf.mxu0
  %v2691 = vadd.f32 %v2662, %v2690
  %v2692 = vpop.f32.mrf.mxu0
  %v2693 = vadd.f32 %v2664, %v2692
  %2694 = vmatmul.bf16.gmra.mxu0 %v1186
  %v2695 = vpop.f32.mrf.mxu0
  %v2696 = vadd.f32 %v2667, %v2695
  %v2697 = vpop.f32.mrf.mxu0
  %v2698 = vadd.f32 %v2669, %v2697
  %2699 = vmatmul.bf16.gmra.mxu0 %v1219
  %v2700 = vpop.f32.mrf.mxu0
  %v2701 = vadd.f32 %v2672, %v2700
  %v2702 = vpop.f32.mrf.mxu0
  %v2703 = vadd.f32 %v2674, %v2702
  %2704 = vmatmul.bf16.gmra.mxu0 %v1231
  %v2705 = vpop.f32.mrf.mxu0
  %v2706 = vadd.f32 %v2677, %v2705
  %v2707 = vpop.f32.mrf.mxu0
  %v2708 = vadd.f32 %v2679, %v2707
  %2709 = vdwg.mxu0
  %2710 = vmatpush.bf16.msra.mxu0 %v2196
  %2711 = vmatpush.bf16.msra.mxu0 %v2192
  %2712 = vmatpush.bf16.msra.mxu0 %v2188
  %2713 = vmatpush.bf16.msra.mxu0 %v2184
  %2714 = vmatpush.bf16.msra.mxu0 %v2180
  %2715 = vmatpush.bf16.msra.mxu0 %v2176
  %2716 = vmatpush.bf16.msra.mxu0 %v2172
  %2717 = vmatpush.bf16.msra.mxu0 %v2168
  %2718 = vmatmul.bf16.gmra.mxu0 %v1209
  %v2719 = vpop.f32.mrf.mxu0
  %v2720 = vadd.f32 %v2691, %v2719
  %v2721 = vpop.f32.mrf.mxu0
  %v2722 = vadd.f32 %v2693, %v2721
  %2723 = vmatmul.bf16.gmra.mxu0 %v1210
  %v2724 = vpop.f32.mrf.mxu0
  %v2725 = vadd.f32 %v2696, %v2724
  %v2726 = vpop.f32.mrf.mxu0
  %v2727 = vadd.f32 %v2698, %v2726
  %2728 = vmatmul.bf16.gmra.mxu0 %v1225
  %v2729 = vpop.f32.mrf.mxu0
  %v2730 = vadd.f32 %v2701, %v2729
  %v2731 = vpop.f32.mrf.mxu0
  %v2732 = vadd.f32 %v2703, %v2731
  %2733 = vmatmul.bf16.gmra.mxu0 %v1237
  %v2734 = vpop.f32.mrf.mxu0
  %v2735 = vadd.f32 %v2706, %v2734
  %v2736 = vpop.f32.mrf.mxu0
  %v2737 = vadd.f32 %v2708, %v2736
  %2738 = vdwg.mxu0
  %2739 = vmatpush.bf16.msra.mxu0 %v2037
  %2740 = vmatpush.bf16.msra.mxu0 %v2033
  %2741 = vmatpush.bf16.msra.mxu0 %v2029
  %2742 = vmatpush.bf16.msra.mxu0 %v2025
  %2743 = vmatpush.bf16.msra.mxu0 %v2021
  %2744 = vmatpush.bf16.msra.mxu0 %v2017
  %2745 = vmatpush.bf16.msra.mxu0 %v2013
  %2746 = vmatpush.bf16.msra.mxu0 %v2009
  %2747 = vmatmul.bf16.gmra.mxu0 %v1183
  %v2748 = vpop.f32.mrf.mxu0
  %v2749 = vadd.f32 0.0, %v2748
  %v2750 = vpop.f32.mrf.mxu0
  %v2751 = vadd.f32 0.0, %v2750
  %2752 = vmatmul.bf16.gmra.mxu0 %v1184
  %v2753 = vpop.f32.mrf.mxu0
  %v2754 = vadd.f32 0.0, %v2753
  %v2755 = vpop.f32.mrf.mxu0
  %v2756 = vadd.f32 0.0, %v2755
  %2757 = vmatmul.bf16.gmra.mxu0 %v1185
  %v2758 = vpop.f32.mrf.mxu0
  %v2759 = vadd.f32 0.0, %v2758
  %v2760 = vpop.f32.mrf.mxu0
  %v2761 = vadd.f32 0.0, %v2760
  %2762 = vmatmul.bf16.gmra.mxu0 %v1186
  %v2763 = vpop.f32.mrf.mxu0
  %v2764 = vadd.f32 0.0, %v2763
  %v2765 = vpop.f32.mrf.mxu0
  %v2766 = vadd.f32 0.0, %v2765
  %2767 = vdwg.mxu0
  %2768 = vmatpush.bf16.msra.mxu0 %v2069
  %2769 = vmatpush.bf16.msra.mxu0 %v2065
  %2770 = vmatpush.bf16.msra.mxu0 %v2061
  %2771 = vmatpush.bf16.msra.mxu0 %v2057
  %2772 = vmatpush.bf16.msra.mxu0 %v2053
  %2773 = vmatpush.bf16.msra.mxu0 %v2049
  %2774 = vmatpush.bf16.msra.mxu0 %v2045
  %2775 = vmatpush.bf16.msra.mxu0 %v2041
  %2776 = vmatmul.bf16.gmra.mxu0 %v1207
  %v2777 = vpop.f32.mrf.mxu0
  %v2778 = vadd.f32 %v2749, %v2777
  %v2779 = vpop.f32.mrf.mxu0
  %v2780 = vadd.f32 %v2751, %v2779
  %2781 = vmatmul.bf16.gmra.mxu0 %v1208
  %v2782 = vpop.f32.mrf.mxu0
  %v2783 = vadd.f32 %v2754, %v2782
  %v2784 = vpop.f32.mrf.mxu0
  %v2785 = vadd.f32 %v2756, %v2784
  %2786 = vmatmul.bf16.gmra.mxu0 %v1209
  %v2787 = vpop.f32.mrf.mxu0
  %v2788 = vadd.f32 %v2759, %v2787
  %v2789 = vpop.f32.mrf.mxu0
  %v2790 = vadd.f32 %v2761, %v2789
  %2791 = vmatmul.bf16.gmra.mxu0 %v1210
  %v2792 = vpop.f32.mrf.mxu0
  %v2793 = vadd.f32 %v2764, %v2792
  %v2794 = vpop.f32.mrf.mxu0
  %v2795 = vadd.f32 %v2766, %v2794
  %2796 = vdwg.mxu0
  %2797 = vmatpush.bf16.msra.mxu0 %v2101
  %2798 = vmatpush.bf16.msra.mxu0 %v2097
  %2799 = vmatpush.bf16.msra.mxu0 %v2093
  %2800 = vmatpush.bf16.msra.mxu0 %v2089
  %2801 = vmatpush.bf16.msra.mxu0 %v2085
  %2802 = vmatpush.bf16.msra.mxu0 %v2081
  %2803 = vmatpush.bf16.msra.mxu0 %v2077
  %2804 = vmatpush.bf16.msra.mxu0 %v2073
  %2805 = vmatmul.bf16.gmra.mxu0 %v1184
  %v2806 = vpop.f32.mrf.mxu0
  %v2807 = vadd.f32 %v2778, %v2806
  %v2808 = vpop.f32.mrf.mxu0
  %v2809 = vadd.f32 %v2780, %v2808
  %2810 = vmatmul.bf16.gmra.mxu0 %v1185
  %v2811 = vpop.f32.mrf.mxu0
  %v2812 = vadd.f32 %v2783, %v2811
  %v2813 = vpop.f32.mrf.mxu0
  %v2814 = vadd.f32 %v2785, %v2813
  %2815 = vmatmul.bf16.gmra.mxu0 %v1186
  %v2816 = vpop.f32.mrf.mxu0
  %v2817 = vadd.f32 %v2788, %v2816
  %v2818 = vpop.f32.mrf.mxu0
  %v2819 = vadd.f32 %v2790, %v2818
  %2820 = vmatmul.bf16.gmra.mxu0 %v1219
  %v2821 = vpop.f32.mrf.mxu0
  %v2822 = vadd.f32 %v2793, %v2821
  %v2823 = vpop.f32.mrf.mxu0
  %v2824 = vadd.f32 %v2795, %v2823
  %2825 = vdwg.mxu0
  %2826 = vmatpush.bf16.msra.mxu0 %v2133
  %2827 = vmatpush.bf16.msra.mxu0 %v2129
  %2828 = vmatpush.bf16.msra.mxu0 %v2125
  %2829 = vmatpush.bf16.msra.mxu0 %v2121
  %2830 = vmatpush.bf16.msra.mxu0 %v2117
  %2831 = vmatpush.bf16.msra.mxu0 %v2113
  %2832 = vmatpush.bf16.msra.mxu0 %v2109
  %2833 = vmatpush.bf16.msra.mxu0 %v2105
  %2834 = vmatmul.bf16.gmra.mxu0 %v1208
  %v2835 = vpop.f32.mrf.mxu0
  %v2836 = vadd.f32 %v2807, %v2835
  %v2837 = vpop.f32.mrf.mxu0
  %v2838 = vadd.f32 %v2809, %v2837
  %2839 = vmatmul.bf16.gmra.mxu0 %v1209
  %v2840 = vpop.f32.mrf.mxu0
  %v2841 = vadd.f32 %v2812, %v2840
  %v2842 = vpop.f32.mrf.mxu0
  %v2843 = vadd.f32 %v2814, %v2842
  %2844 = vmatmul.bf16.gmra.mxu0 %v1210
  %v2845 = vpop.f32.mrf.mxu0
  %v2846 = vadd.f32 %v2817, %v2845
  %v2847 = vpop.f32.mrf.mxu0
  %v2848 = vadd.f32 %v2819, %v2847
  %2849 = vmatmul.bf16.gmra.mxu0 %v1225
  %v2850 = vpop.f32.mrf.mxu0
  %v2851 = vadd.f32 %v2822, %v2850
  %v2852 = vpop.f32.mrf.mxu0
  %v2853 = vadd.f32 %v2824, %v2852
  %2854 = vdwg.mxu0
  %2855 = vmatpush.bf16.msra.mxu0 %v2165
  %2856 = vmatpush.bf16.msra.mxu0 %v2161
  %2857 = vmatpush.bf16.msra.mxu0 %v2157
  %2858 = vmatpush.bf16.msra.mxu0 %v2153
  %2859 = vmatpush.bf16.msra.mxu0 %v2149
  %2860 = vmatpush.bf16.msra.mxu0 %v2145
  %2861 = vmatpush.bf16.msra.mxu0 %v2141
  %2862 = vmatpush.bf16.msra.mxu0 %v2137
  %2863 = vmatmul.bf16.gmra.mxu0 %v1185
  %v2864 = vpop.f32.mrf.mxu0
  %v2865 = vadd.f32 %v2836, %v2864
  %v2866 = vpop.f32.mrf.mxu0
  %v2867 = vadd.f32 %v2838, %v2866
  %2868 = vmatmul.bf16.gmra.mxu0 %v1186
  %v2869 = vpop.f32.mrf.mxu0
  %v2870 = vadd.f32 %v2841, %v2869
  %v2871 = vpop.f32.mrf.mxu0
  %v2872 = vadd.f32 %v2843, %v2871
  %2873 = vmatmul.bf16.gmra.mxu0 %v1219
  %v2874 = vpop.f32.mrf.mxu0
  %v2875 = vadd.f32 %v2846, %v2874
  %v2876 = vpop.f32.mrf.mxu0
  %v2877 = vadd.f32 %v2848, %v2876
  %2878 = vmatmul.bf16.gmra.mxu0 %v1231
  %v2879 = vpop.f32.mrf.mxu0
  %v2880 = vadd.f32 %v2851, %v2879
  %v2881 = vpop.f32.mrf.mxu0
  %v2882 = vadd.f32 %v2853, %v2881
  %2883 = vdwg.mxu0
  %2884 = vmatpush.bf16.msra.mxu0 %v2197
  %2885 = vmatpush.bf16.msra.mxu0 %v2193
  %2886 = vmatpush.bf16.msra.mxu0 %v2189
  %2887 = vmatpush.bf16.msra.mxu0 %v2185
  %2888 = vmatpush.bf16.msra.mxu0 %v2181
  %2889 = vmatpush.bf16.msra.mxu0 %v2177
  %2890 = vmatpush.bf16.msra.mxu0 %v2173
  %2891 = vmatpush.bf16.msra.mxu0 %v2169
  %2892 = vmatmul.bf16.gmra.mxu0 %v1209
  %v2893 = vpop.f32.mrf.mxu0
  %v2894 = vadd.f32 %v2865, %v2893
  %v2895 = vpop.f32.mrf.mxu0
  %v2896 = vadd.f32 %v2867, %v2895
  %2897 = vmatmul.bf16.gmra.mxu0 %v1210
  %v2898 = vpop.f32.mrf.mxu0
  %v2899 = vadd.f32 %v2870, %v2898
  %v2900 = vpop.f32.mrf.mxu0
  %v2901 = vadd.f32 %v2872, %v2900
  %2902 = vmatmul.bf16.gmra.mxu0 %v1225
  %v2903 = vpop.f32.mrf.mxu0
  %v2904 = vadd.f32 %v2875, %v2903
  %v2905 = vpop.f32.mrf.mxu0
  %v2906 = vadd.f32 %v2877, %v2905
  %2907 = vmatmul.bf16.gmra.mxu0 %v1237
  %v2908 = vpop.f32.mrf.mxu0
  %v2909 = vadd.f32 %v2880, %v2908
  %v2910 = vpop.f32.mrf.mxu0
  %v2911 = vadd.f32 %v2882, %v2910
  %2912 = vdwg.mxu0
  %2913 = vmatpush.bf16.msra.mxu0 %v2038
  %2914 = vmatpush.bf16.msra.mxu0 %v2034
  %2915 = vmatpush.bf16.msra.mxu0 %v2030
  %2916 = vmatpush.bf16.msra.mxu0 %v2026
  %2917 = vmatpush.bf16.msra.mxu0 %v2022
  %2918 = vmatpush.bf16.msra.mxu0 %v2018
  %2919 = vmatpush.bf16.msra.mxu0 %v2014
  %2920 = vmatpush.bf16.msra.mxu0 %v2010
  %2921 = vmatmul.bf16.gmra.mxu0 %v1183
  %v2922 = vpop.f32.mrf.mxu0
  %v2923 = vadd.f32 0.0, %v2922
  %v2924 = vpop.f32.mrf.mxu0
  %v2925 = vadd.f32 0.0, %v2924
  %2926 = vmatmul.bf16.gmra.mxu0 %v1184
  %v2927 = vpop.f32.mrf.mxu0
  %v2928 = vadd.f32 0.0, %v2927
  %v2929 = vpop.f32.mrf.mxu0
  %v2930 = vadd.f32 0.0, %v2929
  %2931 = vmatmul.bf16.gmra.mxu0 %v1185
  %v2932 = vpop.f32.mrf.mxu0
  %v2933 = vadd.f32 0.0, %v2932
  %v2934 = vpop.f32.mrf.mxu0
  %v2935 = vadd.f32 0.0, %v2934
  %2936 = vmatmul.bf16.gmra.mxu0 %v1186
  %v2937 = vpop.f32.mrf.mxu0
  %v2938 = vadd.f32 0.0, %v2937
  %v2939 = vpop.f32.mrf.mxu0
  %v2940 = vadd.f32 0.0, %v2939
  %2941 = vdwg.mxu0
  %2942 = vmatpush.bf16.msra.mxu0 %v2070
  %2943 = vmatpush.bf16.msra.mxu0 %v2066
  %2944 = vmatpush.bf16.msra.mxu0 %v2062
  %2945 = vmatpush.bf16.msra.mxu0 %v2058
  %2946 = vmatpush.bf16.msra.mxu0 %v2054
  %2947 = vmatpush.bf16.msra.mxu0 %v2050
  %2948 = vmatpush.bf16.msra.mxu0 %v2046
  %2949 = vmatpush.bf16.msra.mxu0 %v2042
  %2950 = vmatmul.bf16.gmra.mxu0 %v1207
  %v2951 = vpop.f32.mrf.mxu0
  %v2952 = vadd.f32 %v2923, %v2951
  %v2953 = vpop.f32.mrf.mxu0
  %v2954 = vadd.f32 %v2925, %v2953
  %2955 = vmatmul.bf16.gmra.mxu0 %v1208
  %v2956 = vpop.f32.mrf.mxu0
  %v2957 = vadd.f32 %v2928, %v2956
  %v2958 = vpop.f32.mrf.mxu0
  %v2959 = vadd.f32 %v2930, %v2958
  %2960 = vmatmul.bf16.gmra.mxu0 %v1209
  %v2961 = vpop.f32.mrf.mxu0
  %v2962 = vadd.f32 %v2933, %v2961
  %v2963 = vpop.f32.mrf.mxu0
  %v2964 = vadd.f32 %v2935, %v2963
  %2965 = vmatmul.bf16.gmra.mxu0 %v1210
  %v2966 = vpop.f32.mrf.mxu0
  %v2967 = vadd.f32 %v2938, %v2966
  %v2968 = vpop.f32.mrf.mxu0
  %v2969 = vadd.f32 %v2940, %v2968
  %2970 = vdwg.mxu0
  %2971 = vmatpush.bf16.msra.mxu0 %v2102
  %2972 = vmatpush.bf16.msra.mxu0 %v2098
  %2973 = vmatpush.bf16.msra.mxu0 %v2094
  %2974 = vmatpush.bf16.msra.mxu0 %v2090
  %2975 = vmatpush.bf16.msra.mxu0 %v2086
  %2976 = vmatpush.bf16.msra.mxu0 %v2082
  %2977 = vmatpush.bf16.msra.mxu0 %v2078
  %2978 = vmatpush.bf16.msra.mxu0 %v2074
  %2979 = vmatmul.bf16.gmra.mxu0 %v1184
  %v2980 = vpop.f32.mrf.mxu0
  %v2981 = vadd.f32 %v2952, %v2980
  %v2982 = vpop.f32.mrf.mxu0
  %v2983 = vadd.f32 %v2954, %v2982
  %2984 = vmatmul.bf16.gmra.mxu0 %v1185
  %v2985 = vpop.f32.mrf.mxu0
  %v2986 = vadd.f32 %v2957, %v2985
  %v2987 = vpop.f32.mrf.mxu0
  %v2988 = vadd.f32 %v2959, %v2987
  %2989 = vmatmul.bf16.gmra.mxu0 %v1186
  %v2990 = vpop.f32.mrf.mxu0
  %v2991 = vadd.f32 %v2962, %v2990
  %v2992 = vpop.f32.mrf.mxu0
  %v2993 = vadd.f32 %v2964, %v2992
  %2994 = vmatmul.bf16.gmra.mxu0 %v1219
  %v2995 = vpop.f32.mrf.mxu0
  %v2996 = vadd.f32 %v2967, %v2995
  %v2997 = vpop.f32.mrf.mxu0
  %v2998 = vadd.f32 %v2969, %v2997
  %2999 = vdwg.mxu0
  %3000 = vmatpush.bf16.msra.mxu0 %v2134
  %3001 = vmatpush.bf16.msra.mxu0 %v2130
  %3002 = vmatpush.bf16.msra.mxu0 %v2126
  %3003 = vmatpush.bf16.msra.mxu0 %v2122
  %3004 = vmatpush.bf16.msra.mxu0 %v2118
  %3005 = vmatpush.bf16.msra.mxu0 %v2114
  %3006 = vmatpush.bf16.msra.mxu0 %v2110
  %3007 = vmatpush.bf16.msra.mxu0 %v2106
  %3008 = vmatmul.bf16.gmra.mxu0 %v1208
  %v3009 = vpop.f32.mrf.mxu0
  %v3010 = vadd.f32 %v2981, %v3009
  %v3011 = vpop.f32.mrf.mxu0
  %v3012 = vadd.f32 %v2983, %v3011
  %3013 = vmatmul.bf16.gmra.mxu0 %v1209
  %v3014 = vpop.f32.mrf.mxu0
  %v3015 = vadd.f32 %v2986, %v3014
  %v3016 = vpop.f32.mrf.mxu0
  %v3017 = vadd.f32 %v2988, %v3016
  %3018 = vmatmul.bf16.gmra.mxu0 %v1210
  %v3019 = vpop.f32.mrf.mxu0
  %v3020 = vadd.f32 %v2991, %v3019
  %v3021 = vpop.f32.mrf.mxu0
  %v3022 = vadd.f32 %v2993, %v3021
  %3023 = vmatmul.bf16.gmra.mxu0 %v1225
  %v3024 = vpop.f32.mrf.mxu0
  %v3025 = vadd.f32 %v2996, %v3024
  %v3026 = vpop.f32.mrf.mxu0
  %v3027 = vadd.f32 %v2998, %v3026
  %3028 = vdwg.mxu0
  %3029 = vmatpush.bf16.msra.mxu0 %v2166
  %3030 = vmatpush.bf16.msra.mxu0 %v2162
  %3031 = vmatpush.bf16.msra.mxu0 %v2158
  %3032 = vmatpush.bf16.msra.mxu0 %v2154
  %3033 = vmatpush.bf16.msra.mxu0 %v2150
  %3034 = vmatpush.bf16.msra.mxu0 %v2146
  %3035 = vmatpush.bf16.msra.mxu0 %v2142
  %3036 = vmatpush.bf16.msra.mxu0 %v2138
  %3037 = vmatmul.bf16.gmra.mxu0 %v1185
  %v3038 = vpop.f32.mrf.mxu0
  %v3039 = vadd.f32 %v3010, %v3038
  %v3040 = vpop.f32.mrf.mxu0
  %v3041 = vadd.f32 %v3012, %v3040
  %3042 = vmatmul.bf16.gmra.mxu0 %v1186
  %v3043 = vpop.f32.mrf.mxu0
  %v3044 = vadd.f32 %v3015, %v3043
  %v3045 = vpop.f32.mrf.mxu0
  %v3046 = vadd.f32 %v3017, %v3045
  %3047 = vmatmul.bf16.gmra.mxu0 %v1219
  %v3048 = vpop.f32.mrf.mxu0
  %v3049 = vadd.f32 %v3020, %v3048
  %v3050 = vpop.f32.mrf.mxu0
  %v3051 = vadd.f32 %v3022, %v3050
  %3052 = vmatmul.bf16.gmra.mxu0 %v1231
  %v3053 = vpop.f32.mrf.mxu0
  %v3054 = vadd.f32 %v3025, %v3053
  %v3055 = vpop.f32.mrf.mxu0
  %v3056 = vadd.f32 %v3027, %v3055
  %3057 = vdwg.mxu0
  %3058 = vmatpush.bf16.msra.mxu0 %v2198
  %3059 = vmatpush.bf16.msra.mxu0 %v2194
  %3060 = vmatpush.bf16.msra.mxu0 %v2190
  %3061 = vmatpush.bf16.msra.mxu0 %v2186
  %3062 = vmatpush.bf16.msra.mxu0 %v2182
  %3063 = vmatpush.bf16.msra.mxu0 %v2178
  %3064 = vmatpush.bf16.msra.mxu0 %v2174
  %3065 = vmatpush.bf16.msra.mxu0 %v2170
  %3066 = vmatmul.bf16.gmra.mxu0 %v1209
  %v3067 = vpop.f32.mrf.mxu0
  %v3068 = vadd.f32 %v3039, %v3067
  %v3069 = vpop.f32.mrf.mxu0
  %v3070 = vadd.f32 %v3041, %v3069
  %3071 = vmatmul.bf16.gmra.mxu0 %v1210
  %v3072 = vpop.f32.mrf.mxu0
  %v3073 = vadd.f32 %v3044, %v3072
  %v3074 = vpop.f32.mrf.mxu0
  %v3075 = vadd.f32 %v3046, %v3074
  %3076 = vmatmul.bf16.gmra.mxu0 %v1225
  %v3077 = vpop.f32.mrf.mxu0
  %v3078 = vadd.f32 %v3049, %v3077
  %v3079 = vpop.f32.mrf.mxu0
  %v3080 = vadd.f32 %v3051, %v3079
  %3081 = vmatmul.bf16.gmra.mxu0 %v1237
  %v3082 = vpop.f32.mrf.mxu0
  %v3083 = vadd.f32 %v3054, %v3082
  %v3084 = vpop.f32.mrf.mxu0
  %v3085 = vadd.f32 %v3056, %v3084
  %3086 = vdwg.mxu0
  %v3087 = vmax.f32 %v2546, %v2720
  %v3088 = vmax.f32 %v2548, %v2722
  %v3089 = vmax.f32 %v2551, %v2725
  %v3090 = vmax.f32 %v2553, %v2727
  %v3091 = vmax.f32 %v2556, %v2730
  %v3092 = vmax.f32 %v2558, %v2732
  %v3093 = vmax.f32 %v2561, %v2735
  %v3094 = vmax.f32 %v2563, %v2737
  %v3095 = vmax.f32 %v2894, %v3068
  %v3096 = vmax.f32 %v2896, %v3070
  %v3097 = vmax.f32 %v2899, %v3073
  %v3098 = vmax.f32 %v2901, %v3075
  %v3099 = vmax.f32 %v2904, %v3078
  %v3100 = vmax.f32 %v2906, %v3080
  %v3101 = vmax.f32 %v2909, %v3083
  %v3102 = vmax.f32 %v2911, %v3085
  %v3103 = vmax.f32 %v3087, %v3095
  %v3104 = vmax.f32 %v3088, %v3096
  %v3105 = vmax.f32 %v3089, %v3097
  %v3106 = vmax.f32 %v3090, %v3098
  %v3107 = vmax.f32 %v3091, %v3099
  %v3108 = vmax.f32 %v3092, %v3100
  %v3109 = vmax.f32 %v3093, %v3101
  %v3110 = vmax.f32 %v3094, %v3102
  %v3111 = vld [vmem:[%s4] sm:$0x1]
  %v3113 = vperm.slane %v3111, 0
  %v3115 = vadd.f32 %v3103, %v3113
  %v3116 = vadd.f32 %v3104, %v3113
  %v3117 = vadd.f32 %v3105, %v3113
  %v3118 = vadd.f32 %v3106, %v3113
  %v3119 = vadd.f32 %v3107, %v3113
  %v3120 = vadd.f32 %v3108, %v3113
  %v3121 = vadd.f32 %v3109, %v3113
  %v3122 = vadd.f32 %v3110, %v3113
  %v3123 = vmax.f32 %v3115, 0.0
  %v3124 = vmax.f32 %v3116, 0.0
  %v3125 = vmax.f32 %v3117, 0.0
  %v3126 = vmax.f32 %v3118, 0.0
  %v3127 = vmax.f32 %v3119, 0.0
  %v3128 = vmax.f32 %v3120, 0.0
  %v3129 = vmax.f32 %v3121, 0.0
  %v3130 = vmax.f32 %v3122, 0.0
  %v3131 = vpack.c.bf16 %v3123, %v3123
  %v3132 = vpack.c.bf16 %v3124, %v3124
  %v3133 = vpack.c.bf16 %v3125, %v3125
  %v3134 = vpack.c.bf16 %v3126, %v3126
  %v3135 = vpack.c.bf16 %v3127, %v3127
  %v3136 = vpack.c.bf16 %v3128, %v3128
  %v3137 = vpack.c.bf16 %v3129, %v3129
  %v3138 = vpack.c.bf16 %v3130, %v3130
  %v3141 = vunpack.c.l.b16 %v3131
  %v3142 = vunpack.c.l.b16 %v3132
  %v3143 = vpack.c.b16 %v3142, %v3141
  %v3147 = vunpack.c.l.b16 %v3133
  %v3148 = vunpack.c.l.b16 %v3134
  %v3149 = vpack.c.b16 %v3148, %v3147
  %v3153 = vunpack.c.l.b16 %v3135
  %v3154 = vunpack.c.l.b16 %v3136
  %v3155 = vpack.c.b16 %v3154, %v3153
  %v3159 = vunpack.c.l.b16 %v3137
  %v3160 = vunpack.c.l.b16 %v3138
  %v3161 = vpack.c.b16 %v3160, %v3159
  %v3163 = vld [vmem:[%s5] sm:$0xf]
  %v3164 = vld [vmem:[%s5 + $0x4] sm:$0xf]
  %v3165 = vld [vmem:[%s5 + $0x8] sm:$0xf]
  %v3166 = vld [vmem:[%s5 + $0xc] sm:$0xf]
  %v3167 = vld [vmem:[%s5 + $0x10] sm:$0xf]
  %v3168 = vld [vmem:[%s5 + $0x14] sm:$0xf]
  %v3169 = vld [vmem:[%s5 + $0x18] sm:$0xf]
  %v3170 = vld [vmem:[%s5 + $0x1c] sm:$0xf]
  %v3171 = vld [vmem:[%s5 + $0x20] sm:$0xf]
  %v3172 = vld [vmem:[%s5 + $0x24] sm:$0xf]
  %v3173 = vld [vmem:[%s5 + $0x28] sm:$0xf]
  %v3174 = vld [vmem:[%s5 + $0x2c] sm:$0xf]
  %v3175 = vld [vmem:[%s5 + $0x30] sm:$0xf]
  %v3176 = vld [vmem:[%s5 + $0x34] sm:$0xf]
  %v3177 = vld [vmem:[%s5 + $0x38] sm:$0xf]
  %v3178 = vld [vmem:[%s5 + $0x3c] sm:$0xf]
  %v3179 = vld [vmem:[%s5 + $0x40] sm:$0xf]
  %v3180 = vld [vmem:[%s5 + $0x44] sm:$0xf]
  %v3181 = vld [vmem:[%s5 + $0x48] sm:$0xf]
  %v3182 = vld [vmem:[%s5 + $0x4c] sm:$0xf]
  %v3183 = vld [vmem:[%s5 + $0x50] sm:$0xf]
  %v3184 = vld [vmem:[%s5 + $0x54] sm:$0xf]
  %v3185 = vld [vmem:[%s5 + $0x58] sm:$0xf]
  %v3186 = vld [vmem:[%s5 + $0x5c] sm:$0xf]
  %v3187 = vld [vmem:[%s5 + $0x60] sm:$0xf]
  %v3188 = vld [vmem:[%s5 + $0x64] sm:$0xf]
  %v3189 = vld [vmem:[%s5 + $0x68] sm:$0xf]
  %v3190 = vld [vmem:[%s5 + $0x6c] sm:$0xf]
  %v3191 = vld [vmem:[%s5 + $0x70] sm:$0xf]
  %v3192 = vld [vmem:[%s5 + $0x74] sm:$0xf]
  %v3193 = vld [vmem:[%s5 + $0x78] sm:$0xf]
  %v3194 = vld [vmem:[%s5 + $0x7c] sm:$0xf]
  %v3195 = vld [vmem:[%s5 + $0x80] sm:$0xf]
  %v3196 = vld [vmem:[%s5 + $0x84] sm:$0xf]
  %v3197 = vld [vmem:[%s5 + $0x88] sm:$0xf]
  %v3198 = vld [vmem:[%s5 + $0x8c] sm:$0xf]
  %v3199 = vld [vmem:[%s5 + $0x90] sm:$0xf]
  %v3200 = vld [vmem:[%s5 + $0x94] sm:$0xf]
  %v3201 = vld [vmem:[%s5 + $0x98] sm:$0xf]
  %v3202 = vld [vmem:[%s5 + $0x9c] sm:$0xf]
  %v3203 = vld [vmem:[%s5 + $0xa0] sm:$0xf]
  %v3204 = vld [vmem:[%s5 + $0xa4] sm:$0xf]
  %v3205 = vld [vmem:[%s5 + $0xa8] sm:$0xf]
  %v3206 = vld [vmem:[%s5 + $0xac] sm:$0xf]
  %v3207 = vld [vmem:[%s5 + $0xb0] sm:$0xf]
  %v3208 = vld [vmem:[%s5 + $0xb4] sm:$0xf]
  %v3209 = vld [vmem:[%s5 + $0xb8] sm:$0xf]
  %v3210 = vld [vmem:[%s5 + $0xbc] sm:$0xf]
  %v3211 = vld [vmem:[%s5 + $0xc0] sm:$0xf]
  %v3212 = vld [vmem:[%s5 + $0xc4] sm:$0xf]
  %v3213 = vld [vmem:[%s5 + $0xc8] sm:$0xf]
  %v3214 = vld [vmem:[%s5 + $0xcc] sm:$0xf]
  %v3215 = vld [vmem:[%s5 + $0xd0] sm:$0xf]
  %v3216 = vld [vmem:[%s5 + $0xd4] sm:$0xf]
  %v3217 = vld [vmem:[%s5 + $0xd8] sm:$0xf]
  %v3218 = vld [vmem:[%s5 + $0xdc] sm:$0xf]
  %v3219 = vld [vmem:[%s5 + $0xe0] sm:$0xf]
  %v3220 = vld [vmem:[%s5 + $0xe4] sm:$0xf]
  %v3221 = vld [vmem:[%s5 + $0xe8] sm:$0xf]
  %v3222 = vld [vmem:[%s5 + $0xec] sm:$0xf]
  %v3223 = vld [vmem:[%s5 + $0xf0] sm:$0xf]
  %v3224 = vld [vmem:[%s5 + $0xf4] sm:$0xf]
  %v3225 = vld [vmem:[%s5 + $0xf8] sm:$0xf]
  %v3226 = vld [vmem:[%s5 + $0xfc] sm:$0xf]
  %v3227 = vld [vmem:[%s6] sm:$0x1]
  %v3229 = vperm.slane %v3227, 0
  %v3295 = vunpack.c.l.b16 %v3163
  %v3296 = vunpack.c.l.b16 %v3164
  %v3297 = vunpack.c.l.b16 %v3165
  %v3298 = vunpack.c.l.b16 %v3166
  %v3299 = vunpack.c.l.b16 %v3167
  %v3300 = vunpack.c.l.b16 %v3168
  %v3301 = vunpack.c.l.b16 %v3169
  %v3302 = vunpack.c.l.b16 %v3170
  %v3303 = vunpack.c.l.b16 %v3171
  %v3304 = vunpack.c.l.b16 %v3172
  %v3305 = vunpack.c.l.b16 %v3173
  %v3306 = vunpack.c.l.b16 %v3174
  %v3307 = vunpack.c.l.b16 %v3175
  %v3308 = vunpack.c.l.b16 %v3176
  %v3309 = vunpack.c.l.b16 %v3177
  %v3310 = vunpack.c.l.b16 %v3178
  %v3311 = vunpack.c.l.b16 %v3179
  %v3312 = vunpack.c.l.b16 %v3180
  %v3313 = vunpack.c.l.b16 %v3181
  %v3314 = vunpack.c.l.b16 %v3182
  %v3315 = vunpack.c.l.b16 %v3183
  %v3316 = vunpack.c.l.b16 %v3184
  %v3317 = vunpack.c.l.b16 %v3185
  %v3318 = vunpack.c.l.b16 %v3186
  %v3319 = vunpack.c.l.b16 %v3187
  %v3320 = vunpack.c.l.b16 %v3188
  %v3321 = vunpack.c.l.b16 %v3189
  %v3322 = vunpack.c.l.b16 %v3190
  %v3323 = vunpack.c.l.b16 %v3191
  %v3324 = vunpack.c.l.b16 %v3192
  %v3325 = vunpack.c.l.b16 %v3193
  %v3326 = vunpack.c.l.b16 %v3194
  %v3327 = vunpack.c.l.b16 %v3195
  %v3328 = vunpack.c.l.b16 %v3196
  %v3329 = vunpack.c.l.b16 %v3197
  %v3330 = vunpack.c.l.b16 %v3198
  %v3331 = vunpack.c.l.b16 %v3199
  %v3332 = vunpack.c.l.b16 %v3200
  %v3333 = vunpack.c.l.b16 %v3201
  %v3334 = vunpack.c.l.b16 %v3202
  %v3335 = vunpack.c.l.b16 %v3203
  %v3336 = vunpack.c.l.b16 %v3204
  %v3337 = vunpack.c.l.b16 %v3205
  %v3338 = vunpack.c.l.b16 %v3206
  %v3339 = vunpack.c.l.b16 %v3207
  %v3340 = vunpack.c.l.b16 %v3208
  %v3341 = vunpack.c.l.b16 %v3209
  %v3342 = vunpack.c.l.b16 %v3210
  %v3343 = vunpack.c.l.b16 %v3211
  %v3344 = vunpack.c.l.b16 %v3212
  %v3345 = vunpack.c.l.b16 %v3213
  %v3346 = vunpack.c.l.b16 %v3214
  %v3347 = vunpack.c.l.b16 %v3215
  %v3348 = vunpack.c.l.b16 %v3216
  %v3349 = vunpack.c.l.b16 %v3217
  %v3350 = vunpack.c.l.b16 %v3218
  %v3351 = vunpack.c.l.b16 %v3219
  %v3352 = vunpack.c.l.b16 %v3220
  %v3353 = vunpack.c.l.b16 %v3221
  %v3354 = vunpack.c.l.b16 %v3222
  %v3355 = vunpack.c.l.b16 %v3223
  %v3356 = vunpack.c.l.b16 %v3224
  %v3357 = vunpack.c.l.b16 %v3225
  %v3358 = vunpack.c.l.b16 %v3226
  %v3359 = vpack.c.b16 %v3296, %v3295
  %v3360 = vpack.c.b16 %v3298, %v3297
  %v3361 = vpack.c.b16 %v3300, %v3299
  %v3362 = vpack.c.b16 %v3302, %v3301
  %v3363 = vpack.c.b16 %v3304, %v3303
  %v3364 = vpack.c.b16 %v3306, %v3305
  %v3365 = vpack.c.b16 %v3308, %v3307
  %v3366 = vpack.c.b16 %v3310, %v3309
  %v3367 = vpack.c.b16 %v3312, %v3311
  %v3368 = vpack.c.b16 %v3314, %v3313
  %v3369 = vpack.c.b16 %v3316, %v3315
  %v3370 = vpack.c.b16 %v3318, %v3317
  %v3371 = vpack.c.b16 %v3320, %v3319
  %v3372 = vpack.c.b16 %v3322, %v3321
  %v3373 = vpack.c.b16 %v3324, %v3323
  %v3374 = vpack.c.b16 %v3326, %v3325
  %v3375 = vpack.c.b16 %v3328, %v3327
  %v3376 = vpack.c.b16 %v3330, %v3329
  %v3377 = vpack.c.b16 %v3332, %v3331
  %v3378 = vpack.c.b16 %v3334, %v3333
  %v3379 = vpack.c.b16 %v3336, %v3335
  %v3380 = vpack.c.b16 %v3338, %v3337
  %v3381 = vpack.c.b16 %v3340, %v3339
  %v3382 = vpack.c.b16 %v3342, %v3341
  %v3383 = vpack.c.b16 %v3344, %v3343
  %v3384 = vpack.c.b16 %v3346, %v3345
  %v3385 = vpack.c.b16 %v3348, %v3347
  %v3386 = vpack.c.b16 %v3350, %v3349
  %v3387 = vpack.c.b16 %v3352, %v3351
  %v3388 = vpack.c.b16 %v3354, %v3353
  %v3389 = vpack.c.b16 %v3356, %v3355
  %v3390 = vpack.c.b16 %v3358, %v3357
  %3423 = vmatpush.bf16.msra.mxu0 %v3366
  %3424 = vmatpush.bf16.msra.mxu0 %v3365
  %3425 = vmatpush.bf16.msra.mxu0 %v3364
  %3426 = vmatpush.bf16.msra.mxu0 %v3363
  %3427 = vmatpush.bf16.msra.mxu0 %v3362
  %3428 = vmatpush.bf16.msra.mxu0 %v3361
  %3429 = vmatpush.bf16.msra.mxu0 %v3360
  %3430 = vmatpush.bf16.msra.mxu0 %v3359
  %3431 = vmatmul.bf16.gmra.mxu0 %v3143
  %v3432 = vpop.f32.mrf.mxu0
  %v3433 = vadd.f32 %v3229, %v3432
  %v3434 = vpop.f32.mrf.mxu0
  %v3435 = vadd.f32 %v3229, %v3434
  %3436 = vdwg.mxu0
  %3437 = vmatpush.bf16.msra.mxu0 %v3374
  %3438 = vmatpush.bf16.msra.mxu0 %v3373
  %3439 = vmatpush.bf16.msra.mxu0 %v3372
  %3440 = vmatpush.bf16.msra.mxu0 %v3371
  %3441 = vmatpush.bf16.msra.mxu0 %v3370
  %3442 = vmatpush.bf16.msra.mxu0 %v3369
  %3443 = vmatpush.bf16.msra.mxu0 %v3368
  %3444 = vmatpush.bf16.msra.mxu0 %v3367
  %3445 = vmatmul.bf16.gmra.mxu0 %v3149
  %v3446 = vpop.f32.mrf.mxu0
  %v3447 = vadd.f32 %v3433, %v3446
  %v3448 = vpop.f32.mrf.mxu0
  %v3449 = vadd.f32 %v3435, %v3448
  %3450 = vdwg.mxu0
  %3451 = vmatpush.bf16.msra.mxu0 %v3382
  %3452 = vmatpush.bf16.msra.mxu0 %v3381
  %3453 = vmatpush.bf16.msra.mxu0 %v3380
  %3454 = vmatpush.bf16.msra.mxu0 %v3379
  %3455 = vmatpush.bf16.msra.mxu0 %v3378
  %3456 = vmatpush.bf16.msra.mxu0 %v3377
  %3457 = vmatpush.bf16.msra.mxu0 %v3376
  %3458 = vmatpush.bf16.msra.mxu0 %v3375
  %3459 = vmatmul.bf16.gmra.mxu0 %v3155
  %v3460 = vpop.f32.mrf.mxu0
  %v3461 = vadd.f32 %v3447, %v3460
  %v3462 = vpop.f32.mrf.mxu0
  %v3463 = vadd.f32 %v3449, %v3462
  %3464 = vdwg.mxu0
  %3465 = vmatpush.bf16.msra.mxu0 %v3390
  %3466 = vmatpush.bf16.msra.mxu0 %v3389
  %3467 = vmatpush.bf16.msra.mxu0 %v3388
  %3468 = vmatpush.bf16.msra.mxu0 %v3387
  %3469 = vmatpush.bf16.msra.mxu0 %v3386
  %3470 = vmatpush.bf16.msra.mxu0 %v3385
  %3471 = vmatpush.bf16.msra.mxu0 %v3384
  %3472 = vmatpush.bf16.msra.mxu0 %v3383
  %3473 = vmatmul.bf16.gmra.mxu0 %v3161
  %v3474 = vpop.f32.mrf.mxu0
  %v3475 = vadd.f32 %v3461, %v3474
  %v3476 = vpop.f32.mrf.mxu0
  %v3477 = vadd.f32 %v3463, %v3476
  %3478 = vdwg.mxu0
  %v3479 = vmax.f32 %v3475, 0.0
  %v3480 = vmax.f32 %v3477, 0.0
  %v3481 = vpack.c.bf16 %v3480, %v3479
  %v3482 = vld [vmem:[%s7] sm:$0xf]
  %v3483 = vld [vmem:[%s7 + $0x4] sm:$0xf]
  %v3484 = vld [vmem:[%s7 + $0x8] sm:$0xf]
  %v3485 = vld [vmem:[%s7 + $0xc] sm:$0xf]
  %v3486 = vld [vmem:[%s7 + $0x10] sm:$0xf]
  %v3487 = vld [vmem:[%s7 + $0x14] sm:$0xf]
  %v3488 = vld [vmem:[%s7 + $0x18] sm:$0xf]
  %v3489 = vld [vmem:[%s7 + $0x1c] sm:$0xf]
  %v3490 = vld [vmem:[%s7 + $0x20] sm:$0xf]
  %v3491 = vld [vmem:[%s7 + $0x24] sm:$0xf]
  %v3492 = vld [vmem:[%s7 + $0x28] sm:$0xf]
  %v3493 = vld [vmem:[%s7 + $0x2c] sm:$0xf]
  %v3494 = vld [vmem:[%s7 + $0x30] sm:$0xf]
  %v3495 = vld [vmem:[%s7 + $0x34] sm:$0xf]
  %v3496 = vld [vmem:[%s7 + $0x38] sm:$0xf]
  %v3497 = vld [vmem:[%s7 + $0x3c] sm:$0xf]
  %v3498 = vld [vmem:[%s8] sm:$0x1]
  %v3500 = vperm.slane %v3498, 0
  %v3518 = vunpack.c.l.b16 %v3482
  %v3519 = vunpack.c.l.b16 %v3483
  %v3520 = vunpack.c.l.b16 %v3484
  %v3521 = vunpack.c.l.b16 %v3485
  %v3522 = vunpack.c.l.b16 %v3486
  %v3523 = vunpack.c.l.b16 %v3487
  %v3524 = vunpack.c.l.b16 %v3488
  %v3525 = vunpack.c.l.b16 %v3489
  %v3526 = vunpack.c.l.b16 %v3490
  %v3527 = vunpack.c.l.b16 %v3491
  %v3528 = vunpack.c.l.b16 %v3492
  %v3529 = vunpack.c.l.b16 %v3493
  %v3530 = vunpack.c.l.b16 %v3494
  %v3531 = vunpack.c.l.b16 %v3495
  %v3532 = vunpack.c.l.b16 %v3496
  %v3533 = vunpack.c.l.b16 %v3497
  %v3534 = vpack.c.b16 %v3519, %v3518
  %v3535 = vpack.c.b16 %v3521, %v3520
  %v3536 = vpack.c.b16 %v3523, %v3522
  %v3537 = vpack.c.b16 %v3525, %v3524
  %v3538 = vpack.c.b16 %v3527, %v3526
  %v3539 = vpack.c.b16 %v3529, %v3528
  %v3540 = vpack.c.b16 %v3531, %v3530
  %v3541 = vpack.c.b16 %v3533, %v3532
  %3550 = vmatpush.bf16.msra.mxu0 %v3541
  %3551 = vmatpush.bf16.msra.mxu0 %v3540
  %3552 = vmatpush.bf16.msra.mxu0 %v3539
  %3553 = vmatpush.bf16.msra.mxu0 %v3538
  %3554 = vmatpush.bf16.msra.mxu0 %v3537
  %3555 = vmatpush.bf16.msra.mxu0 %v3536
  %3556 = vmatpush.bf16.msra.mxu0 %v3535
  %3557 = vmatpush.bf16.msra.mxu0 %v3534
  %3558 = vmatmul.bf16.gmra.mxu0 %v3481
  %v3559 = vpop.f32.mrf.mxu0
  %v3560 = vadd.f32 %v3500, %v3559
  %v3561 = vpop.f32.mrf.mxu0
  %v3562 = vadd.f32 %v3500, %v3561
  %3563 = vdwg.mxu0
  %v3564 = vlaneseq
  %v3565 = vand.u32 %v3564, 127
  %vm3566 = vcmp.lt.s32.totalorder %v3565, 10
  %v3567 = vsel %vm3566, %v3560, -inf
  %v3568 = vsel %vm3566, %v3562, -inf
  %3569 = vmax.xlane.f32.xlu0 %v3567
  %v3570 = vpop.xlane.xlu0 %3569
  %3571 = vmax.xlane.f32.xlu0 %v3568
  %v3572 = vpop.xlane.xlu0 %3571
  %v3573 = vsub.f32 %v3560, %v3570
  %v3574 = vsub.f32 %v3562, %v3572
  %v3575 = vmul.f32 %v3573, 1.442695
  %v3576 = vpow.pop %v3575
  %v3577 = vmul.f32 %v3574, 1.442695
  %v3578 = vpow.pop %v3577
  %v3579 = vsel %vm3566, %v3576, 0.0
  %v3580 = vsel %vm3566, %v3578, 0.0
  %3581 = vadd.xlane.f32.xlu0 %v3579
  %v3582 = vpop.xlane.xlu0 %3581
  %3583 = vadd.xlane.f32.xlu0 %v3580
  %v3584 = vpop.xlane.xlu0 %3583
  %v3585 = vlog2.pop %v3582
  %v3586 = vmul.f32 %v3585, 0.6931472
  %v3587 = vlog2.pop %v3584
  %v3588 = vmul.f32 %v3587, 0.6931472
  %v3589 = vsub.f32 %v3573, %v3586
  %v3590 = vsub.f32 %v3574, %v3588
  %3591 = vst [vmem:[%s9] sm:$0xff] %v3589
  %3592 = vst [vmem:[%s9 + $0x8] sm:$0xff] %v3590
  // Predicated region
  $region38: #{mnist_classifier_forward.1} parent=0 // pred_check
    _
  $region39: #{mnist_classifier_forward.1} parent=0 // pred_check_branch
    %3594 = sbr.rel (0) target = $region41
  $region40: #{mnist_classifier_forward.1} parent=0 // pred_region
    _
  $region41: #{mnist_classifier_forward.1} parent=0 // pred_fallthru
    _
  // Predicated region
  $region42: #{mnist_classifier_forward.1} parent=0 // pred_check
    _
  $region43: #{mnist_classifier_forward.1} parent=0 // pred_check_branch
    %3596 = sbr.rel (0) target = $region45
  $region44: #{mnist_classifier_forward.1} parent=0 // pred_region
    _
  $region45: #{mnist_classifier_forward.1} parent=0 // pred_fallthru
    _

</llo_original>
